<compile_context>
chip_gen: v7x
topology: tpu7x:2x2x1
jax: 0.10.0
libtpu: 0.0.40
codegen_flags: <defaults>
</compile_context>

<pallas_src>
import functools

import jax
import jax.numpy as jnp
import numpy as np
from jax.experimental import pallas as pl
from jax.experimental.pallas import tpu as pltpu

INPUT_SIZE = 768
HIDDEN = 256


def _pick_time_tile(T, cap):
    """Largest divisor of T that is <= cap and a multiple of 8; else full T
    (single block) if it fits the cap; else largest divisor <= cap."""
    divs = [d for d in range(1, min(T, cap) + 1) if T % d == 0]
    aligned = [d for d in divs if d % 8 == 0]
    if aligned:
        return max(aligned)
    if T <= cap:
        return T
    # Non-8-aligned fallback still respects the VMEM cap (Mosaic pads sublanes).
    return max(divs)


# ---------------------------------------------------------------------------
# Kernel 1: input projection, batch-major output.
#   x_ref: (B, tt, Din)  f32     w_ref: (Din, 8H) bf16     b_ref: (1, 8H) f32
#   o_ref: (B, tt, 8H)   f32
# ---------------------------------------------------------------------------
def _proj_batch_major_kernel(x_ref, w_ref, b_ref, o_ref):
    B, tt, Din = x_ref.shape
    G2 = w_ref.shape[1]
    # Single fused matmul: (B*tt, Din) @ (Din, 8H), bf16 operands, f32 acc.
    x2d = x_ref[...].astype(jnp.bfloat16).reshape(B * tt, Din)
    y = jnp.dot(x2d, w_ref[...], preferred_element_type=jnp.float32)
    y = y + b_ref[...]                      # bias broadcast once
    o_ref[...] = y.reshape(B, tt, G2)       # dense, lane-dense store


def input_projection_batch_major(x, w_in_bf16, b_in, *, max_time_tile=128):
    B, T, Din = x.shape
    G2 = w_in_bf16.shape[1]
    tt = _pick_time_tile(T, max_time_tile)
    nt = T // tt
    return pl.pallas_call(
        _proj_batch_major_kernel,
        out_shape=jax.ShapeDtypeStruct((B, T, G2), jnp.float32),
        grid=(nt,),
        in_specs=[
            pl.BlockSpec((B, tt, Din), lambda c: (0, c, 0)),
            pl.BlockSpec((Din, G2), lambda c: (0, 0)),
            pl.BlockSpec((1, G2), lambda c: (0, 0)),
        ],
        out_specs=pl.BlockSpec((B, tt, G2), lambda c: (0, c, 0)),
        compiler_params=pltpu.CompilerParams(
            dimension_semantics=("parallel",)),
    )(x, w_in_bf16, b_in)


# ---------------------------------------------------------------------------
# Kernel 2: BiLSTM recurrence + fused Linear(T, 1) time reduction.
#   Grid iterates over time CHUNKS (sequential).  Inside each chunk a
#   partially-unrolled fori_loop runs the recurrence with stacked (2B, H)
#   h/c state and a stacked (2B, H) accumulator carried as values.  The
#   (B, 2H) output block is resident across the grid and accumulates the
#   Linear(T, 1) reduction; h/c persist across chunks in VMEM scratch.
# ---------------------------------------------------------------------------
def _bilstm_seq_fused_kernel(w_seq_ref, b_seq_ref, xwf_ref, xwb_ref,
                             whh_f_ref, whh_b_ref, out_ref,
                             h_ref, c_ref, *, T, H, unroll):
    cidx = pl.program_id(0)
    B, Tc, G = xwf_ref.shape          # G = 4H
    B2 = 2 * B

    @pl.when(cidx == 0)
    def _():
        z = jnp.zeros((B2, H), jnp.float32)
        h_ref[...] = z
        c_ref[...] = z
        # Linear(T, 1) bias folded into the resident accumulator init.
        out_ref[...] = jnp.full(out_ref.shape, b_seq_ref[0], jnp.float32)

    def body(i, carry):
        h, c_state, acc = carry
        t_f = cidx * Tc + i           # forward global time index
        t_b = T - 1 - t_f             # backward global time index

        hf = h[:B].astype(jnp.bfloat16)
        hb = h[B:].astype(jnp.bfloat16)
        # Recurrent matmuls: bf16 operands, f32 accumulation; weights are read
        # from their VMEM refs right here (never hoisted into vregs).
        g_f = xwf_ref[:, i, :] + jnp.dot(
            hf, whh_f_ref[...], preferred_element_type=jnp.float32)
        g_b = xwb_ref[:, Tc - 1 - i, :] + jnp.dot(
            hb, whh_b_ref[...], preferred_element_type=jnp.float32)

        # Stack fwd/bwd along the sublane axis so nonlinearities run once.
        g = jnp.concatenate([g_f, g_b], axis=0)            # (2B, 4H)
        i_g = jax.nn.sigmoid(g[:, 0 * H:1 * H])
        f_g = jax.nn.sigmoid(g[:, 1 * H:2 * H])
        g_g = jnp.tanh(g[:, 2 * H:3 * H])
        o_g = jax.nn.sigmoid(g[:, 3 * H:4 * H])
        c_new = f_g * c_state + i_g * g_g
        h_new = o_g * jnp.tanh(c_new)

        # Fused Linear(T, 1): per-direction scalar sequence weight.
        w_fb = jnp.concatenate(
            [jnp.full((B, 1), w_seq_ref[t_f], jnp.float32),
             jnp.full((B, 1), w_seq_ref[t_b], jnp.float32)], axis=0)
        acc = acc + w_fb * h_new
        return h_new, c_new, acc

    init = (h_ref[...], c_ref[...], jnp.zeros((B2, H), jnp.float32))
    h, c_state, acc = jax.lax.fori_loop(0, Tc, body, init, unroll=unroll)

    h_ref[...] = h
    c_ref[...] = c_state
    out_ref[:, 0:H] = out_ref[:, 0:H] + acc[:B]
    out_ref[:, H:2 * H] = out_ref[:, H:2 * H] + acc[B:]


def bilstm_seq_fused(xw, whh_f_t, whh_b_t, w_seq, b_seq, *,
                     max_chunk=64, unroll=4):
    # xw: (B, T, 8H) f32, batch-major precomputed x@W_ih^T + b_ih + b_hh (fwd|bwd)
    # whh_*_t: (H, 4H) bf16 recurrent weights (already transposed)
    # w_seq: (T,) f32   b_seq: (1,) f32   -> output (B, 2H) f32
    B, T, G2 = xw.shape
    G = G2 // 2
    H = G // 4
    Tc = _pick_time_tile(T, max_chunk)
    nc = T // Tc
    kernel = functools.partial(_bilstm_seq_fused_kernel, T=T, H=H,
                               unroll=max(1, min(unroll, Tc)))
    return pl.pallas_call(
        kernel,
        out_shape=jax.ShapeDtypeStruct((B, 2 * H), jnp.float32),
        grid=(nc,),
        in_specs=[
            pl.BlockSpec(memory_space=pltpu.MemorySpace.SMEM),       # w_seq (T,)
            pl.BlockSpec(memory_space=pltpu.MemorySpace.SMEM),       # b_seq (1,)
            pl.BlockSpec((B, Tc, G), lambda c: (0, c, 0)),            # fwd gates
            pl.BlockSpec((B, Tc, G), lambda c: (0, nc - 1 - c, 1)),   # bwd gates
            pl.BlockSpec((H, G), lambda c: (0, 0)),                   # whh_f^T
            pl.BlockSpec((H, G), lambda c: (0, 0)),                   # whh_b^T
        ],
        out_specs=pl.BlockSpec((B, 2 * H), lambda c: (0, 0)),
        scratch_shapes=[pltpu.VMEM((2 * B, H), jnp.float32),   # h (fwd|bwd stacked)
                        pltpu.VMEM((2 * B, H), jnp.float32)],  # c (fwd|bwd stacked)
        compiler_params=pltpu.CompilerParams(
            dimension_semantics=("arbitrary",)),
    )(w_seq, b_seq, xw, xw, whh_f_t, whh_b_t)


# ---------------------------------------------------------------------------
# Full forward
# ---------------------------------------------------------------------------
def my_model1_forward(x, p):
    w_in = jnp.concatenate([p["w_ih_f"].T, p["w_ih_b"].T],
                           axis=1).astype(jnp.bfloat16)                   # (Din, 8H)
    b_in = jnp.concatenate([p["b_ih_f"] + p["b_hh_f"],
                            p["b_ih_b"] + p["b_hh_b"]], axis=0)[None, :]  # (1, 8H)
    xw = input_projection_batch_major(x, w_in, b_in)                      # (B, T, 8H)
    return bilstm_seq_fused(xw,
                            p["w_hh_f"].T.astype(jnp.bfloat16),
                            p["w_hh_b"].T.astype(jnp.bfloat16),
                            p["w_seq"][0], p["b_seq"])                    # (B, 2H)


# ---------------------------------------------------------------------------
# Pure-JAX references (for correctness checks)
# ---------------------------------------------------------------------------
def _lstm_dir_ref(x, w_ih, w_hh, b_ih, b_hh, reverse, bf16_matmul):
    B, T, _ = x.shape
    H = w_hh.shape[1]

    def mm(a, b):
        if bf16_matmul:
            a = a.astype(jnp.bfloat16)
            b = b.astype(jnp.bfloat16)
        return jnp.dot(a, b, preferred_element_type=jnp.float32)

    xs = x.transpose(1, 0, 2)
    if reverse:
        xs = xs[::-1]

    def step(carry, xt):
        h, c = carry
        g = mm(xt, w_ih.T) + b_ih + mm(h, w_hh.T) + b_hh
        i, f, gg, o = jnp.split(g, 4, axis=-1)
        i, f, o = jax.nn.sigmoid(i), jax.nn.sigmoid(f), jax.nn.sigmoid(o)
        gg = jnp.tanh(gg)
        c = f * c + i * gg
        h = o * jnp.tanh(c)
        return (h, c), h

    init = (jnp.zeros((B, H), jnp.float32), jnp.zeros((B, H), jnp.float32))
    _, hs = jax.lax.scan(step, init, xs)
    if reverse:
        hs = hs[::-1]
    return hs.transpose(1, 0, 2)


def forward_ref(x, p, bf16_matmul=False):
    hf = _lstm_dir_ref(x, p["w_ih_f"], p["w_hh_f"], p["b_ih_f"], p["b_hh_f"],
                       False, bf16_matmul)
    hb = _lstm_dir_ref(x, p["w_ih_b"], p["w_hh_b"], p["b_ih_b"], p["b_hh_b"],
                       True, bf16_matmul)
    ebd = jnp.concatenate([hf, hb], axis=-1)                              # (B, T, 2H)
    return jnp.einsum("btd,t->bd", ebd, p["w_seq"][0]) + p["b_seq"][0]


def init_params(key, T):
    H = HIDDEN
    ks = jax.random.split(key, 10)
    s = 0.05
    return {
        "w_ih_f": jax.random.normal(ks[0], (4 * H, INPUT_SIZE), jnp.float32) * s,
        "w_hh_f": jax.random.normal(ks[1], (4 * H, H), jnp.float32) * s,
        "b_ih_f": jax.random.normal(ks[2], (4 * H,), jnp.float32) * s,
        "b_hh_f": jax.random.normal(ks[3], (4 * H,), jnp.float32) * s,
        "w_ih_b": jax.random.normal(ks[4], (4 * H, INPUT_SIZE), jnp.float32) * s,
        "w_hh_b": jax.random.normal(ks[5], (4 * H, H), jnp.float32) * s,
        "b_ih_b": jax.random.normal(ks[6], (4 * H,), jnp.float32) * s,
        "b_hh_b": jax.random.normal(ks[7], (4 * H,), jnp.float32) * s,
        "w_seq": jax.random.normal(ks[8], (1, T), jnp.float32) * s,   # Linear(T, 1)
        "b_seq": jax.random.normal(ks[9], (1,), jnp.float32) * s,
    }


if __name__ == "__main__":
    B, T = 2, 8           # batch=2, max_length=8; feature dims fixed by module
    key = jax.random.PRNGKey(0)
    kx, kp = jax.random.split(key)
    x = jax.random.normal(kx, (B, T, INPUT_SIZE), dtype=jnp.float32)
    params = init_params(kp, T)

    out = jax.block_until_ready(my_model1_forward(x, params))
    assert out.shape == (B, 2 * HIDDEN)

    # Tight check against a reference that uses the same bf16 matmul operands.
    ref_bf16 = jax.block_until_ready(forward_ref(x, params, bf16_matmul=True))
    np.testing.assert_allclose(np.asarray(out), np.asarray(ref_bf16),
                               atol=2e-3, rtol=2e-3)
    # Looser check against the full-f32 reference (bf16 MXU operand rounding).
    ref_f32 = jax.block_until_ready(forward_ref(x, params, bf16_matmul=False))
    np.testing.assert_allclose(np.asarray(out), np.asarray(ref_f32),
                               atol=2e-2, rtol=2e-2)
    print("KERNEL_OK")
</pallas_src>

<mosaic_0001>
module attributes {stable_mosaic.version = 11 : i64} {
  func.func @_proj_batch_major_kernel(%arg0: i32, %arg1: memref<2x8x768xf32, #tpu.memory_space<vmem>>, %arg2: memref<768x2048xbf16, #tpu.memory_space<vmem>>, %arg3: memref<1x2048xf32, #tpu.memory_space<vmem>>, %arg4: memref<2x8x2048xf32, #tpu.memory_space<vmem>>) attributes {dimension_semantics = [#tpu.dimension_semantics<parallel>], iteration_bounds = array<i64: 1>, scalar_prefetch = 0 : i64, scratch_operands = 0 : i64, tpu.core_type = #tpu.core_type<tc>, window_params = [{transform_indices = @transform_0, window_bounds = array<i64: 2, 8, 768>}, {pipeline_mode = #tpu.pipeline_mode<synchronous>, transform_indices = @transform_1, window_bounds = array<i64: 768, 2048>}, {pipeline_mode = #tpu.pipeline_mode<synchronous>, transform_indices = @transform_2, window_bounds = array<i64: 1, 2048>}, {transform_indices = @transform_3, window_bounds = array<i64: 2, 8, 2048>}]} {
    %c0 = arith.constant 0 : index
    %c0_0 = arith.constant 0 : index
    %c0_1 = arith.constant 0 : index
    %0 = vector.load %arg1[%c0, %c0_0, %c0_1] : memref<2x8x768xf32, #tpu.memory_space<vmem>>, vector<2x8x768xf32>
    %1 = arith.truncf %0 : vector<2x8x768xf32> to vector<2x8x768xbf16>
    %2 = vector.shape_cast %1 : vector<2x8x768xbf16> to vector<16x768xbf16>
    %c0_2 = arith.constant 0 : index
    %c0_3 = arith.constant 0 : index
    %3 = vector.load %arg2[%c0_2, %c0_3] : memref<768x2048xbf16, #tpu.memory_space<vmem>>, vector<768x2048xbf16>
    %cst = arith.constant dense<0.000000e+00> : vector<16x2048xf32>
    %4 = tpu.matmul %2, %3, %cst {dimension_numbers = #tpu.dot_dimension_numbers<[1], [0], [0], [1], [0, 0, 1, 1], [], []>} : vector<16x768xbf16>, vector<768x2048xbf16>, vector<16x2048xf32> -> vector<16x2048xf32>
    %c0_4 = arith.constant 0 : index
    %c0_5 = arith.constant 0 : index
    %5 = vector.load %arg3[%c0_4, %c0_5] : memref<1x2048xf32, #tpu.memory_space<vmem>>, vector<1x2048xf32>
    %6 = vector.broadcast %5 : vector<1x2048xf32> to vector<16x2048xf32>
    %7 = arith.addf %4, %6 : vector<16x2048xf32>
    %8 = vector.shape_cast %7 : vector<16x2048xf32> to vector<2x8x2048xf32>
    %c0_6 = arith.constant 0 : index
    %c0_7 = arith.constant 0 : index
    %c0_8 = arith.constant 0 : index
    %9 = vector.load %arg4[%c0_6, %c0_7, %c0_8] : memref<2x8x2048xf32, #tpu.memory_space<vmem>>, vector<2x8x2048xf32>
    tpu.vector_store %arg4[%c0_6, %c0_7, %c0_8], %8 {strides = array<i32>} : memref<2x8x2048xf32, #tpu.memory_space<vmem>>, vector<2x8x2048xf32>,
    return
  }
  func.func @transform_0(%arg0: i32) -> (i32, i32, i32) {
    %c0_i32 = arith.constant 0 : i32
    %c0_i32_0 = arith.constant 0 : i32
    %c0_i32_1 = arith.constant 0 : i32
    return %c0_i32, %arg0, %c0_i32_0 : i32, i32, i32
  }
  func.func @transform_1(%arg0: i32) -> (i32, i32) {
    %c0_i32 = arith.constant 0 : i32
    %c0_i32_0 = arith.constant 0 : i32
    %c0_i32_1 = arith.constant 0 : i32
    return %c0_i32, %c0_i32_0 : i32, i32
  }
  func.func @transform_2(%arg0: i32) -> (i32, i32) {
    %c0_i32 = arith.constant 0 : i32
    %c0_i32_0 = arith.constant 0 : i32
    %c0_i32_1 = arith.constant 0 : i32
    return %c0_i32, %c0_i32_0 : i32, i32
  }
  func.func @transform_3(%arg0: i32) -> (i32, i32, i32) {
    %c0_i32 = arith.constant 0 : i32
    %c0_i32_0 = arith.constant 0 : i32
    %c0_i32_1 = arith.constant 0 : i32
    return %c0_i32, %arg0, %c0_i32_0 : i32, i32, i32
  }
}

</mosaic_0001>

<llo_original>
// kernel: tpu_custom_call.1
$region0: #{tpu_custom_call.1}
  #allocation0 [shape = 'u32[]', space=smem, size = 0x4, offset = 0x4, fixed_abs, tag = 'smem constant byte address 0x4 - core index']
  #allocation1 [shape = 'u32[144,128]{1,0:T(1,128)}', space=vmem, size = 0x12000, scoped, tag = 'internal scratch']
  %s0 = inlined_call_operand.hbm [shape: f32[2,8,768], index: 0, kind: input, shape index: {}]
  %s1 = inlined_call_operand.hbm [shape: bf16[768,2048], index: 1, kind: input, shape index: {}]
  %s2 = inlined_call_operand.hbm [shape: f32[1,2048], index: 2, kind: input, shape index: {}]
  %s3 = inlined_call_operand.hbm [shape: f32[2,8,2048], index: 3, kind: output, shape index: {}]
  %s4 = sld [smem:[#allocation0]]
  $region34: #{tpu_custom_call.1} parent=0
    _
  %s6 = ssub.s32 1, %s4
  %s7 = scalar_select 0, %s6, %s4
  $region1: #{tpu_custom_call.1} parent=0
    #allocation2 [shape = 'u8[49152]{0}', space=vmem, size = 0xc000, scoped, tag = 'input window, operand 0, single buffered']
    #allocation3 [shape = 's32[1]{0}', space=sflag, size = 0x4, scoped, tag = 'scoped memory for tpu_custom_call.1']
    #allocation4 [shape = 's32[1]{0}', space=sflag, size = 0x4, scoped, tag = 'scoped memory for tpu_custom_call.1']
    #allocation5 [shape = 'u8[3145728]{0}', space=vmem, size = 0x300000, scoped, tag = 'input window, operand 1, single buffered']
    #allocation6 [shape = 's32[1]{0}', space=sflag, size = 0x4, scoped, tag = 'scoped memory for tpu_custom_call.1']
    #allocation7 [shape = 'u8[8192]{0}', space=vmem, size = 0x2000, scoped, tag = 'input window, operand 2, single buffered']
    #allocation8 [shape = 'u8[131072]{0}', space=vmem, size = 0x20000, scoped, tag = 'output window, operand 0, single buffered']
    %8 = vsyncpa [#allocation3], 0
    %9 = vsyncpa [#allocation6], 0
    %10 = vsyncpa [#allocation4], 0
    // Predicated region
    $region2: #{tpu_custom_call.1} parent=1 // pred_check
      _
    $region3: #{tpu_custom_call.1} parent=1 // pred_check_branch
      %12 = sbr.rel (0) target = $region5
    $region4: #{tpu_custom_call.1} parent=1 // pred_region
      %s14 = ssub.s32 1536, 1536
      %15 = vsyncadd [#allocation3], %s14
      %s16 = sshll.u32 [#allocation2], 4
      %s17 = int_to_ptr.vmem [resolvable:$true] %s16
      %22 = dma.hbm_to_vmem [thread:$0]  %s0, 1536, %s17, [#allocation3], 768, 768, 48
    $region5: #{tpu_custom_call.1} parent=1 // pred_fallthru
      _
    // Predicated region
    $region6: #{tpu_custom_call.1} parent=1 // pred_check
      _
    $region7: #{tpu_custom_call.1} parent=1 // pred_check_branch
      %24 = sbr.rel (0) target = $region9
    $region8: #{tpu_custom_call.1} parent=1 // pred_region
      %s26 = ssub.s32 98304, 98304
      %27 = vsyncadd [#allocation6], %s26
      %s28 = sshll.u32 [#allocation5], 4
      %s29 = int_to_ptr.vmem [resolvable:$true] %s28
      %34 = dma.hbm_to_vmem [thread:$0]  %s1, 98304, %s29, [#allocation6], 1024, 1024, 64
    $region9: #{tpu_custom_call.1} parent=1 // pred_fallthru
      _
    // Predicated region
    $region10: #{tpu_custom_call.1} parent=1 // pred_check
      _
    $region11: #{tpu_custom_call.1} parent=1 // pred_check_branch
      %36 = sbr.rel (0) target = $region13
    $region12: #{tpu_custom_call.1} parent=1 // pred_region
      %s38 = ssub.s32 256, 256
      %39 = vsyncadd [#allocation6], %s38
      %s41 = sshll.u32 [#allocation7], 4
      %s42 = int_to_ptr.vmem [resolvable:$true] %s41
      %44 = dma.hbm_to_vmem [thread:$0]  %s2, 256, %s42, [#allocation6]
    $region13: #{tpu_custom_call.1} parent=1 // pred_fallthru
      _
    // Predicated region
    $region14: #{tpu_custom_call.1} parent=1 // pred_check
      _
    $region15: #{tpu_custom_call.1} parent=1 // pred_check_branch
      %46 = sbr.rel (0) target = $region17
    $region16: #{tpu_custom_call.1} parent=1 // pred_region
      %47 = dma.done [#allocation3], 1536
    $region17: #{tpu_custom_call.1} parent=1 // pred_fallthru
      _
    // Predicated region
    $region18: #{tpu_custom_call.1} parent=1 // pred_check
      _
    $region19: #{tpu_custom_call.1} parent=1 // pred_check_branch
      %49 = sbr.rel (0) target = $region21
    $region20: #{tpu_custom_call.1} parent=1 // pred_region
      %50 = dma.done [#allocation6], 98304
    $region21: #{tpu_custom_call.1} parent=1 // pred_fallthru
      _
    // Predicated region
    $region22: #{tpu_custom_call.1} parent=1 // pred_check
      _
    $region23: #{tpu_custom_call.1} parent=1 // pred_check_branch
      %52 = sbr.rel (0) target = $region25
    $region24: #{tpu_custom_call.1} parent=1 // pred_region
      %53 = dma.done [#allocation6], 256
    $region25: #{tpu_custom_call.1} parent=1 // pred_fallthru
      _
    %v54 = vld [vmem:[#allocation2] sm:$0xff]
    %v55 = vld [vmem:[#allocation2 + $0x8] sm:$0xff]
    %v56 = vld [vmem:[#allocation2 + $0x10] sm:$0xff]
    %v57 = vld [vmem:[#allocation2 + $0x18] sm:$0xff]
    %v58 = vld [vmem:[#allocation2 + $0x20] sm:$0xff]
    %v59 = vld [vmem:[#allocation2 + $0x28] sm:$0xff]
    %v60 = vld [vmem:[#allocation2 + $0x30] sm:$0xff]
    %v61 = vld [vmem:[#allocation2 + $0x38] sm:$0xff]
    %v62 = vld [vmem:[#allocation2 + $0x40] sm:$0xff]
    %v63 = vld [vmem:[#allocation2 + $0x48] sm:$0xff]
    %v64 = vld [vmem:[#allocation2 + $0x50] sm:$0xff]
    %v65 = vld [vmem:[#allocation2 + $0x58] sm:$0xff]
    %v66 = vpack.c.bf16 %v54, %v54
    %v67 = vpack.c.bf16 %v55, %v55
    %v68 = vpack.c.bf16 %v56, %v56
    %v69 = vpack.c.bf16 %v57, %v57
    %v70 = vpack.c.bf16 %v58, %v58
    %v71 = vpack.c.bf16 %v59, %v59
    %v72 = vpack.c.bf16 %v60, %v60
    %v73 = vpack.c.bf16 %v61, %v61
    %v74 = vpack.c.bf16 %v62, %v62
    %v75 = vpack.c.bf16 %v63, %v63
    %v76 = vpack.c.bf16 %v64, %v64
    %v77 = vpack.c.bf16 %v65, %v65
    %v90 = vunpack.c.l.b16 %v66
    %v91 = vunpack.c.l.b16 %v67
    %v92 = vunpack.c.l.b16 %v68
    %v93 = vunpack.c.l.b16 %v69
    %v94 = vunpack.c.l.b16 %v70
    %v95 = vunpack.c.l.b16 %v71
    %v96 = vunpack.c.l.b16 %v72
    %v97 = vunpack.c.l.b16 %v73
    %v98 = vunpack.c.l.b16 %v74
    %v99 = vunpack.c.l.b16 %v75
    %v100 = vunpack.c.l.b16 %v76
    %v101 = vunpack.c.l.b16 %v77
    %v102 = vld [vmem:[#allocation5] sm:$0xff]
    %v103 = vld [vmem:[#allocation5 + $0x8] sm:$0xff]
    %v104 = vld [vmem:[#allocation5 + $0x10] sm:$0xff]
    %v105 = vld [vmem:[#allocation5 + $0x18] sm:$0xff]
    %v106 = vld [vmem:[#allocation5 + $0x20] sm:$0xff]
    %v107 = vld [vmem:[#allocation5 + $0x28] sm:$0xff]
    %v108 = vld [vmem:[#allocation5 + $0x30] sm:$0xff]
    %v109 = vld [vmem:[#allocation5 + $0x38] sm:$0xff]
    %v110 = vld [vmem:[#allocation5 + $0x40] sm:$0xff]
    %v111 = vld [vmem:[#allocation5 + $0x48] sm:$0xff]
    %v112 = vld [vmem:[#allocation5 + $0x50] sm:$0xff]
    %v113 = vld [vmem:[#allocation5 + $0x58] sm:$0xff]
    %v114 = vld [vmem:[#allocation5 + $0x60] sm:$0xff]
    %v115 = vld [vmem:[#allocation5 + $0x68] sm:$0xff]
    %v116 = vld [vmem:[#allocation5 + $0x70] sm:$0xff]
    %v117 = vld [vmem:[#allocation5 + $0x78] sm:$0xff]
    %v118 = vld [vmem:[#allocation5 + $0x80] sm:$0xff]
    %v119 = vld [vmem:[#allocation5 + $0x88] sm:$0xff]
    %v120 = vld [vmem:[#allocation5 + $0x90] sm:$0xff]
    %v121 = vld [vmem:[#allocation5 + $0x98] sm:$0xff]
    %v122 = vld [vmem:[#allocation5 + $0xa0] sm:$0xff]
    %v123 = vld [vmem:[#allocation5 + $0xa8] sm:$0xff]
    %v124 = vld [vmem:[#allocation5 + $0xb0] sm:$0xff]
    %v125 = vld [vmem:[#allocation5 + $0xb8] sm:$0xff]
    %v126 = vld [vmem:[#allocation5 + $0xc0] sm:$0xff]
    %v127 = vld [vmem:[#allocation5 + $0xc8] sm:$0xff]
    %v128 = vld [vmem:[#allocation5 + $0xd0] sm:$0xff]
    %v129 = vld [vmem:[#allocation5 + $0xd8] sm:$0xff]
    %v130 = vld [vmem:[#allocation5 + $0xe0] sm:$0xff]
    %v131 = vld [vmem:[#allocation5 + $0xe8] sm:$0xff]
    %v132 = vld [vmem:[#allocation5 + $0xf0] sm:$0xff]
    %v133 = vld [vmem:[#allocation5 + $0xf8] sm:$0xff]
    %v134 = vld [vmem:[#allocation5 + $0x100] sm:$0xff]
    %v135 = vld [vmem:[#allocation5 + $0x108] sm:$0xff]
    %v136 = vld [vmem:[#allocation5 + $0x110] sm:$0xff]
    %v137 = vld [vmem:[#allocation5 + $0x118] sm:$0xff]
    %v138 = vld [vmem:[#allocation5 + $0x120] sm:$0xff]
    %v139 = vld [vmem:[#allocation5 + $0x128] sm:$0xff]
    %v140 = vld [vmem:[#allocation5 + $0x130] sm:$0xff]
    %v141 = vld [vmem:[#allocation5 + $0x138] sm:$0xff]
    %v142 = vld [vmem:[#allocation5 + $0x140] sm:$0xff]
    %v143 = vld [vmem:[#allocation5 + $0x148] sm:$0xff]
    %v144 = vld [vmem:[#allocation5 + $0x150] sm:$0xff]
    %v145 = vld [vmem:[#allocation5 + $0x158] sm:$0xff]
    %v146 = vld [vmem:[#allocation5 + $0x160] sm:$0xff]
    %v147 = vld [vmem:[#allocation5 + $0x168] sm:$0xff]
    %v148 = vld [vmem:[#allocation5 + $0x170] sm:$0xff]
    %v149 = vld [vmem:[#allocation5 + $0x178] sm:$0xff]
    %v150 = vld [vmem:[#allocation5 + $0x180] sm:$0xff]
    %v151 = vld [vmem:[#allocation5 + $0x188] sm:$0xff]
    %v152 = vld [vmem:[#allocation5 + $0x190] sm:$0xff]
    %v153 = vld [vmem:[#allocation5 + $0x198] sm:$0xff]
    %v154 = vld [vmem:[#allocation5 + $0x1a0] sm:$0xff]
    %v155 = vld [vmem:[#allocation5 + $0x1a8] sm:$0xff]
    %v156 = vld [vmem:[#allocation5 + $0x1b0] sm:$0xff]
    %v157 = vld [vmem:[#allocation5 + $0x1b8] sm:$0xff]
    %v158 = vld [vmem:[#allocation5 + $0x1c0] sm:$0xff]
    %v159 = vld [vmem:[#allocation5 + $0x1c8] sm:$0xff]
    %v160 = vld [vmem:[#allocation5 + $0x1d0] sm:$0xff]
    %v161 = vld [vmem:[#allocation5 + $0x1d8] sm:$0xff]
    %v162 = vld [vmem:[#allocation5 + $0x1e0] sm:$0xff]
    %v163 = vld [vmem:[#allocation5 + $0x1e8] sm:$0xff]
    %v164 = vld [vmem:[#allocation5 + $0x1f0] sm:$0xff]
    %v165 = vld [vmem:[#allocation5 + $0x1f8] sm:$0xff]
    %v166 = vld [vmem:[#allocation5 + $0x200] sm:$0xff]
    %v167 = vld [vmem:[#allocation5 + $0x208] sm:$0xff]
    %v168 = vld [vmem:[#allocation5 + $0x210] sm:$0xff]
    %v169 = vld [vmem:[#allocation5 + $0x218] sm:$0xff]
    %v170 = vld [vmem:[#allocation5 + $0x220] sm:$0xff]
    %v171 = vld [vmem:[#allocation5 + $0x228] sm:$0xff]
    %v172 = vld [vmem:[#allocation5 + $0x230] sm:$0xff]
    %v173 = vld [vmem:[#allocation5 + $0x238] sm:$0xff]
    %v174 = vld [vmem:[#allocation5 + $0x240] sm:$0xff]
    %v175 = vld [vmem:[#allocation5 + $0x248] sm:$0xff]
    %v176 = vld [vmem:[#allocation5 + $0x250] sm:$0xff]
    %v177 = vld [vmem:[#allocation5 + $0x258] sm:$0xff]
    %v178 = vld [vmem:[#allocation5 + $0x260] sm:$0xff]
    %v179 = vld [vmem:[#allocation5 + $0x268] sm:$0xff]
    %v180 = vld [vmem:[#allocation5 + $0x270] sm:$0xff]
    %v181 = vld [vmem:[#allocation5 + $0x278] sm:$0xff]
    %v182 = vld [vmem:[#allocation5 + $0x280] sm:$0xff]
    %v183 = vld [vmem:[#allocation5 + $0x288] sm:$0xff]
    %v184 = vld [vmem:[#allocation5 + $0x290] sm:$0xff]
    %v185 = vld [vmem:[#allocation5 + $0x298] sm:$0xff]
    %v186 = vld [vmem:[#allocation5 + $0x2a0] sm:$0xff]
    %v187 = vld [vmem:[#allocation5 + $0x2a8] sm:$0xff]
    %v188 = vld [vmem:[#allocation5 + $0x2b0] sm:$0xff]
    %v189 = vld [vmem:[#allocation5 + $0x2b8] sm:$0xff]
    %v190 = vld [vmem:[#allocation5 + $0x2c0] sm:$0xff]
    %v191 = vld [vmem:[#allocation5 + $0x2c8] sm:$0xff]
    %v192 = vld [vmem:[#allocation5 + $0x2d0] sm:$0xff]
    %v193 = vld [vmem:[#allocation5 + $0x2d8] sm:$0xff]
    %v194 = vld [vmem:[#allocation5 + $0x2e0] sm:$0xff]
    %v195 = vld [vmem:[#allocation5 + $0x2e8] sm:$0xff]
    %v196 = vld [vmem:[#allocation5 + $0x2f0] sm:$0xff]
    %v197 = vld [vmem:[#allocation5 + $0x2f8] sm:$0xff]
    %v198 = vld [vmem:[#allocation5 + $0x300] sm:$0xff]
    %v199 = vld [vmem:[#allocation5 + $0x308] sm:$0xff]
    %v200 = vld [vmem:[#allocation5 + $0x310] sm:$0xff]
    %v201 = vld [vmem:[#allocation5 + $0x318] sm:$0xff]
    %v202 = vld [vmem:[#allocation5 + $0x320] sm:$0xff]
    %v203 = vld [vmem:[#allocation5 + $0x328] sm:$0xff]
    %v204 = vld [vmem:[#allocation5 + $0x330] sm:$0xff]
    %v205 = vld [vmem:[#allocation5 + $0x338] sm:$0xff]
    %v206 = vld [vmem:[#allocation5 + $0x340] sm:$0xff]
    %v207 = vld [vmem:[#allocation5 + $0x348] sm:$0xff]
    %v208 = vld [vmem:[#allocation5 + $0x350] sm:$0xff]
    %v209 = vld [vmem:[#allocation5 + $0x358] sm:$0xff]
    %v210 = vld [vmem:[#allocation5 + $0x360] sm:$0xff]
    %v211 = vld [vmem:[#allocation5 + $0x368] sm:$0xff]
    %v212 = vld [vmem:[#allocation5 + $0x370] sm:$0xff]
    %v213 = vld [vmem:[#allocation5 + $0x378] sm:$0xff]
    %v214 = vld [vmem:[#allocation5 + $0x380] sm:$0xff]
    %v215 = vld [vmem:[#allocation5 + $0x388] sm:$0xff]
    %v216 = vld [vmem:[#allocation5 + $0x390] sm:$0xff]
    %v217 = vld [vmem:[#allocation5 + $0x398] sm:$0xff]
    %v218 = vld [vmem:[#allocation5 + $0x3a0] sm:$0xff]
    %v219 = vld [vmem:[#allocation5 + $0x3a8] sm:$0xff]
    %v220 = vld [vmem:[#allocation5 + $0x3b0] sm:$0xff]
    %v221 = vld [vmem:[#allocation5 + $0x3b8] sm:$0xff]
    %v222 = vld [vmem:[#allocation5 + $0x3c0] sm:$0xff]
    %v223 = vld [vmem:[#allocation5 + $0x3c8] sm:$0xff]
    %v224 = vld [vmem:[#allocation5 + $0x3d0] sm:$0xff]
    %v225 = vld [vmem:[#allocation5 + $0x3d8] sm:$0xff]
    %v226 = vld [vmem:[#allocation5 + $0x3e0] sm:$0xff]
    %v227 = vld [vmem:[#allocation5 + $0x3e8] sm:$0xff]
    %v228 = vld [vmem:[#allocation5 + $0x3f0] sm:$0xff]
    %v229 = vld [vmem:[#allocation5 + $0x3f8] sm:$0xff]
    %v230 = vld [vmem:[#allocation5 + $0x400] sm:$0xff]
    %v231 = vld [vmem:[#allocation5 + $0x408] sm:$0xff]
    %v232 = vld [vmem:[#allocation5 + $0x410] sm:$0xff]
    %v233 = vld [vmem:[#allocation5 + $0x418] sm:$0xff]
    %v234 = vld [vmem:[#allocation5 + $0x420] sm:$0xff]
    %v235 = vld [vmem:[#allocation5 + $0x428] sm:$0xff]
    %v236 = vld [vmem:[#allocation5 + $0x430] sm:$0xff]
    %v237 = vld [vmem:[#allocation5 + $0x438] sm:$0xff]
    %v238 = vld [vmem:[#allocation5 + $0x440] sm:$0xff]
    %v239 = vld [vmem:[#allocation5 + $0x448] sm:$0xff]
    %v240 = vld [vmem:[#allocation5 + $0x450] sm:$0xff]
    %v241 = vld [vmem:[#allocation5 + $0x458] sm:$0xff]
    %v242 = vld [vmem:[#allocation5 + $0x460] sm:$0xff]
    %v243 = vld [vmem:[#allocation5 + $0x468] sm:$0xff]
    %v244 = vld [vmem:[#allocation5 + $0x470] sm:$0xff]
    %v245 = vld [vmem:[#allocation5 + $0x478] sm:$0xff]
    %v246 = vld [vmem:[#allocation5 + $0x480] sm:$0xff]
    %v247 = vld [vmem:[#allocation5 + $0x488] sm:$0xff]
    %v248 = vld [vmem:[#allocation5 + $0x490] sm:$0xff]
    %v249 = vld [vmem:[#allocation5 + $0x498] sm:$0xff]
    %v250 = vld [vmem:[#allocation5 + $0x4a0] sm:$0xff]
    %v251 = vld [vmem:[#allocation5 + $0x4a8] sm:$0xff]
    %v252 = vld [vmem:[#allocation5 + $0x4b0] sm:$0xff]
    %v253 = vld [vmem:[#allocation5 + $0x4b8] sm:$0xff]
    %v254 = vld [vmem:[#allocation5 + $0x4c0] sm:$0xff]
    %v255 = vld [vmem:[#allocation5 + $0x4c8] sm:$0xff]
    %v256 = vld [vmem:[#allocation5 + $0x4d0] sm:$0xff]
    %v257 = vld [vmem:[#allocation5 + $0x4d8] sm:$0xff]
    %v258 = vld [vmem:[#allocation5 + $0x4e0] sm:$0xff]
    %v259 = vld [vmem:[#allocation5 + $0x4e8] sm:$0xff]
    %v260 = vld [vmem:[#allocation5 + $0x4f0] sm:$0xff]
    %v261 = vld [vmem:[#allocation5 + $0x4f8] sm:$0xff]
    %v262 = vld [vmem:[#allocation5 + $0x500] sm:$0xff]
    %v263 = vld [vmem:[#allocation5 + $0x508] sm:$0xff]
    %v264 = vld [vmem:[#allocation5 + $0x510] sm:$0xff]
    %v265 = vld [vmem:[#allocation5 + $0x518] sm:$0xff]
    %v266 = vld [vmem:[#allocation5 + $0x520] sm:$0xff]
    %v267 = vld [vmem:[#allocation5 + $0x528] sm:$0xff]
    %v268 = vld [vmem:[#allocation5 + $0x530] sm:$0xff]
    %v269 = vld [vmem:[#allocation5 + $0x538] sm:$0xff]
    %v270 = vld [vmem:[#allocation5 + $0x540] sm:$0xff]
    %v271 = vld [vmem:[#allocation5 + $0x548] sm:$0xff]
    %v272 = vld [vmem:[#allocation5 + $0x550] sm:$0xff]
    %v273 = vld [vmem:[#allocation5 + $0x558] sm:$0xff]
    %v274 = vld [vmem:[#allocation5 + $0x560] sm:$0xff]
    %v275 = vld [vmem:[#allocation5 + $0x568] sm:$0xff]
    %v276 = vld [vmem:[#allocation5 + $0x570] sm:$0xff]
    %v277 = vld [vmem:[#allocation5 + $0x578] sm:$0xff]
    %v278 = vld [vmem:[#allocation5 + $0x580] sm:$0xff]
    %v279 = vld [vmem:[#allocation5 + $0x588] sm:$0xff]
    %v280 = vld [vmem:[#allocation5 + $0x590] sm:$0xff]
    %v281 = vld [vmem:[#allocation5 + $0x598] sm:$0xff]
    %v282 = vld [vmem:[#allocation5 + $0x5a0] sm:$0xff]
    %v283 = vld [vmem:[#allocation5 + $0x5a8] sm:$0xff]
    %v284 = vld [vmem:[#allocation5 + $0x5b0] sm:$0xff]
    %v285 = vld [vmem:[#allocation5 + $0x5b8] sm:$0xff]
    %v286 = vld [vmem:[#allocation5 + $0x5c0] sm:$0xff]
    %v287 = vld [vmem:[#allocation5 + $0x5c8] sm:$0xff]
    %v288 = vld [vmem:[#allocation5 + $0x5d0] sm:$0xff]
    %v289 = vld [vmem:[#allocation5 + $0x5d8] sm:$0xff]
    %v290 = vld [vmem:[#allocation5 + $0x5e0] sm:$0xff]
    %v291 = vld [vmem:[#allocation5 + $0x5e8] sm:$0xff]
    %v292 = vld [vmem:[#allocation5 + $0x5f0] sm:$0xff]
    %v293 = vld [vmem:[#allocation5 + $0x5f8] sm:$0xff]
    %v294 = vld [vmem:[#allocation5 + $0x600] sm:$0xff]
    %v295 = vld [vmem:[#allocation5 + $0x608] sm:$0xff]
    %v296 = vld [vmem:[#allocation5 + $0x610] sm:$0xff]
    %v297 = vld [vmem:[#allocation5 + $0x618] sm:$0xff]
    %v298 = vld [vmem:[#allocation5 + $0x620] sm:$0xff]
    %v299 = vld [vmem:[#allocation5 + $0x628] sm:$0xff]
    %v300 = vld [vmem:[#allocation5 + $0x630] sm:$0xff]
    %v301 = vld [vmem:[#allocation5 + $0x638] sm:$0xff]
    %v302 = vld [vmem:[#allocation5 + $0x640] sm:$0xff]
    %v303 = vld [vmem:[#allocation5 + $0x648] sm:$0xff]
    %v304 = vld [vmem:[#allocation5 + $0x650] sm:$0xff]
    %v305 = vld [vmem:[#allocation5 + $0x658] sm:$0xff]
    %v306 = vld [vmem:[#allocation5 + $0x660] sm:$0xff]
    %v307 = vld [vmem:[#allocation5 + $0x668] sm:$0xff]
    %v308 = vld [vmem:[#allocation5 + $0x670] sm:$0xff]
    %v309 = vld [vmem:[#allocation5 + $0x678] sm:$0xff]
    %v310 = vld [vmem:[#allocation5 + $0x680] sm:$0xff]
    %v311 = vld [vmem:[#allocation5 + $0x688] sm:$0xff]
    %v312 = vld [vmem:[#allocation5 + $0x690] sm:$0xff]
    %v313 = vld [vmem:[#allocation5 + $0x698] sm:$0xff]
    %v314 = vld [vmem:[#allocation5 + $0x6a0] sm:$0xff]
    %v315 = vld [vmem:[#allocation5 + $0x6a8] sm:$0xff]
    %v316 = vld [vmem:[#allocation5 + $0x6b0] sm:$0xff]
    %v317 = vld [vmem:[#allocation5 + $0x6b8] sm:$0xff]
    %v318 = vld [vmem:[#allocation5 + $0x6c0] sm:$0xff]
    %v319 = vld [vmem:[#allocation5 + $0x6c8] sm:$0xff]
    %v320 = vld [vmem:[#allocation5 + $0x6d0] sm:$0xff]
    %v321 = vld [vmem:[#allocation5 + $0x6d8] sm:$0xff]
    %v322 = vld [vmem:[#allocation5 + $0x6e0] sm:$0xff]
    %v323 = vld [vmem:[#allocation5 + $0x6e8] sm:$0xff]
    %v324 = vld [vmem:[#allocation5 + $0x6f0] sm:$0xff]
    %v325 = vld [vmem:[#allocation5 + $0x6f8] sm:$0xff]
    %v326 = vld [vmem:[#allocation5 + $0x700] sm:$0xff]
    %v327 = vld [vmem:[#allocation5 + $0x708] sm:$0xff]
    %v328 = vld [vmem:[#allocation5 + $0x710] sm:$0xff]
    %v329 = vld [vmem:[#allocation5 + $0x718] sm:$0xff]
    %v330 = vld [vmem:[#allocation5 + $0x720] sm:$0xff]
    %v331 = vld [vmem:[#allocation5 + $0x728] sm:$0xff]
    %v332 = vld [vmem:[#allocation5 + $0x730] sm:$0xff]
    %v333 = vld [vmem:[#allocation5 + $0x738] sm:$0xff]
    %v334 = vld [vmem:[#allocation5 + $0x740] sm:$0xff]
    %v335 = vld [vmem:[#allocation5 + $0x748] sm:$0xff]
    %v336 = vld [vmem:[#allocation5 + $0x750] sm:$0xff]
    %v337 = vld [vmem:[#allocation5 + $0x758] sm:$0xff]
    %v338 = vld [vmem:[#allocation5 + $0x760] sm:$0xff]
    %v339 = vld [vmem:[#allocation5 + $0x768] sm:$0xff]
    %v340 = vld [vmem:[#allocation5 + $0x770] sm:$0xff]
    %v341 = vld [vmem:[#allocation5 + $0x778] sm:$0xff]
    %v342 = vld [vmem:[#allocation5 + $0x780] sm:$0xff]
    %v343 = vld [vmem:[#allocation5 + $0x788] sm:$0xff]
    %v344 = vld [vmem:[#allocation5 + $0x790] sm:$0xff]
    %v345 = vld [vmem:[#allocation5 + $0x798] sm:$0xff]
    %v346 = vld [vmem:[#allocation5 + $0x7a0] sm:$0xff]
    %v347 = vld [vmem:[#allocation5 + $0x7a8] sm:$0xff]
    %v348 = vld [vmem:[#allocation5 + $0x7b0] sm:$0xff]
    %v349 = vld [vmem:[#allocation5 + $0x7b8] sm:$0xff]
    %v350 = vld [vmem:[#allocation5 + $0x7c0] sm:$0xff]
    %v351 = vld [vmem:[#allocation5 + $0x7c8] sm:$0xff]
    %v352 = vld [vmem:[#allocation5 + $0x7d0] sm:$0xff]
    %v353 = vld [vmem:[#allocation5 + $0x7d8] sm:$0xff]
    %v354 = vld [vmem:[#allocation5 + $0x7e0] sm:$0xff]
    %v355 = vld [vmem:[#allocation5 + $0x7e8] sm:$0xff]
    %v356 = vld [vmem:[#allocation5 + $0x7f0] sm:$0xff]
    %v357 = vld [vmem:[#allocation5 + $0x7f8] sm:$0xff]
    %v358 = vld [vmem:[#allocation5 + $0x800] sm:$0xff]
    %v359 = vld [vmem:[#allocation5 + $0x808] sm:$0xff]
    %v360 = vld [vmem:[#allocation5 + $0x810] sm:$0xff]
    %v361 = vld [vmem:[#allocation5 + $0x818] sm:$0xff]
    %v362 = vld [vmem:[#allocation5 + $0x820] sm:$0xff]
    %v363 = vld [vmem:[#allocation5 + $0x828] sm:$0xff]
    %v364 = vld [vmem:[#allocation5 + $0x830] sm:$0xff]
    %v365 = vld [vmem:[#allocation5 + $0x838] sm:$0xff]
    %v366 = vld [vmem:[#allocation5 + $0x840] sm:$0xff]
    %v367 = vld [vmem:[#allocation5 + $0x848] sm:$0xff]
    %v368 = vld [vmem:[#allocation5 + $0x850] sm:$0xff]
    %v369 = vld [vmem:[#allocation5 + $0x858] sm:$0xff]
    %v370 = vld [vmem:[#allocation5 + $0x860] sm:$0xff]
    %v371 = vld [vmem:[#allocation5 + $0x868] sm:$0xff]
    %v372 = vld [vmem:[#allocation5 + $0x870] sm:$0xff]
    %v373 = vld [vmem:[#allocation5 + $0x878] sm:$0xff]
    %v374 = vld [vmem:[#allocation5 + $0x880] sm:$0xff]
    %v375 = vld [vmem:[#allocation5 + $0x888] sm:$0xff]
    %v376 = vld [vmem:[#allocation5 + $0x890] sm:$0xff]
    %v377 = vld [vmem:[#allocation5 + $0x898] sm:$0xff]
    %v378 = vld [vmem:[#allocation5 + $0x8a0] sm:$0xff]
    %v379 = vld [vmem:[#allocation5 + $0x8a8] sm:$0xff]
    %v380 = vld [vmem:[#allocation5 + $0x8b0] sm:$0xff]
    %v381 = vld [vmem:[#allocation5 + $0x8b8] sm:$0xff]
    %v382 = vld [vmem:[#allocation5 + $0x8c0] sm:$0xff]
    %v383 = vld [vmem:[#allocation5 + $0x8c8] sm:$0xff]
    %v384 = vld [vmem:[#allocation5 + $0x8d0] sm:$0xff]
    %v385 = vld [vmem:[#allocation5 + $0x8d8] sm:$0xff]
    %v386 = vld [vmem:[#allocation5 + $0x8e0] sm:$0xff]
    %v387 = vld [vmem:[#allocation5 + $0x8e8] sm:$0xff]
    %v388 = vld [vmem:[#allocation5 + $0x8f0] sm:$0xff]
    %v389 = vld [vmem:[#allocation5 + $0x8f8] sm:$0xff]
    %v390 = vld [vmem:[#allocation5 + $0x900] sm:$0xff]
    %v391 = vld [vmem:[#allocation5 + $0x908] sm:$0xff]
    %v392 = vld [vmem:[#allocation5 + $0x910] sm:$0xff]
    %v393 = vld [vmem:[#allocation5 + $0x918] sm:$0xff]
    %v394 = vld [vmem:[#allocation5 + $0x920] sm:$0xff]
    %v395 = vld [vmem:[#allocation5 + $0x928] sm:$0xff]
    %v396 = vld [vmem:[#allocation5 + $0x930] sm:$0xff]
    %v397 = vld [vmem:[#allocation5 + $0x938] sm:$0xff]
    %v398 = vld [vmem:[#allocation5 + $0x940] sm:$0xff]
    %v399 = vld [vmem:[#allocation5 + $0x948] sm:$0xff]
    %v400 = vld [vmem:[#allocation5 + $0x950] sm:$0xff]
    %v401 = vld [vmem:[#allocation5 + $0x958] sm:$0xff]
    %v402 = vld [vmem:[#allocation5 + $0x960] sm:$0xff]
    %v403 = vld [vmem:[#allocation5 + $0x968] sm:$0xff]
    %v404 = vld [vmem:[#allocation5 + $0x970] sm:$0xff]
    %v405 = vld [vmem:[#allocation5 + $0x978] sm:$0xff]
    %v406 = vld [vmem:[#allocation5 + $0x980] sm:$0xff]
    %v407 = vld [vmem:[#allocation5 + $0x988] sm:$0xff]
    %v408 = vld [vmem:[#allocation5 + $0x990] sm:$0xff]
    %v409 = vld [vmem:[#allocation5 + $0x998] sm:$0xff]
    %v410 = vld [vmem:[#allocation5 + $0x9a0] sm:$0xff]
    %v411 = vld [vmem:[#allocation5 + $0x9a8] sm:$0xff]
    %v412 = vld [vmem:[#allocation5 + $0x9b0] sm:$0xff]
    %v413 = vld [vmem:[#allocation5 + $0x9b8] sm:$0xff]
    %v414 = vld [vmem:[#allocation5 + $0x9c0] sm:$0xff]
    %v415 = vld [vmem:[#allocation5 + $0x9c8] sm:$0xff]
    %v416 = vld [vmem:[#allocation5 + $0x9d0] sm:$0xff]
    %v417 = vld [vmem:[#allocation5 + $0x9d8] sm:$0xff]
    %v418 = vld [vmem:[#allocation5 + $0x9e0] sm:$0xff]
    %v419 = vld [vmem:[#allocation5 + $0x9e8] sm:$0xff]
    %v420 = vld [vmem:[#allocation5 + $0x9f0] sm:$0xff]
    %v421 = vld [vmem:[#allocation5 + $0x9f8] sm:$0xff]
    %v422 = vld [vmem:[#allocation5 + $0xa00] sm:$0xff]
    %v423 = vld [vmem:[#allocation5 + $0xa08] sm:$0xff]
    %v424 = vld [vmem:[#allocation5 + $0xa10] sm:$0xff]
    %v425 = vld [vmem:[#allocation5 + $0xa18] sm:$0xff]
    %v426 = vld [vmem:[#allocation5 + $0xa20] sm:$0xff]
    %v427 = vld [vmem:[#allocation5 + $0xa28] sm:$0xff]
    %v428 = vld [vmem:[#allocation5 + $0xa30] sm:$0xff]
    %v429 = vld [vmem:[#allocation5 + $0xa38] sm:$0xff]
    %v430 = vld [vmem:[#allocation5 + $0xa40] sm:$0xff]
    %v431 = vld [vmem:[#allocation5 + $0xa48] sm:$0xff]
    %v432 = vld [vmem:[#allocation5 + $0xa50] sm:$0xff]
    %v433 = vld [vmem:[#allocation5 + $0xa58] sm:$0xff]
    %v434 = vld [vmem:[#allocation5 + $0xa60] sm:$0xff]
    %v435 = vld [vmem:[#allocation5 + $0xa68] sm:$0xff]
    %v436 = vld [vmem:[#allocation5 + $0xa70] sm:$0xff]
    %v437 = vld [vmem:[#allocation5 + $0xa78] sm:$0xff]
    %v438 = vld [vmem:[#allocation5 + $0xa80] sm:$0xff]
    %v439 = vld [vmem:[#allocation5 + $0xa88] sm:$0xff]
    %v440 = vld [vmem:[#allocation5 + $0xa90] sm:$0xff]
    %v441 = vld [vmem:[#allocation5 + $0xa98] sm:$0xff]
    %v442 = vld [vmem:[#allocation5 + $0xaa0] sm:$0xff]
    %v443 = vld [vmem:[#allocation5 + $0xaa8] sm:$0xff]
    %v444 = vld [vmem:[#allocation5 + $0xab0] sm:$0xff]
    %v445 = vld [vmem:[#allocation5 + $0xab8] sm:$0xff]
    %v446 = vld [vmem:[#allocation5 + $0xac0] sm:$0xff]
    %v447 = vld [vmem:[#allocation5 + $0xac8] sm:$0xff]
    %v448 = vld [vmem:[#allocation5 + $0xad0] sm:$0xff]
    %v449 = vld [vmem:[#allocation5 + $0xad8] sm:$0xff]
    %v450 = vld [vmem:[#allocation5 + $0xae0] sm:$0xff]
    %v451 = vld [vmem:[#allocation5 + $0xae8] sm:$0xff]
    %v452 = vld [vmem:[#allocation5 + $0xaf0] sm:$0xff]
    %v453 = vld [vmem:[#allocation5 + $0xaf8] sm:$0xff]
    %v454 = vld [vmem:[#allocation5 + $0xb00] sm:$0xff]
    %v455 = vld [vmem:[#allocation5 + $0xb08] sm:$0xff]
    %v456 = vld [vmem:[#allocation5 + $0xb10] sm:$0xff]
    %v457 = vld [vmem:[#allocation5 + $0xb18] sm:$0xff]
    %v458 = vld [vmem:[#allocation5 + $0xb20] sm:$0xff]
    %v459 = vld [vmem:[#allocation5 + $0xb28] sm:$0xff]
    %v460 = vld [vmem:[#allocation5 + $0xb30] sm:$0xff]
    %v461 = vld [vmem:[#allocation5 + $0xb38] sm:$0xff]
    %v462 = vld [vmem:[#allocation5 + $0xb40] sm:$0xff]
    %v463 = vld [vmem:[#allocation5 + $0xb48] sm:$0xff]
    %v464 = vld [vmem:[#allocation5 + $0xb50] sm:$0xff]
    %v465 = vld [vmem:[#allocation5 + $0xb58] sm:$0xff]
    %v466 = vld [vmem:[#allocation5 + $0xb60] sm:$0xff]
    %v467 = vld [vmem:[#allocation5 + $0xb68] sm:$0xff]
    %v468 = vld [vmem:[#allocation5 + $0xb70] sm:$0xff]
    %v469 = vld [vmem:[#allocation5 + $0xb78] sm:$0xff]
    %v470 = vld [vmem:[#allocation5 + $0xb80] sm:$0xff]
    %v471 = vld [vmem:[#allocation5 + $0xb88] sm:$0xff]
    %v472 = vld [vmem:[#allocation5 + $0xb90] sm:$0xff]
    %v473 = vld [vmem:[#allocation5 + $0xb98] sm:$0xff]
    %v474 = vld [vmem:[#allocation5 + $0xba0] sm:$0xff]
    %v475 = vld [vmem:[#allocation5 + $0xba8] sm:$0xff]
    %v476 = vld [vmem:[#allocation5 + $0xbb0] sm:$0xff]
    %v477 = vld [vmem:[#allocation5 + $0xbb8] sm:$0xff]
    %v478 = vld [vmem:[#allocation5 + $0xbc0] sm:$0xff]
    %v479 = vld [vmem:[#allocation5 + $0xbc8] sm:$0xff]
    %v480 = vld [vmem:[#allocation5 + $0xbd0] sm:$0xff]
    %v481 = vld [vmem:[#allocation5 + $0xbd8] sm:$0xff]
    %v482 = vld [vmem:[#allocation5 + $0xbe0] sm:$0xff]
    %v483 = vld [vmem:[#allocation5 + $0xbe8] sm:$0xff]
    %v484 = vld [vmem:[#allocation5 + $0xbf0] sm:$0xff]
    %v485 = vld [vmem:[#allocation5 + $0xbf8] sm:$0xff]
    %v486 = vld [vmem:[#allocation5 + $0xc00] sm:$0xff]
    %v487 = vld [vmem:[#allocation5 + $0xc08] sm:$0xff]
    %v488 = vld [vmem:[#allocation5 + $0xc10] sm:$0xff]
    %v489 = vld [vmem:[#allocation5 + $0xc18] sm:$0xff]
    %v490 = vld [vmem:[#allocation5 + $0xc20] sm:$0xff]
    %v491 = vld [vmem:[#allocation5 + $0xc28] sm:$0xff]
    %v492 = vld [vmem:[#allocation5 + $0xc30] sm:$0xff]
    %v493 = vld [vmem:[#allocation5 + $0xc38] sm:$0xff]
    %v494 = vld [vmem:[#allocation5 + $0xc40] sm:$0xff]
    %v495 = vld [vmem:[#allocation5 + $0xc48] sm:$0xff]
    %v496 = vld [vmem:[#allocation5 + $0xc50] sm:$0xff]
    %v497 = vld [vmem:[#allocation5 + $0xc58] sm:$0xff]
    %v498 = vld [vmem:[#allocation5 + $0xc60] sm:$0xff]
    %v499 = vld [vmem:[#allocation5 + $0xc68] sm:$0xff]
    %v500 = vld [vmem:[#allocation5 + $0xc70] sm:$0xff]
    %v501 = vld [vmem:[#allocation5 + $0xc78] sm:$0xff]
    %v502 = vld [vmem:[#allocation5 + $0xc80] sm:$0xff]
    %v503 = vld [vmem:[#allocation5 + $0xc88] sm:$0xff]
    %v504 = vld [vmem:[#allocation5 + $0xc90] sm:$0xff]
    %v505 = vld [vmem:[#allocation5 + $0xc98] sm:$0xff]
    %v506 = vld [vmem:[#allocation5 + $0xca0] sm:$0xff]
    %v507 = vld [vmem:[#allocation5 + $0xca8] sm:$0xff]
    %v508 = vld [vmem:[#allocation5 + $0xcb0] sm:$0xff]
    %v509 = vld [vmem:[#allocation5 + $0xcb8] sm:$0xff]
    %v510 = vld [vmem:[#allocation5 + $0xcc0] sm:$0xff]
    %v511 = vld [vmem:[#allocation5 + $0xcc8] sm:$0xff]
    %v512 = vld [vmem:[#allocation5 + $0xcd0] sm:$0xff]
    %v513 = vld [vmem:[#allocation5 + $0xcd8] sm:$0xff]
    %v514 = vld [vmem:[#allocation5 + $0xce0] sm:$0xff]
    %v515 = vld [vmem:[#allocation5 + $0xce8] sm:$0xff]
    %v516 = vld [vmem:[#allocation5 + $0xcf0] sm:$0xff]
    %v517 = vld [vmem:[#allocation5 + $0xcf8] sm:$0xff]
    %v518 = vld [vmem:[#allocation5 + $0xd00] sm:$0xff]
    %v519 = vld [vmem:[#allocation5 + $0xd08] sm:$0xff]
    %v520 = vld [vmem:[#allocation5 + $0xd10] sm:$0xff]
    %v521 = vld [vmem:[#allocation5 + $0xd18] sm:$0xff]
    %v522 = vld [vmem:[#allocation5 + $0xd20] sm:$0xff]
    %v523 = vld [vmem:[#allocation5 + $0xd28] sm:$0xff]
    %v524 = vld [vmem:[#allocation5 + $0xd30] sm:$0xff]
    %v525 = vld [vmem:[#allocation5 + $0xd38] sm:$0xff]
    %v526 = vld [vmem:[#allocation5 + $0xd40] sm:$0xff]
    %v527 = vld [vmem:[#allocation5 + $0xd48] sm:$0xff]
    %v528 = vld [vmem:[#allocation5 + $0xd50] sm:$0xff]
    %v529 = vld [vmem:[#allocation5 + $0xd58] sm:$0xff]
    %v530 = vld [vmem:[#allocation5 + $0xd60] sm:$0xff]
    %v531 = vld [vmem:[#allocation5 + $0xd68] sm:$0xff]
    %v532 = vld [vmem:[#allocation5 + $0xd70] sm:$0xff]
    %v533 = vld [vmem:[#allocation5 + $0xd78] sm:$0xff]
    %v534 = vld [vmem:[#allocation5 + $0xd80] sm:$0xff]
    %v535 = vld [vmem:[#allocation5 + $0xd88] sm:$0xff]
    %v536 = vld [vmem:[#allocation5 + $0xd90] sm:$0xff]
    %v537 = vld [vmem:[#allocation5 + $0xd98] sm:$0xff]
    %v538 = vld [vmem:[#allocation5 + $0xda0] sm:$0xff]
    %v539 = vld [vmem:[#allocation5 + $0xda8] sm:$0xff]
    %v540 = vld [vmem:[#allocation5 + $0xdb0] sm:$0xff]
    %v541 = vld [vmem:[#allocation5 + $0xdb8] sm:$0xff]
    %v542 = vld [vmem:[#allocation5 + $0xdc0] sm:$0xff]
    %v543 = vld [vmem:[#allocation5 + $0xdc8] sm:$0xff]
    %v544 = vld [vmem:[#allocation5 + $0xdd0] sm:$0xff]
    %v545 = vld [vmem:[#allocation5 + $0xdd8] sm:$0xff]
    %v546 = vld [vmem:[#allocation5 + $0xde0] sm:$0xff]
    %v547 = vld [vmem:[#allocation5 + $0xde8] sm:$0xff]
    %v548 = vld [vmem:[#allocation5 + $0xdf0] sm:$0xff]
    %v549 = vld [vmem:[#allocation5 + $0xdf8] sm:$0xff]
    %v550 = vld [vmem:[#allocation5 + $0xe00] sm:$0xff]
    %v551 = vld [vmem:[#allocation5 + $0xe08] sm:$0xff]
    %v552 = vld [vmem:[#allocation5 + $0xe10] sm:$0xff]
    %v553 = vld [vmem:[#allocation5 + $0xe18] sm:$0xff]
    %v554 = vld [vmem:[#allocation5 + $0xe20] sm:$0xff]
    %v555 = vld [vmem:[#allocation5 + $0xe28] sm:$0xff]
    %v556 = vld [vmem:[#allocation5 + $0xe30] sm:$0xff]
    %v557 = vld [vmem:[#allocation5 + $0xe38] sm:$0xff]
    %v558 = vld [vmem:[#allocation5 + $0xe40] sm:$0xff]
    %v559 = vld [vmem:[#allocation5 + $0xe48] sm:$0xff]
    %v560 = vld [vmem:[#allocation5 + $0xe50] sm:$0xff]
    %v561 = vld [vmem:[#allocation5 + $0xe58] sm:$0xff]
    %v562 = vld [vmem:[#allocation5 + $0xe60] sm:$0xff]
    %v563 = vld [vmem:[#allocation5 + $0xe68] sm:$0xff]
    %v564 = vld [vmem:[#allocation5 + $0xe70] sm:$0xff]
    %v565 = vld [vmem:[#allocation5 + $0xe78] sm:$0xff]
    %v566 = vld [vmem:[#allocation5 + $0xe80] sm:$0xff]
    %v567 = vld [vmem:[#allocation5 + $0xe88] sm:$0xff]
    %v568 = vld [vmem:[#allocation5 + $0xe90] sm:$0xff]
    %v569 = vld [vmem:[#allocation5 + $0xe98] sm:$0xff]
    %v570 = vld [vmem:[#allocation5 + $0xea0] sm:$0xff]
    %v571 = vld [vmem:[#allocation5 + $0xea8] sm:$0xff]
    %v572 = vld [vmem:[#allocation5 + $0xeb0] sm:$0xff]
    %v573 = vld [vmem:[#allocation5 + $0xeb8] sm:$0xff]
    %v574 = vld [vmem:[#allocation5 + $0xec0] sm:$0xff]
    %v575 = vld [vmem:[#allocation5 + $0xec8] sm:$0xff]
    %v576 = vld [vmem:[#allocation5 + $0xed0] sm:$0xff]
    %v577 = vld [vmem:[#allocation5 + $0xed8] sm:$0xff]
    %v578 = vld [vmem:[#allocation5 + $0xee0] sm:$0xff]
    %v579 = vld [vmem:[#allocation5 + $0xee8] sm:$0xff]
    %v580 = vld [vmem:[#allocation5 + $0xef0] sm:$0xff]
    %v581 = vld [vmem:[#allocation5 + $0xef8] sm:$0xff]
    %v582 = vld [vmem:[#allocation5 + $0xf00] sm:$0xff]
    %v583 = vld [vmem:[#allocation5 + $0xf08] sm:$0xff]
    %v584 = vld [vmem:[#allocation5 + $0xf10] sm:$0xff]
    %v585 = vld [vmem:[#allocation5 + $0xf18] sm:$0xff]
    %v586 = vld [vmem:[#allocation5 + $0xf20] sm:$0xff]
    %v587 = vld [vmem:[#allocation5 + $0xf28] sm:$0xff]
    %v588 = vld [vmem:[#allocation5 + $0xf30] sm:$0xff]
    %v589 = vld [vmem:[#allocation5 + $0xf38] sm:$0xff]
    %v590 = vld [vmem:[#allocation5 + $0xf40] sm:$0xff]
    %v591 = vld [vmem:[#allocation5 + $0xf48] sm:$0xff]
    %v592 = vld [vmem:[#allocation5 + $0xf50] sm:$0xff]
    %v593 = vld [vmem:[#allocation5 + $0xf58] sm:$0xff]
    %v594 = vld [vmem:[#allocation5 + $0xf60] sm:$0xff]
    %v595 = vld [vmem:[#allocation5 + $0xf68] sm:$0xff]
    %v596 = vld [vmem:[#allocation5 + $0xf70] sm:$0xff]
    %v597 = vld [vmem:[#allocation5 + $0xf78] sm:$0xff]
    %v598 = vld [vmem:[#allocation5 + $0xf80] sm:$0xff]
    %v599 = vld [vmem:[#allocation5 + $0xf88] sm:$0xff]
    %v600 = vld [vmem:[#allocation5 + $0xf90] sm:$0xff]
    %v601 = vld [vmem:[#allocation5 + $0xf98] sm:$0xff]
    %v602 = vld [vmem:[#allocation5 + $0xfa0] sm:$0xff]
    %v603 = vld [vmem:[#allocation5 + $0xfa8] sm:$0xff]
    %v604 = vld [vmem:[#allocation5 + $0xfb0] sm:$0xff]
    %v605 = vld [vmem:[#allocation5 + $0xfb8] sm:$0xff]
    %v606 = vld [vmem:[#allocation5 + $0xfc0] sm:$0xff]
    %v607 = vld [vmem:[#allocation5 + $0xfc8] sm:$0xff]
    %v608 = vld [vmem:[#allocation5 + $0xfd0] sm:$0xff]
    %v609 = vld [vmem:[#allocation5 + $0xfd8] sm:$0xff]
    %v610 = vld [vmem:[#allocation5 + $0xfe0] sm:$0xff]
    %v611 = vld [vmem:[#allocation5 + $0xfe8] sm:$0xff]
    %v612 = vld [vmem:[#allocation5 + $0xff0] sm:$0xff]
    %v613 = vld [vmem:[#allocation5 + $0xff8] sm:$0xff]
    %v614 = vld [vmem:[#allocation5 + $0x1000] sm:$0xff]
    %v615 = vld [vmem:[#allocation5 + $0x1008] sm:$0xff]
    %v616 = vld [vmem:[#allocation5 + $0x1010] sm:$0xff]
    %v617 = vld [vmem:[#allocation5 + $0x1018] sm:$0xff]
    %v618 = vld [vmem:[#allocation5 + $0x1020] sm:$0xff]
    %v619 = vld [vmem:[#allocation5 + $0x1028] sm:$0xff]
    %v620 = vld [vmem:[#allocation5 + $0x1030] sm:$0xff]
    %v621 = vld [vmem:[#allocation5 + $0x1038] sm:$0xff]
    %v622 = vld [vmem:[#allocation5 + $0x1040] sm:$0xff]
    %v623 = vld [vmem:[#allocation5 + $0x1048] sm:$0xff]
    %v624 = vld [vmem:[#allocation5 + $0x1050] sm:$0xff]
    %v625 = vld [vmem:[#allocation5 + $0x1058] sm:$0xff]
    %v626 = vld [vmem:[#allocation5 + $0x1060] sm:$0xff]
    %v627 = vld [vmem:[#allocation5 + $0x1068] sm:$0xff]
    %v628 = vld [vmem:[#allocation5 + $0x1070] sm:$0xff]
    %v629 = vld [vmem:[#allocation5 + $0x1078] sm:$0xff]
    %v630 = vld [vmem:[#allocation5 + $0x1080] sm:$0xff]
    %v631 = vld [vmem:[#allocation5 + $0x1088] sm:$0xff]
    %v632 = vld [vmem:[#allocation5 + $0x1090] sm:$0xff]
    %v633 = vld [vmem:[#allocation5 + $0x1098] sm:$0xff]
    %v634 = vld [vmem:[#allocation5 + $0x10a0] sm:$0xff]
    %v635 = vld [vmem:[#allocation5 + $0x10a8] sm:$0xff]
    %v636 = vld [vmem:[#allocation5 + $0x10b0] sm:$0xff]
    %v637 = vld [vmem:[#allocation5 + $0x10b8] sm:$0xff]
    %v638 = vld [vmem:[#allocation5 + $0x10c0] sm:$0xff]
    %v639 = vld [vmem:[#allocation5 + $0x10c8] sm:$0xff]
    %v640 = vld [vmem:[#allocation5 + $0x10d0] sm:$0xff]
    %v641 = vld [vmem:[#allocation5 + $0x10d8] sm:$0xff]
    %v642 = vld [vmem:[#allocation5 + $0x10e0] sm:$0xff]
    %v643 = vld [vmem:[#allocation5 + $0x10e8] sm:$0xff]
    %v644 = vld [vmem:[#allocation5 + $0x10f0] sm:$0xff]
    %v645 = vld [vmem:[#allocation5 + $0x10f8] sm:$0xff]
    %v646 = vld [vmem:[#allocation5 + $0x1100] sm:$0xff]
    %v647 = vld [vmem:[#allocation5 + $0x1108] sm:$0xff]
    %v648 = vld [vmem:[#allocation5 + $0x1110] sm:$0xff]
    %v649 = vld [vmem:[#allocation5 + $0x1118] sm:$0xff]
    %v650 = vld [vmem:[#allocation5 + $0x1120] sm:$0xff]
    %v651 = vld [vmem:[#allocation5 + $0x1128] sm:$0xff]
    %v652 = vld [vmem:[#allocation5 + $0x1130] sm:$0xff]
    %v653 = vld [vmem:[#allocation5 + $0x1138] sm:$0xff]
    %v654 = vld [vmem:[#allocation5 + $0x1140] sm:$0xff]
    %v655 = vld [vmem:[#allocation5 + $0x1148] sm:$0xff]
    %v656 = vld [vmem:[#allocation5 + $0x1150] sm:$0xff]
    %v657 = vld [vmem:[#allocation5 + $0x1158] sm:$0xff]
    %v658 = vld [vmem:[#allocation5 + $0x1160] sm:$0xff]
    %v659 = vld [vmem:[#allocation5 + $0x1168] sm:$0xff]
    %v660 = vld [vmem:[#allocation5 + $0x1170] sm:$0xff]
    %v661 = vld [vmem:[#allocation5 + $0x1178] sm:$0xff]
    %v662 = vld [vmem:[#allocation5 + $0x1180] sm:$0xff]
    %v663 = vld [vmem:[#allocation5 + $0x1188] sm:$0xff]
    %v664 = vld [vmem:[#allocation5 + $0x1190] sm:$0xff]
    %v665 = vld [vmem:[#allocation5 + $0x1198] sm:$0xff]
    %v666 = vld [vmem:[#allocation5 + $0x11a0] sm:$0xff]
    %v667 = vld [vmem:[#allocation5 + $0x11a8] sm:$0xff]
    %v668 = vld [vmem:[#allocation5 + $0x11b0] sm:$0xff]
    %v669 = vld [vmem:[#allocation5 + $0x11b8] sm:$0xff]
    %v670 = vld [vmem:[#allocation5 + $0x11c0] sm:$0xff]
    %v671 = vld [vmem:[#allocation5 + $0x11c8] sm:$0xff]
    %v672 = vld [vmem:[#allocation5 + $0x11d0] sm:$0xff]
    %v673 = vld [vmem:[#allocation5 + $0x11d8] sm:$0xff]
    %v674 = vld [vmem:[#allocation5 + $0x11e0] sm:$0xff]
    %v675 = vld [vmem:[#allocation5 + $0x11e8] sm:$0xff]
    %v676 = vld [vmem:[#allocation5 + $0x11f0] sm:$0xff]
    %v677 = vld [vmem:[#allocation5 + $0x11f8] sm:$0xff]
    %v678 = vld [vmem:[#allocation5 + $0x1200] sm:$0xff]
    %v679 = vld [vmem:[#allocation5 + $0x1208] sm:$0xff]
    %v680 = vld [vmem:[#allocation5 + $0x1210] sm:$0xff]
    %v681 = vld [vmem:[#allocation5 + $0x1218] sm:$0xff]
    %v682 = vld [vmem:[#allocation5 + $0x1220] sm:$0xff]
    %v683 = vld [vmem:[#allocation5 + $0x1228] sm:$0xff]
    %v684 = vld [vmem:[#allocation5 + $0x1230] sm:$0xff]
    %v685 = vld [vmem:[#allocation5 + $0x1238] sm:$0xff]
    %v686 = vld [vmem:[#allocation5 + $0x1240] sm:$0xff]
    %v687 = vld [vmem:[#allocation5 + $0x1248] sm:$0xff]
    %v688 = vld [vmem:[#allocation5 + $0x1250] sm:$0xff]
    %v689 = vld [vmem:[#allocation5 + $0x1258] sm:$0xff]
    %v690 = vld [vmem:[#allocation5 + $0x1260] sm:$0xff]
    %v691 = vld [vmem:[#allocation5 + $0x1268] sm:$0xff]
    %v692 = vld [vmem:[#allocation5 + $0x1270] sm:$0xff]
    %v693 = vld [vmem:[#allocation5 + $0x1278] sm:$0xff]
    %v694 = vld [vmem:[#allocation5 + $0x1280] sm:$0xff]
    %v695 = vld [vmem:[#allocation5 + $0x1288] sm:$0xff]
    %v696 = vld [vmem:[#allocation5 + $0x1290] sm:$0xff]
    %v697 = vld [vmem:[#allocation5 + $0x1298] sm:$0xff]
    %v698 = vld [vmem:[#allocation5 + $0x12a0] sm:$0xff]
    %v699 = vld [vmem:[#allocation5 + $0x12a8] sm:$0xff]
    %v700 = vld [vmem:[#allocation5 + $0x12b0] sm:$0xff]
    %v701 = vld [vmem:[#allocation5 + $0x12b8] sm:$0xff]
    %v702 = vld [vmem:[#allocation5 + $0x12c0] sm:$0xff]
    %v703 = vld [vmem:[#allocation5 + $0x12c8] sm:$0xff]
    %v704 = vld [vmem:[#allocation5 + $0x12d0] sm:$0xff]
    %v705 = vld [vmem:[#allocation5 + $0x12d8] sm:$0xff]
    %v706 = vld [vmem:[#allocation5 + $0x12e0] sm:$0xff]
    %v707 = vld [vmem:[#allocation5 + $0x12e8] sm:$0xff]
    %v708 = vld [vmem:[#allocation5 + $0x12f0] sm:$0xff]
    %v709 = vld [vmem:[#allocation5 + $0x12f8] sm:$0xff]
    %v710 = vld [vmem:[#allocation5 + $0x1300] sm:$0xff]
    %v711 = vld [vmem:[#allocation5 + $0x1308] sm:$0xff]
    %v712 = vld [vmem:[#allocation5 + $0x1310] sm:$0xff]
    %v713 = vld [vmem:[#allocation5 + $0x1318] sm:$0xff]
    %v714 = vld [vmem:[#allocation5 + $0x1320] sm:$0xff]
    %v715 = vld [vmem:[#allocation5 + $0x1328] sm:$0xff]
    %v716 = vld [vmem:[#allocation5 + $0x1330] sm:$0xff]
    %v717 = vld [vmem:[#allocation5 + $0x1338] sm:$0xff]
    %v718 = vld [vmem:[#allocation5 + $0x1340] sm:$0xff]
    %v719 = vld [vmem:[#allocation5 + $0x1348] sm:$0xff]
    %v720 = vld [vmem:[#allocation5 + $0x1350] sm:$0xff]
    %v721 = vld [vmem:[#allocation5 + $0x1358] sm:$0xff]
    %v722 = vld [vmem:[#allocation5 + $0x1360] sm:$0xff]
    %v723 = vld [vmem:[#allocation5 + $0x1368] sm:$0xff]
    %v724 = vld [vmem:[#allocation5 + $0x1370] sm:$0xff]
    %v725 = vld [vmem:[#allocation5 + $0x1378] sm:$0xff]
    %v726 = vld [vmem:[#allocation5 + $0x1380] sm:$0xff]
    %v727 = vld [vmem:[#allocation5 + $0x1388] sm:$0xff]
    %v728 = vld [vmem:[#allocation5 + $0x1390] sm:$0xff]
    %v729 = vld [vmem:[#allocation5 + $0x1398] sm:$0xff]
    %v730 = vld [vmem:[#allocation5 + $0x13a0] sm:$0xff]
    %v731 = vld [vmem:[#allocation5 + $0x13a8] sm:$0xff]
    %v732 = vld [vmem:[#allocation5 + $0x13b0] sm:$0xff]
    %v733 = vld [vmem:[#allocation5 + $0x13b8] sm:$0xff]
    %v734 = vld [vmem:[#allocation5 + $0x13c0] sm:$0xff]
    %v735 = vld [vmem:[#allocation5 + $0x13c8] sm:$0xff]
    %v736 = vld [vmem:[#allocation5 + $0x13d0] sm:$0xff]
    %v737 = vld [vmem:[#allocation5 + $0x13d8] sm:$0xff]
    %v738 = vld [vmem:[#allocation5 + $0x13e0] sm:$0xff]
    %v739 = vld [vmem:[#allocation5 + $0x13e8] sm:$0xff]
    %v740 = vld [vmem:[#allocation5 + $0x13f0] sm:$0xff]
    %v741 = vld [vmem:[#allocation5 + $0x13f8] sm:$0xff]
    %v742 = vld [vmem:[#allocation5 + $0x1400] sm:$0xff]
    %v743 = vld [vmem:[#allocation5 + $0x1408] sm:$0xff]
    %v744 = vld [vmem:[#allocation5 + $0x1410] sm:$0xff]
    %v745 = vld [vmem:[#allocation5 + $0x1418] sm:$0xff]
    %v746 = vld [vmem:[#allocation5 + $0x1420] sm:$0xff]
    %v747 = vld [vmem:[#allocation5 + $0x1428] sm:$0xff]
    %v748 = vld [vmem:[#allocation5 + $0x1430] sm:$0xff]
    %v749 = vld [vmem:[#allocation5 + $0x1438] sm:$0xff]
    %v750 = vld [vmem:[#allocation5 + $0x1440] sm:$0xff]
    %v751 = vld [vmem:[#allocation5 + $0x1448] sm:$0xff]
    %v752 = vld [vmem:[#allocation5 + $0x1450] sm:$0xff]
    %v753 = vld [vmem:[#allocation5 + $0x1458] sm:$0xff]
    %v754 = vld [vmem:[#allocation5 + $0x1460] sm:$0xff]
    %v755 = vld [vmem:[#allocation5 + $0x1468] sm:$0xff]
    %v756 = vld [vmem:[#allocation5 + $0x1470] sm:$0xff]
    %v757 = vld [vmem:[#allocation5 + $0x1478] sm:$0xff]
    %v758 = vld [vmem:[#allocation5 + $0x1480] sm:$0xff]
    %v759 = vld [vmem:[#allocation5 + $0x1488] sm:$0xff]
    %v760 = vld [vmem:[#allocation5 + $0x1490] sm:$0xff]
    %v761 = vld [vmem:[#allocation5 + $0x1498] sm:$0xff]
    %v762 = vld [vmem:[#allocation5 + $0x14a0] sm:$0xff]
    %v763 = vld [vmem:[#allocation5 + $0x14a8] sm:$0xff]
    %v764 = vld [vmem:[#allocation5 + $0x14b0] sm:$0xff]
    %v765 = vld [vmem:[#allocation5 + $0x14b8] sm:$0xff]
    %v766 = vld [vmem:[#allocation5 + $0x14c0] sm:$0xff]
    %v767 = vld [vmem:[#allocation5 + $0x14c8] sm:$0xff]
    %v768 = vld [vmem:[#allocation5 + $0x14d0] sm:$0xff]
    %v769 = vld [vmem:[#allocation5 + $0x14d8] sm:$0xff]
    %v770 = vld [vmem:[#allocation5 + $0x14e0] sm:$0xff]
    %v771 = vld [vmem:[#allocation5 + $0x14e8] sm:$0xff]
    %v772 = vld [vmem:[#allocation5 + $0x14f0] sm:$0xff]
    %v773 = vld [vmem:[#allocation5 + $0x14f8] sm:$0xff]
    %v774 = vld [vmem:[#allocation5 + $0x1500] sm:$0xff]
    %v775 = vld [vmem:[#allocation5 + $0x1508] sm:$0xff]
    %v776 = vld [vmem:[#allocation5 + $0x1510] sm:$0xff]
    %v777 = vld [vmem:[#allocation5 + $0x1518] sm:$0xff]
    %v778 = vld [vmem:[#allocation5 + $0x1520] sm:$0xff]
    %v779 = vld [vmem:[#allocation5 + $0x1528] sm:$0xff]
    %v780 = vld [vmem:[#allocation5 + $0x1530] sm:$0xff]
    %v781 = vld [vmem:[#allocation5 + $0x1538] sm:$0xff]
    %v782 = vld [vmem:[#allocation5 + $0x1540] sm:$0xff]
    %v783 = vld [vmem:[#allocation5 + $0x1548] sm:$0xff]
    %v784 = vld [vmem:[#allocation5 + $0x1550] sm:$0xff]
    %v785 = vld [vmem:[#allocation5 + $0x1558] sm:$0xff]
    %v786 = vld [vmem:[#allocation5 + $0x1560] sm:$0xff]
    %v787 = vld [vmem:[#allocation5 + $0x1568] sm:$0xff]
    %v788 = vld [vmem:[#allocation5 + $0x1570] sm:$0xff]
    %v789 = vld [vmem:[#allocation5 + $0x1578] sm:$0xff]
    %v790 = vld [vmem:[#allocation5 + $0x1580] sm:$0xff]
    %v791 = vld [vmem:[#allocation5 + $0x1588] sm:$0xff]
    %v792 = vld [vmem:[#allocation5 + $0x1590] sm:$0xff]
    %v793 = vld [vmem:[#allocation5 + $0x1598] sm:$0xff]
    %v794 = vld [vmem:[#allocation5 + $0x15a0] sm:$0xff]
    %v795 = vld [vmem:[#allocation5 + $0x15a8] sm:$0xff]
    %v796 = vld [vmem:[#allocation5 + $0x15b0] sm:$0xff]
    %v797 = vld [vmem:[#allocation5 + $0x15b8] sm:$0xff]
    %v798 = vld [vmem:[#allocation5 + $0x15c0] sm:$0xff]
    %v799 = vld [vmem:[#allocation5 + $0x15c8] sm:$0xff]
    %v800 = vld [vmem:[#allocation5 + $0x15d0] sm:$0xff]
    %v801 = vld [vmem:[#allocation5 + $0x15d8] sm:$0xff]
    %v802 = vld [vmem:[#allocation5 + $0x15e0] sm:$0xff]
    %v803 = vld [vmem:[#allocation5 + $0x15e8] sm:$0xff]
    %v804 = vld [vmem:[#allocation5 + $0x15f0] sm:$0xff]
    %v805 = vld [vmem:[#allocation5 + $0x15f8] sm:$0xff]
    %v806 = vld [vmem:[#allocation5 + $0x1600] sm:$0xff]
    %v807 = vld [vmem:[#allocation5 + $0x1608] sm:$0xff]
    %v808 = vld [vmem:[#allocation5 + $0x1610] sm:$0xff]
    %v809 = vld [vmem:[#allocation5 + $0x1618] sm:$0xff]
    %v810 = vld [vmem:[#allocation5 + $0x1620] sm:$0xff]
    %v811 = vld [vmem:[#allocation5 + $0x1628] sm:$0xff]
    %v812 = vld [vmem:[#allocation5 + $0x1630] sm:$0xff]
    %v813 = vld [vmem:[#allocation5 + $0x1638] sm:$0xff]
    %v814 = vld [vmem:[#allocation5 + $0x1640] sm:$0xff]
    %v815 = vld [vmem:[#allocation5 + $0x1648] sm:$0xff]
    %v816 = vld [vmem:[#allocation5 + $0x1650] sm:$0xff]
    %v817 = vld [vmem:[#allocation5 + $0x1658] sm:$0xff]
    %v818 = vld [vmem:[#allocation5 + $0x1660] sm:$0xff]
    %v819 = vld [vmem:[#allocation5 + $0x1668] sm:$0xff]
    %v820 = vld [vmem:[#allocation5 + $0x1670] sm:$0xff]
    %v821 = vld [vmem:[#allocation5 + $0x1678] sm:$0xff]
    %v822 = vld [vmem:[#allocation5 + $0x1680] sm:$0xff]
    %v823 = vld [vmem:[#allocation5 + $0x1688] sm:$0xff]
    %v824 = vld [vmem:[#allocation5 + $0x1690] sm:$0xff]
    %v825 = vld [vmem:[#allocation5 + $0x1698] sm:$0xff]
    %v826 = vld [vmem:[#allocation5 + $0x16a0] sm:$0xff]
    %v827 = vld [vmem:[#allocation5 + $0x16a8] sm:$0xff]
    %v828 = vld [vmem:[#allocation5 + $0x16b0] sm:$0xff]
    %v829 = vld [vmem:[#allocation5 + $0x16b8] sm:$0xff]
    %v830 = vld [vmem:[#allocation5 + $0x16c0] sm:$0xff]
    %v831 = vld [vmem:[#allocation5 + $0x16c8] sm:$0xff]
    %v832 = vld [vmem:[#allocation5 + $0x16d0] sm:$0xff]
    %v833 = vld [vmem:[#allocation5 + $0x16d8] sm:$0xff]
    %v834 = vld [vmem:[#allocation5 + $0x16e0] sm:$0xff]
    %v835 = vld [vmem:[#allocation5 + $0x16e8] sm:$0xff]
    %v836 = vld [vmem:[#allocation5 + $0x16f0] sm:$0xff]
    %v837 = vld [vmem:[#allocation5 + $0x16f8] sm:$0xff]
    %v838 = vld [vmem:[#allocation5 + $0x1700] sm:$0xff]
    %v839 = vld [vmem:[#allocation5 + $0x1708] sm:$0xff]
    %v840 = vld [vmem:[#allocation5 + $0x1710] sm:$0xff]
    %v841 = vld [vmem:[#allocation5 + $0x1718] sm:$0xff]
    %v842 = vld [vmem:[#allocation5 + $0x1720] sm:$0xff]
    %v843 = vld [vmem:[#allocation5 + $0x1728] sm:$0xff]
    %v844 = vld [vmem:[#allocation5 + $0x1730] sm:$0xff]
    %v845 = vld [vmem:[#allocation5 + $0x1738] sm:$0xff]
    %v846 = vld [vmem:[#allocation5 + $0x1740] sm:$0xff]
    %v847 = vld [vmem:[#allocation5 + $0x1748] sm:$0xff]
    %v848 = vld [vmem:[#allocation5 + $0x1750] sm:$0xff]
    %v849 = vld [vmem:[#allocation5 + $0x1758] sm:$0xff]
    %v850 = vld [vmem:[#allocation5 + $0x1760] sm:$0xff]
    %v851 = vld [vmem:[#allocation5 + $0x1768] sm:$0xff]
    %v852 = vld [vmem:[#allocation5 + $0x1770] sm:$0xff]
    %v853 = vld [vmem:[#allocation5 + $0x1778] sm:$0xff]
    %v854 = vld [vmem:[#allocation5 + $0x1780] sm:$0xff]
    %v855 = vld [vmem:[#allocation5 + $0x1788] sm:$0xff]
    %v856 = vld [vmem:[#allocation5 + $0x1790] sm:$0xff]
    %v857 = vld [vmem:[#allocation5 + $0x1798] sm:$0xff]
    %v858 = vld [vmem:[#allocation5 + $0x17a0] sm:$0xff]
    %v859 = vld [vmem:[#allocation5 + $0x17a8] sm:$0xff]
    %v860 = vld [vmem:[#allocation5 + $0x17b0] sm:$0xff]
    %v861 = vld [vmem:[#allocation5 + $0x17b8] sm:$0xff]
    %v862 = vld [vmem:[#allocation5 + $0x17c0] sm:$0xff]
    %v863 = vld [vmem:[#allocation5 + $0x17c8] sm:$0xff]
    %v864 = vld [vmem:[#allocation5 + $0x17d0] sm:$0xff]
    %v865 = vld [vmem:[#allocation5 + $0x17d8] sm:$0xff]
    %v866 = vld [vmem:[#allocation5 + $0x17e0] sm:$0xff]
    %v867 = vld [vmem:[#allocation5 + $0x17e8] sm:$0xff]
    %v868 = vld [vmem:[#allocation5 + $0x17f0] sm:$0xff]
    %v869 = vld [vmem:[#allocation5 + $0x17f8] sm:$0xff]
    %v870 = vld [vmem:[#allocation7] sm:$0xff]
    %v871 = vld [vmem:[#allocation7 + $0x8] sm:$0xff]
    %v874 = vlaneseq
    %v875 = vshrl.u32 %v874, 7
    %v876 = vsub.s32 0, %v875
    %v877 = vrot.slane %v870, %v876
    %v878 = vlaneseq
    %v879 = vshrl.u32 %v878, 7
    %v880 = vsub.s32 1, %v879
    %v881 = vrot.slane %v870, %v880
    %v882 = vlaneseq
    %v883 = vshrl.u32 %v882, 7
    %v884 = vsub.s32 2, %v883
    %v885 = vrot.slane %v870, %v884
    %v886 = vlaneseq
    %v887 = vshrl.u32 %v886, 7
    %v888 = vsub.s32 3, %v887
    %v889 = vrot.slane %v870, %v888
    %v890 = vlaneseq
    %v891 = vshrl.u32 %v890, 7
    %v892 = vsub.s32 4, %v891
    %v893 = vrot.slane %v870, %v892
    %v894 = vlaneseq
    %v895 = vshrl.u32 %v894, 7
    %v896 = vsub.s32 5, %v895
    %v897 = vrot.slane %v870, %v896
    %v898 = vlaneseq
    %v899 = vshrl.u32 %v898, 7
    %v900 = vsub.s32 6, %v899
    %v901 = vrot.slane %v870, %v900
    %v902 = vlaneseq
    %v903 = vshrl.u32 %v902, 7
    %v904 = vsub.s32 7, %v903
    %v905 = vrot.slane %v870, %v904
    %v906 = vlaneseq
    %v907 = vshrl.u32 %v906, 7
    %v908 = vsub.s32 0, %v907
    %v909 = vrot.slane %v871, %v908
    %v910 = vlaneseq
    %v911 = vshrl.u32 %v910, 7
    %v912 = vsub.s32 1, %v911
    %v913 = vrot.slane %v871, %v912
    %v914 = vlaneseq
    %v915 = vshrl.u32 %v914, 7
    %v916 = vsub.s32 2, %v915
    %v917 = vrot.slane %v871, %v916
    %v918 = vlaneseq
    %v919 = vshrl.u32 %v918, 7
    %v920 = vsub.s32 3, %v919
    %v921 = vrot.slane %v871, %v920
    %v922 = vlaneseq
    %v923 = vshrl.u32 %v922, 7
    %v924 = vsub.s32 4, %v923
    %v925 = vrot.slane %v871, %v924
    %v926 = vlaneseq
    %v927 = vshrl.u32 %v926, 7
    %v928 = vsub.s32 5, %v927
    %v929 = vrot.slane %v871, %v928
    %v930 = vlaneseq
    %v931 = vshrl.u32 %v930, 7
    %v932 = vsub.s32 6, %v931
    %v933 = vrot.slane %v871, %v932
    %v934 = vlaneseq
    %v935 = vshrl.u32 %v934, 7
    %v936 = vsub.s32 7, %v935
    %v937 = vrot.slane %v871, %v936
    %v954 = vpack.c.b16 %v96, %v90
    %v955 = vpack.c.b16 %v97, %v91
    %v956 = vpack.c.b16 %v98, %v92
    %v957 = vpack.c.b16 %v99, %v93
    %v958 = vpack.c.b16 %v100, %v94
    %v959 = vpack.c.b16 %v101, %v95
    %v1734 = vunpack.c.l.b16 %v102
    %v1735 = vunpack.c.h.b16 %v102
    %v1736 = vunpack.c.l.b16 %v103
    %v1737 = vunpack.c.h.b16 %v103
    %v1738 = vunpack.c.l.b16 %v104
    %v1739 = vunpack.c.h.b16 %v104
    %v1740 = vunpack.c.l.b16 %v105
    %v1741 = vunpack.c.h.b16 %v105
    %v1742 = vunpack.c.l.b16 %v106
    %v1743 = vunpack.c.h.b16 %v106
    %v1744 = vunpack.c.l.b16 %v107
    %v1745 = vunpack.c.h.b16 %v107
    %v1746 = vunpack.c.l.b16 %v108
    %v1747 = vunpack.c.h.b16 %v108
    %v1748 = vunpack.c.l.b16 %v109
    %v1749 = vunpack.c.h.b16 %v109
    %v1750 = vunpack.c.l.b16 %v110
    %v1751 = vunpack.c.h.b16 %v110
    %v1752 = vunpack.c.l.b16 %v111
    %v1753 = vunpack.c.h.b16 %v111
    %v1754 = vunpack.c.l.b16 %v112
    %v1755 = vunpack.c.h.b16 %v112
    %v1756 = vunpack.c.l.b16 %v113
    %v1757 = vunpack.c.h.b16 %v113
    %v1758 = vunpack.c.l.b16 %v114
    %v1759 = vunpack.c.h.b16 %v114
    %v1760 = vunpack.c.l.b16 %v115
    %v1761 = vunpack.c.h.b16 %v115
    %v1762 = vunpack.c.l.b16 %v116
    %v1763 = vunpack.c.h.b16 %v116
    %v1764 = vunpack.c.l.b16 %v117
    %v1765 = vunpack.c.h.b16 %v117
    %v1766 = vunpack.c.l.b16 %v118
    %v1767 = vunpack.c.h.b16 %v118
    %v1768 = vunpack.c.l.b16 %v119
    %v1769 = vunpack.c.h.b16 %v119
    %v1770 = vunpack.c.l.b16 %v120
    %v1771 = vunpack.c.h.b16 %v120
    %v1772 = vunpack.c.l.b16 %v121
    %v1773 = vunpack.c.h.b16 %v121
    %v1774 = vunpack.c.l.b16 %v122
    %v1775 = vunpack.c.h.b16 %v122
    %v1776 = vunpack.c.l.b16 %v123
    %v1777 = vunpack.c.h.b16 %v123
    %v1778 = vunpack.c.l.b16 %v124
    %v1779 = vunpack.c.h.b16 %v124
    %v1780 = vunpack.c.l.b16 %v125
    %v1781 = vunpack.c.h.b16 %v125
    %v1782 = vunpack.c.l.b16 %v126
    %v1783 = vunpack.c.h.b16 %v126
    %v1784 = vunpack.c.l.b16 %v127
    %v1785 = vunpack.c.h.b16 %v127
    %v1786 = vunpack.c.l.b16 %v128
    %v1787 = vunpack.c.h.b16 %v128
    %v1788 = vunpack.c.l.b16 %v129
    %v1789 = vunpack.c.h.b16 %v129
    %v1790 = vunpack.c.l.b16 %v130
    %v1791 = vunpack.c.h.b16 %v130
    %v1792 = vunpack.c.l.b16 %v131
    %v1793 = vunpack.c.h.b16 %v131
    %v1794 = vunpack.c.l.b16 %v132
    %v1795 = vunpack.c.h.b16 %v132
    %v1796 = vunpack.c.l.b16 %v133
    %v1797 = vunpack.c.h.b16 %v133
    %v1798 = vunpack.c.l.b16 %v134
    %v1799 = vunpack.c.h.b16 %v134
    %v1800 = vunpack.c.l.b16 %v135
    %v1801 = vunpack.c.h.b16 %v135
    %v1802 = vunpack.c.l.b16 %v136
    %v1803 = vunpack.c.h.b16 %v136
    %v1804 = vunpack.c.l.b16 %v137
    %v1805 = vunpack.c.h.b16 %v137
    %v1806 = vunpack.c.l.b16 %v138
    %v1807 = vunpack.c.h.b16 %v138
    %v1808 = vunpack.c.l.b16 %v139
    %v1809 = vunpack.c.h.b16 %v139
    %v1810 = vunpack.c.l.b16 %v140
    %v1811 = vunpack.c.h.b16 %v140
    %v1812 = vunpack.c.l.b16 %v141
    %v1813 = vunpack.c.h.b16 %v141
    %v1814 = vunpack.c.l.b16 %v142
    %v1815 = vunpack.c.h.b16 %v142
    %v1816 = vunpack.c.l.b16 %v143
    %v1817 = vunpack.c.h.b16 %v143
    %v1818 = vunpack.c.l.b16 %v144
    %v1819 = vunpack.c.h.b16 %v144
    %v1820 = vunpack.c.l.b16 %v145
    %v1821 = vunpack.c.h.b16 %v145
    %v1822 = vunpack.c.l.b16 %v146
    %v1823 = vunpack.c.h.b16 %v146
    %v1824 = vunpack.c.l.b16 %v147
    %v1825 = vunpack.c.h.b16 %v147
    %v1826 = vunpack.c.l.b16 %v148
    %v1827 = vunpack.c.h.b16 %v148
    %v1828 = vunpack.c.l.b16 %v149
    %v1829 = vunpack.c.h.b16 %v149
    %v1830 = vunpack.c.l.b16 %v150
    %v1831 = vunpack.c.h.b16 %v150
    %v1832 = vunpack.c.l.b16 %v151
    %v1833 = vunpack.c.h.b16 %v151
    %v1834 = vunpack.c.l.b16 %v152
    %v1835 = vunpack.c.h.b16 %v152
    %v1836 = vunpack.c.l.b16 %v153
    %v1837 = vunpack.c.h.b16 %v153
    %v1838 = vunpack.c.l.b16 %v154
    %v1839 = vunpack.c.h.b16 %v154
    %v1840 = vunpack.c.l.b16 %v155
    %v1841 = vunpack.c.h.b16 %v155
    %v1842 = vunpack.c.l.b16 %v156
    %v1843 = vunpack.c.h.b16 %v156
    %v1844 = vunpack.c.l.b16 %v157
    %v1845 = vunpack.c.h.b16 %v157
    %v1846 = vunpack.c.l.b16 %v158
    %v1847 = vunpack.c.h.b16 %v158
    %v1848 = vunpack.c.l.b16 %v159
    %v1849 = vunpack.c.h.b16 %v159
    %v1850 = vunpack.c.l.b16 %v160
    %v1851 = vunpack.c.h.b16 %v160
    %v1852 = vunpack.c.l.b16 %v161
    %v1853 = vunpack.c.h.b16 %v161
    %v1854 = vunpack.c.l.b16 %v162
    %v1855 = vunpack.c.h.b16 %v162
    %v1856 = vunpack.c.l.b16 %v163
    %v1857 = vunpack.c.h.b16 %v163
    %v1858 = vunpack.c.l.b16 %v164
    %v1859 = vunpack.c.h.b16 %v164
    %v1860 = vunpack.c.l.b16 %v165
    %v1861 = vunpack.c.h.b16 %v165
    %v1862 = vunpack.c.l.b16 %v166
    %v1863 = vunpack.c.h.b16 %v166
    %v1864 = vunpack.c.l.b16 %v167
    %v1865 = vunpack.c.h.b16 %v167
    %v1866 = vunpack.c.l.b16 %v168
    %v1867 = vunpack.c.h.b16 %v168
    %v1868 = vunpack.c.l.b16 %v169
    %v1869 = vunpack.c.h.b16 %v169
    %v1870 = vunpack.c.l.b16 %v170
    %v1871 = vunpack.c.h.b16 %v170
    %v1872 = vunpack.c.l.b16 %v171
    %v1873 = vunpack.c.h.b16 %v171
    %v1874 = vunpack.c.l.b16 %v172
    %v1875 = vunpack.c.h.b16 %v172
    %v1876 = vunpack.c.l.b16 %v173
    %v1877 = vunpack.c.h.b16 %v173
    %v1878 = vunpack.c.l.b16 %v174
    %v1879 = vunpack.c.h.b16 %v174
    %v1880 = vunpack.c.l.b16 %v175
    %v1881 = vunpack.c.h.b16 %v175
    %v1882 = vunpack.c.l.b16 %v176
    %v1883 = vunpack.c.h.b16 %v176
    %v1884 = vunpack.c.l.b16 %v177
    %v1885 = vunpack.c.h.b16 %v177
    %v1886 = vunpack.c.l.b16 %v178
    %v1887 = vunpack.c.h.b16 %v178
    %v1888 = vunpack.c.l.b16 %v179
    %v1889 = vunpack.c.h.b16 %v179
    %v1890 = vunpack.c.l.b16 %v180
    %v1891 = vunpack.c.h.b16 %v180
    %v1892 = vunpack.c.l.b16 %v181
    %v1893 = vunpack.c.h.b16 %v181
    %v1894 = vunpack.c.l.b16 %v182
    %v1895 = vunpack.c.h.b16 %v182
    %v1896 = vunpack.c.l.b16 %v183
    %v1897 = vunpack.c.h.b16 %v183
    %v1898 = vunpack.c.l.b16 %v184
    %v1899 = vunpack.c.h.b16 %v184
    %v1900 = vunpack.c.l.b16 %v185
    %v1901 = vunpack.c.h.b16 %v185
    %v1902 = vunpack.c.l.b16 %v186
    %v1903 = vunpack.c.h.b16 %v186
    %v1904 = vunpack.c.l.b16 %v187
    %v1905 = vunpack.c.h.b16 %v187
    %v1906 = vunpack.c.l.b16 %v188
    %v1907 = vunpack.c.h.b16 %v188
    %v1908 = vunpack.c.l.b16 %v189
    %v1909 = vunpack.c.h.b16 %v189
    %v1910 = vunpack.c.l.b16 %v190
    %v1911 = vunpack.c.h.b16 %v190
    %v1912 = vunpack.c.l.b16 %v191
    %v1913 = vunpack.c.h.b16 %v191
    %v1914 = vunpack.c.l.b16 %v192
    %v1915 = vunpack.c.h.b16 %v192
    %v1916 = vunpack.c.l.b16 %v193
    %v1917 = vunpack.c.h.b16 %v193
    %v1918 = vunpack.c.l.b16 %v194
    %v1919 = vunpack.c.h.b16 %v194
    %v1920 = vunpack.c.l.b16 %v195
    %v1921 = vunpack.c.h.b16 %v195
    %v1922 = vunpack.c.l.b16 %v196
    %v1923 = vunpack.c.h.b16 %v196
    %v1924 = vunpack.c.l.b16 %v197
    %v1925 = vunpack.c.h.b16 %v197
    %v1926 = vunpack.c.l.b16 %v198
    %v1927 = vunpack.c.h.b16 %v198
    %v1928 = vunpack.c.l.b16 %v199
    %v1929 = vunpack.c.h.b16 %v199
    %v1930 = vunpack.c.l.b16 %v200
    %v1931 = vunpack.c.h.b16 %v200
    %v1932 = vunpack.c.l.b16 %v201
    %v1933 = vunpack.c.h.b16 %v201
    %v1934 = vunpack.c.l.b16 %v202
    %v1935 = vunpack.c.h.b16 %v202
    %v1936 = vunpack.c.l.b16 %v203
    %v1937 = vunpack.c.h.b16 %v203
    %v1938 = vunpack.c.l.b16 %v204
    %v1939 = vunpack.c.h.b16 %v204
    %v1940 = vunpack.c.l.b16 %v205
    %v1941 = vunpack.c.h.b16 %v205
    %v1942 = vunpack.c.l.b16 %v206
    %v1943 = vunpack.c.h.b16 %v206
    %v1944 = vunpack.c.l.b16 %v207
    %v1945 = vunpack.c.h.b16 %v207
    %v1946 = vunpack.c.l.b16 %v208
    %v1947 = vunpack.c.h.b16 %v208
    %v1948 = vunpack.c.l.b16 %v209
    %v1949 = vunpack.c.h.b16 %v209
    %v1950 = vunpack.c.l.b16 %v210
    %v1951 = vunpack.c.h.b16 %v210
    %v1952 = vunpack.c.l.b16 %v211
    %v1953 = vunpack.c.h.b16 %v211
    %v1954 = vunpack.c.l.b16 %v212
    %v1955 = vunpack.c.h.b16 %v212
    %v1956 = vunpack.c.l.b16 %v213
    %v1957 = vunpack.c.h.b16 %v213
    %v1958 = vunpack.c.l.b16 %v214
    %v1959 = vunpack.c.h.b16 %v214
    %v1960 = vunpack.c.l.b16 %v215
    %v1961 = vunpack.c.h.b16 %v215
    %v1962 = vunpack.c.l.b16 %v216
    %v1963 = vunpack.c.h.b16 %v216
    %v1964 = vunpack.c.l.b16 %v217
    %v1965 = vunpack.c.h.b16 %v217
    %v1966 = vunpack.c.l.b16 %v218
    %v1967 = vunpack.c.h.b16 %v218
    %v1968 = vunpack.c.l.b16 %v219
    %v1969 = vunpack.c.h.b16 %v219
    %v1970 = vunpack.c.l.b16 %v220
    %v1971 = vunpack.c.h.b16 %v220
    %v1972 = vunpack.c.l.b16 %v221
    %v1973 = vunpack.c.h.b16 %v221
    %v1974 = vunpack.c.l.b16 %v222
    %v1975 = vunpack.c.h.b16 %v222
    %v1976 = vunpack.c.l.b16 %v223
    %v1977 = vunpack.c.h.b16 %v223
    %v1978 = vunpack.c.l.b16 %v224
    %v1979 = vunpack.c.h.b16 %v224
    %v1980 = vunpack.c.l.b16 %v225
    %v1981 = vunpack.c.h.b16 %v225
    %v1982 = vunpack.c.l.b16 %v226
    %v1983 = vunpack.c.h.b16 %v226
    %v1984 = vunpack.c.l.b16 %v227
    %v1985 = vunpack.c.h.b16 %v227
    %v1986 = vunpack.c.l.b16 %v228
    %v1987 = vunpack.c.h.b16 %v228
    %v1988 = vunpack.c.l.b16 %v229
    %v1989 = vunpack.c.h.b16 %v229
    %v1990 = vunpack.c.l.b16 %v230
    %v1991 = vunpack.c.h.b16 %v230
    %v1992 = vunpack.c.l.b16 %v231
    %v1993 = vunpack.c.h.b16 %v231
    %v1994 = vunpack.c.l.b16 %v232
    %v1995 = vunpack.c.h.b16 %v232
    %v1996 = vunpack.c.l.b16 %v233
    %v1997 = vunpack.c.h.b16 %v233
    %v1998 = vunpack.c.l.b16 %v234
    %v1999 = vunpack.c.h.b16 %v234
    %v2000 = vunpack.c.l.b16 %v235
    %v2001 = vunpack.c.h.b16 %v235
    %v2002 = vunpack.c.l.b16 %v236
    %v2003 = vunpack.c.h.b16 %v236
    %v2004 = vunpack.c.l.b16 %v237
    %v2005 = vunpack.c.h.b16 %v237
    %v2006 = vunpack.c.l.b16 %v238
    %v2007 = vunpack.c.h.b16 %v238
    %v2008 = vunpack.c.l.b16 %v239
    %v2009 = vunpack.c.h.b16 %v239
    %v2010 = vunpack.c.l.b16 %v240
    %v2011 = vunpack.c.h.b16 %v240
    %v2012 = vunpack.c.l.b16 %v241
    %v2013 = vunpack.c.h.b16 %v241
    %v2014 = vunpack.c.l.b16 %v242
    %v2015 = vunpack.c.h.b16 %v242
    %v2016 = vunpack.c.l.b16 %v243
    %v2017 = vunpack.c.h.b16 %v243
    %v2018 = vunpack.c.l.b16 %v244
    %v2019 = vunpack.c.h.b16 %v244
    %v2020 = vunpack.c.l.b16 %v245
    %v2021 = vunpack.c.h.b16 %v245
    %v2022 = vunpack.c.l.b16 %v246
    %v2023 = vunpack.c.h.b16 %v246
    %v2024 = vunpack.c.l.b16 %v247
    %v2025 = vunpack.c.h.b16 %v247
    %v2026 = vunpack.c.l.b16 %v248
    %v2027 = vunpack.c.h.b16 %v248
    %v2028 = vunpack.c.l.b16 %v249
    %v2029 = vunpack.c.h.b16 %v249
    %v2030 = vunpack.c.l.b16 %v250
    %v2031 = vunpack.c.h.b16 %v250
    %v2032 = vunpack.c.l.b16 %v251
    %v2033 = vunpack.c.h.b16 %v251
    %v2034 = vunpack.c.l.b16 %v252
    %v2035 = vunpack.c.h.b16 %v252
    %v2036 = vunpack.c.l.b16 %v253
    %v2037 = vunpack.c.h.b16 %v253
    %v2038 = vunpack.c.l.b16 %v254
    %v2039 = vunpack.c.h.b16 %v254
    %v2040 = vunpack.c.l.b16 %v255
    %v2041 = vunpack.c.h.b16 %v255
    %v2042 = vunpack.c.l.b16 %v256
    %v2043 = vunpack.c.h.b16 %v256
    %v2044 = vunpack.c.l.b16 %v257
    %v2045 = vunpack.c.h.b16 %v257
    %v2046 = vunpack.c.l.b16 %v258
    %v2047 = vunpack.c.h.b16 %v258
    %v2048 = vunpack.c.l.b16 %v259
    %v2049 = vunpack.c.h.b16 %v259
    %v2050 = vunpack.c.l.b16 %v260
    %v2051 = vunpack.c.h.b16 %v260
    %v2052 = vunpack.c.l.b16 %v261
    %v2053 = vunpack.c.h.b16 %v261
    %v2054 = vunpack.c.l.b16 %v262
    %v2055 = vunpack.c.h.b16 %v262
    %v2056 = vunpack.c.l.b16 %v263
    %v2057 = vunpack.c.h.b16 %v263
    %v2058 = vunpack.c.l.b16 %v264
    %v2059 = vunpack.c.h.b16 %v264
    %v2060 = vunpack.c.l.b16 %v265
    %v2061 = vunpack.c.h.b16 %v265
    %v2062 = vunpack.c.l.b16 %v266
    %v2063 = vunpack.c.h.b16 %v266
    %v2064 = vunpack.c.l.b16 %v267
    %v2065 = vunpack.c.h.b16 %v267
    %v2066 = vunpack.c.l.b16 %v268
    %v2067 = vunpack.c.h.b16 %v268
    %v2068 = vunpack.c.l.b16 %v269
    %v2069 = vunpack.c.h.b16 %v269
    %v2070 = vunpack.c.l.b16 %v270
    %v2071 = vunpack.c.h.b16 %v270
    %v2072 = vunpack.c.l.b16 %v271
    %v2073 = vunpack.c.h.b16 %v271
    %v2074 = vunpack.c.l.b16 %v272
    %v2075 = vunpack.c.h.b16 %v272
    %v2076 = vunpack.c.l.b16 %v273
    %v2077 = vunpack.c.h.b16 %v273
    %v2078 = vunpack.c.l.b16 %v274
    %v2079 = vunpack.c.h.b16 %v274
    %v2080 = vunpack.c.l.b16 %v275
    %v2081 = vunpack.c.h.b16 %v275
    %v2082 = vunpack.c.l.b16 %v276
    %v2083 = vunpack.c.h.b16 %v276
    %v2084 = vunpack.c.l.b16 %v277
    %v2085 = vunpack.c.h.b16 %v277
    %v2086 = vunpack.c.l.b16 %v278
    %v2087 = vunpack.c.h.b16 %v278
    %v2088 = vunpack.c.l.b16 %v279
    %v2089 = vunpack.c.h.b16 %v279
    %v2090 = vunpack.c.l.b16 %v280
    %v2091 = vunpack.c.h.b16 %v280
    %v2092 = vunpack.c.l.b16 %v281
    %v2093 = vunpack.c.h.b16 %v281
    %v2094 = vunpack.c.l.b16 %v282
    %v2095 = vunpack.c.h.b16 %v282
    %v2096 = vunpack.c.l.b16 %v283
    %v2097 = vunpack.c.h.b16 %v283
    %v2098 = vunpack.c.l.b16 %v284
    %v2099 = vunpack.c.h.b16 %v284
    %v2100 = vunpack.c.l.b16 %v285
    %v2101 = vunpack.c.h.b16 %v285
    %v2102 = vunpack.c.l.b16 %v286
    %v2103 = vunpack.c.h.b16 %v286
    %v2104 = vunpack.c.l.b16 %v287
    %v2105 = vunpack.c.h.b16 %v287
    %v2106 = vunpack.c.l.b16 %v288
    %v2107 = vunpack.c.h.b16 %v288
    %v2108 = vunpack.c.l.b16 %v289
    %v2109 = vunpack.c.h.b16 %v289
    %v2110 = vunpack.c.l.b16 %v290
    %v2111 = vunpack.c.h.b16 %v290
    %v2112 = vunpack.c.l.b16 %v291
    %v2113 = vunpack.c.h.b16 %v291
    %v2114 = vunpack.c.l.b16 %v292
    %v2115 = vunpack.c.h.b16 %v292
    %v2116 = vunpack.c.l.b16 %v293
    %v2117 = vunpack.c.h.b16 %v293
    %v2118 = vunpack.c.l.b16 %v294
    %v2119 = vunpack.c.h.b16 %v294
    %v2120 = vunpack.c.l.b16 %v295
    %v2121 = vunpack.c.h.b16 %v295
    %v2122 = vunpack.c.l.b16 %v296
    %v2123 = vunpack.c.h.b16 %v296
    %v2124 = vunpack.c.l.b16 %v297
    %v2125 = vunpack.c.h.b16 %v297
    %v2126 = vunpack.c.l.b16 %v298
    %v2127 = vunpack.c.h.b16 %v298
    %v2128 = vunpack.c.l.b16 %v299
    %v2129 = vunpack.c.h.b16 %v299
    %v2130 = vunpack.c.l.b16 %v300
    %v2131 = vunpack.c.h.b16 %v300
    %v2132 = vunpack.c.l.b16 %v301
    %v2133 = vunpack.c.h.b16 %v301
    %v2134 = vunpack.c.l.b16 %v302
    %v2135 = vunpack.c.h.b16 %v302
    %v2136 = vunpack.c.l.b16 %v303
    %v2137 = vunpack.c.h.b16 %v303
    %v2138 = vunpack.c.l.b16 %v304
    %v2139 = vunpack.c.h.b16 %v304
    %v2140 = vunpack.c.l.b16 %v305
    %v2141 = vunpack.c.h.b16 %v305
    %v2142 = vunpack.c.l.b16 %v306
    %v2143 = vunpack.c.h.b16 %v306
    %v2144 = vunpack.c.l.b16 %v307
    %v2145 = vunpack.c.h.b16 %v307
    %v2146 = vunpack.c.l.b16 %v308
    %v2147 = vunpack.c.h.b16 %v308
    %v2148 = vunpack.c.l.b16 %v309
    %v2149 = vunpack.c.h.b16 %v309
    %v2150 = vunpack.c.l.b16 %v310
    %v2151 = vunpack.c.h.b16 %v310
    %v2152 = vunpack.c.l.b16 %v311
    %v2153 = vunpack.c.h.b16 %v311
    %v2154 = vunpack.c.l.b16 %v312
    %v2155 = vunpack.c.h.b16 %v312
    %v2156 = vunpack.c.l.b16 %v313
    %v2157 = vunpack.c.h.b16 %v313
    %v2158 = vunpack.c.l.b16 %v314
    %v2159 = vunpack.c.h.b16 %v314
    %v2160 = vunpack.c.l.b16 %v315
    %v2161 = vunpack.c.h.b16 %v315
    %v2162 = vunpack.c.l.b16 %v316
    %v2163 = vunpack.c.h.b16 %v316
    %v2164 = vunpack.c.l.b16 %v317
    %v2165 = vunpack.c.h.b16 %v317
    %v2166 = vunpack.c.l.b16 %v318
    %v2167 = vunpack.c.h.b16 %v318
    %v2168 = vunpack.c.l.b16 %v319
    %v2169 = vunpack.c.h.b16 %v319
    %v2170 = vunpack.c.l.b16 %v320
    %v2171 = vunpack.c.h.b16 %v320
    %v2172 = vunpack.c.l.b16 %v321
    %v2173 = vunpack.c.h.b16 %v321
    %v2174 = vunpack.c.l.b16 %v322
    %v2175 = vunpack.c.h.b16 %v322
    %v2176 = vunpack.c.l.b16 %v323
    %v2177 = vunpack.c.h.b16 %v323
    %v2178 = vunpack.c.l.b16 %v324
    %v2179 = vunpack.c.h.b16 %v324
    %v2180 = vunpack.c.l.b16 %v325
    %v2181 = vunpack.c.h.b16 %v325
    %v2182 = vunpack.c.l.b16 %v326
    %v2183 = vunpack.c.h.b16 %v326
    %v2184 = vunpack.c.l.b16 %v327
    %v2185 = vunpack.c.h.b16 %v327
    %v2186 = vunpack.c.l.b16 %v328
    %v2187 = vunpack.c.h.b16 %v328
    %v2188 = vunpack.c.l.b16 %v329
    %v2189 = vunpack.c.h.b16 %v329
    %v2190 = vunpack.c.l.b16 %v330
    %v2191 = vunpack.c.h.b16 %v330
    %v2192 = vunpack.c.l.b16 %v331
    %v2193 = vunpack.c.h.b16 %v331
    %v2194 = vunpack.c.l.b16 %v332
    %v2195 = vunpack.c.h.b16 %v332
    %v2196 = vunpack.c.l.b16 %v333
    %v2197 = vunpack.c.h.b16 %v333
    %v2198 = vunpack.c.l.b16 %v334
    %v2199 = vunpack.c.h.b16 %v334
    %v2200 = vunpack.c.l.b16 %v335
    %v2201 = vunpack.c.h.b16 %v335
    %v2202 = vunpack.c.l.b16 %v336
    %v2203 = vunpack.c.h.b16 %v336
    %v2204 = vunpack.c.l.b16 %v337
    %v2205 = vunpack.c.h.b16 %v337
    %v2206 = vunpack.c.l.b16 %v338
    %v2207 = vunpack.c.h.b16 %v338
    %v2208 = vunpack.c.l.b16 %v339
    %v2209 = vunpack.c.h.b16 %v339
    %v2210 = vunpack.c.l.b16 %v340
    %v2211 = vunpack.c.h.b16 %v340
    %v2212 = vunpack.c.l.b16 %v341
    %v2213 = vunpack.c.h.b16 %v341
    %v2214 = vunpack.c.l.b16 %v342
    %v2215 = vunpack.c.h.b16 %v342
    %v2216 = vunpack.c.l.b16 %v343
    %v2217 = vunpack.c.h.b16 %v343
    %v2218 = vunpack.c.l.b16 %v344
    %v2219 = vunpack.c.h.b16 %v344
    %v2220 = vunpack.c.l.b16 %v345
    %v2221 = vunpack.c.h.b16 %v345
    %v2222 = vunpack.c.l.b16 %v346
    %v2223 = vunpack.c.h.b16 %v346
    %v2224 = vunpack.c.l.b16 %v347
    %v2225 = vunpack.c.h.b16 %v347
    %v2226 = vunpack.c.l.b16 %v348
    %v2227 = vunpack.c.h.b16 %v348
    %v2228 = vunpack.c.l.b16 %v349
    %v2229 = vunpack.c.h.b16 %v349
    %v2230 = vunpack.c.l.b16 %v350
    %v2231 = vunpack.c.h.b16 %v350
    %v2232 = vunpack.c.l.b16 %v351
    %v2233 = vunpack.c.h.b16 %v351
    %v2234 = vunpack.c.l.b16 %v352
    %v2235 = vunpack.c.h.b16 %v352
    %v2236 = vunpack.c.l.b16 %v353
    %v2237 = vunpack.c.h.b16 %v353
    %v2238 = vunpack.c.l.b16 %v354
    %v2239 = vunpack.c.h.b16 %v354
    %v2240 = vunpack.c.l.b16 %v355
    %v2241 = vunpack.c.h.b16 %v355
    %v2242 = vunpack.c.l.b16 %v356
    %v2243 = vunpack.c.h.b16 %v356
    %v2244 = vunpack.c.l.b16 %v357
    %v2245 = vunpack.c.h.b16 %v357
    %v2246 = vunpack.c.l.b16 %v358
    %v2247 = vunpack.c.h.b16 %v358
    %v2248 = vunpack.c.l.b16 %v359
    %v2249 = vunpack.c.h.b16 %v359
    %v2250 = vunpack.c.l.b16 %v360
    %v2251 = vunpack.c.h.b16 %v360
    %v2252 = vunpack.c.l.b16 %v361
    %v2253 = vunpack.c.h.b16 %v361
    %v2254 = vunpack.c.l.b16 %v362
    %v2255 = vunpack.c.h.b16 %v362
    %v2256 = vunpack.c.l.b16 %v363
    %v2257 = vunpack.c.h.b16 %v363
    %v2258 = vunpack.c.l.b16 %v364
    %v2259 = vunpack.c.h.b16 %v364
    %v2260 = vunpack.c.l.b16 %v365
    %v2261 = vunpack.c.h.b16 %v365
    %v2262 = vunpack.c.l.b16 %v366
    %v2263 = vunpack.c.h.b16 %v366
    %v2264 = vunpack.c.l.b16 %v367
    %v2265 = vunpack.c.h.b16 %v367
    %v2266 = vunpack.c.l.b16 %v368
    %v2267 = vunpack.c.h.b16 %v368
    %v2268 = vunpack.c.l.b16 %v369
    %v2269 = vunpack.c.h.b16 %v369
    %v2270 = vunpack.c.l.b16 %v370
    %v2271 = vunpack.c.h.b16 %v370
    %v2272 = vunpack.c.l.b16 %v371
    %v2273 = vunpack.c.h.b16 %v371
    %v2274 = vunpack.c.l.b16 %v372
    %v2275 = vunpack.c.h.b16 %v372
    %v2276 = vunpack.c.l.b16 %v373
    %v2277 = vunpack.c.h.b16 %v373
    %v2278 = vunpack.c.l.b16 %v374
    %v2279 = vunpack.c.h.b16 %v374
    %v2280 = vunpack.c.l.b16 %v375
    %v2281 = vunpack.c.h.b16 %v375
    %v2282 = vunpack.c.l.b16 %v376
    %v2283 = vunpack.c.h.b16 %v376
    %v2284 = vunpack.c.l.b16 %v377
    %v2285 = vunpack.c.h.b16 %v377
    %v2286 = vunpack.c.l.b16 %v378
    %v2287 = vunpack.c.h.b16 %v378
    %v2288 = vunpack.c.l.b16 %v379
    %v2289 = vunpack.c.h.b16 %v379
    %v2290 = vunpack.c.l.b16 %v380
    %v2291 = vunpack.c.h.b16 %v380
    %v2292 = vunpack.c.l.b16 %v381
    %v2293 = vunpack.c.h.b16 %v381
    %v2294 = vunpack.c.l.b16 %v382
    %v2295 = vunpack.c.h.b16 %v382
    %v2296 = vunpack.c.l.b16 %v383
    %v2297 = vunpack.c.h.b16 %v383
    %v2298 = vunpack.c.l.b16 %v384
    %v2299 = vunpack.c.h.b16 %v384
    %v2300 = vunpack.c.l.b16 %v385
    %v2301 = vunpack.c.h.b16 %v385
    %v2302 = vunpack.c.l.b16 %v386
    %v2303 = vunpack.c.h.b16 %v386
    %v2304 = vunpack.c.l.b16 %v387
    %v2305 = vunpack.c.h.b16 %v387
    %v2306 = vunpack.c.l.b16 %v388
    %v2307 = vunpack.c.h.b16 %v388
    %v2308 = vunpack.c.l.b16 %v389
    %v2309 = vunpack.c.h.b16 %v389
    %v2310 = vunpack.c.l.b16 %v390
    %v2311 = vunpack.c.h.b16 %v390
    %v2312 = vunpack.c.l.b16 %v391
    %v2313 = vunpack.c.h.b16 %v391
    %v2314 = vunpack.c.l.b16 %v392
    %v2315 = vunpack.c.h.b16 %v392
    %v2316 = vunpack.c.l.b16 %v393
    %v2317 = vunpack.c.h.b16 %v393
    %v2318 = vunpack.c.l.b16 %v394
    %v2319 = vunpack.c.h.b16 %v394
    %v2320 = vunpack.c.l.b16 %v395
    %v2321 = vunpack.c.h.b16 %v395
    %v2322 = vunpack.c.l.b16 %v396
    %v2323 = vunpack.c.h.b16 %v396
    %v2324 = vunpack.c.l.b16 %v397
    %v2325 = vunpack.c.h.b16 %v397
    %v2326 = vunpack.c.l.b16 %v398
    %v2327 = vunpack.c.h.b16 %v398
    %v2328 = vunpack.c.l.b16 %v399
    %v2329 = vunpack.c.h.b16 %v399
    %v2330 = vunpack.c.l.b16 %v400
    %v2331 = vunpack.c.h.b16 %v400
    %v2332 = vunpack.c.l.b16 %v401
    %v2333 = vunpack.c.h.b16 %v401
    %v2334 = vunpack.c.l.b16 %v402
    %v2335 = vunpack.c.h.b16 %v402
    %v2336 = vunpack.c.l.b16 %v403
    %v2337 = vunpack.c.h.b16 %v403
    %v2338 = vunpack.c.l.b16 %v404
    %v2339 = vunpack.c.h.b16 %v404
    %v2340 = vunpack.c.l.b16 %v405
    %v2341 = vunpack.c.h.b16 %v405
    %v2342 = vunpack.c.l.b16 %v406
    %v2343 = vunpack.c.h.b16 %v406
    %v2344 = vunpack.c.l.b16 %v407
    %v2345 = vunpack.c.h.b16 %v407
    %v2346 = vunpack.c.l.b16 %v408
    %v2347 = vunpack.c.h.b16 %v408
    %v2348 = vunpack.c.l.b16 %v409
    %v2349 = vunpack.c.h.b16 %v409
    %v2350 = vunpack.c.l.b16 %v410
    %v2351 = vunpack.c.h.b16 %v410
    %v2352 = vunpack.c.l.b16 %v411
    %v2353 = vunpack.c.h.b16 %v411
    %v2354 = vunpack.c.l.b16 %v412
    %v2355 = vunpack.c.h.b16 %v412
    %v2356 = vunpack.c.l.b16 %v413
    %v2357 = vunpack.c.h.b16 %v413
    %v2358 = vunpack.c.l.b16 %v414
    %v2359 = vunpack.c.h.b16 %v414
    %v2360 = vunpack.c.l.b16 %v415
    %v2361 = vunpack.c.h.b16 %v415
    %v2362 = vunpack.c.l.b16 %v416
    %v2363 = vunpack.c.h.b16 %v416
    %v2364 = vunpack.c.l.b16 %v417
    %v2365 = vunpack.c.h.b16 %v417
    %v2366 = vunpack.c.l.b16 %v418
    %v2367 = vunpack.c.h.b16 %v418
    %v2368 = vunpack.c.l.b16 %v419
    %v2369 = vunpack.c.h.b16 %v419
    %v2370 = vunpack.c.l.b16 %v420
    %v2371 = vunpack.c.h.b16 %v420
    %v2372 = vunpack.c.l.b16 %v421
    %v2373 = vunpack.c.h.b16 %v421
    %v2374 = vunpack.c.l.b16 %v422
    %v2375 = vunpack.c.h.b16 %v422
    %v2376 = vunpack.c.l.b16 %v423
    %v2377 = vunpack.c.h.b16 %v423
    %v2378 = vunpack.c.l.b16 %v424
    %v2379 = vunpack.c.h.b16 %v424
    %v2380 = vunpack.c.l.b16 %v425
    %v2381 = vunpack.c.h.b16 %v425
    %v2382 = vunpack.c.l.b16 %v426
    %v2383 = vunpack.c.h.b16 %v426
    %v2384 = vunpack.c.l.b16 %v427
    %v2385 = vunpack.c.h.b16 %v427
    %v2386 = vunpack.c.l.b16 %v428
    %v2387 = vunpack.c.h.b16 %v428
    %v2388 = vunpack.c.l.b16 %v429
    %v2389 = vunpack.c.h.b16 %v429
    %v2390 = vunpack.c.l.b16 %v430
    %v2391 = vunpack.c.h.b16 %v430
    %v2392 = vunpack.c.l.b16 %v431
    %v2393 = vunpack.c.h.b16 %v431
    %v2394 = vunpack.c.l.b16 %v432
    %v2395 = vunpack.c.h.b16 %v432
    %v2396 = vunpack.c.l.b16 %v433
    %v2397 = vunpack.c.h.b16 %v433
    %v2398 = vunpack.c.l.b16 %v434
    %v2399 = vunpack.c.h.b16 %v434
    %v2400 = vunpack.c.l.b16 %v435
    %v2401 = vunpack.c.h.b16 %v435
    %v2402 = vunpack.c.l.b16 %v436
    %v2403 = vunpack.c.h.b16 %v436
    %v2404 = vunpack.c.l.b16 %v437
    %v2405 = vunpack.c.h.b16 %v437
    %v2406 = vunpack.c.l.b16 %v438
    %v2407 = vunpack.c.h.b16 %v438
    %v2408 = vunpack.c.l.b16 %v439
    %v2409 = vunpack.c.h.b16 %v439
    %v2410 = vunpack.c.l.b16 %v440
    %v2411 = vunpack.c.h.b16 %v440
    %v2412 = vunpack.c.l.b16 %v441
    %v2413 = vunpack.c.h.b16 %v441
    %v2414 = vunpack.c.l.b16 %v442
    %v2415 = vunpack.c.h.b16 %v442
    %v2416 = vunpack.c.l.b16 %v443
    %v2417 = vunpack.c.h.b16 %v443
    %v2418 = vunpack.c.l.b16 %v444
    %v2419 = vunpack.c.h.b16 %v444
    %v2420 = vunpack.c.l.b16 %v445
    %v2421 = vunpack.c.h.b16 %v445
    %v2422 = vunpack.c.l.b16 %v446
    %v2423 = vunpack.c.h.b16 %v446
    %v2424 = vunpack.c.l.b16 %v447
    %v2425 = vunpack.c.h.b16 %v447
    %v2426 = vunpack.c.l.b16 %v448
    %v2427 = vunpack.c.h.b16 %v448
    %v2428 = vunpack.c.l.b16 %v449
    %v2429 = vunpack.c.h.b16 %v449
    %v2430 = vunpack.c.l.b16 %v450
    %v2431 = vunpack.c.h.b16 %v450
    %v2432 = vunpack.c.l.b16 %v451
    %v2433 = vunpack.c.h.b16 %v451
    %v2434 = vunpack.c.l.b16 %v452
    %v2435 = vunpack.c.h.b16 %v452
    %v2436 = vunpack.c.l.b16 %v453
    %v2437 = vunpack.c.h.b16 %v453
    %v2438 = vunpack.c.l.b16 %v454
    %v2439 = vunpack.c.h.b16 %v454
    %v2440 = vunpack.c.l.b16 %v455
    %v2441 = vunpack.c.h.b16 %v455
    %v2442 = vunpack.c.l.b16 %v456
    %v2443 = vunpack.c.h.b16 %v456
    %v2444 = vunpack.c.l.b16 %v457
    %v2445 = vunpack.c.h.b16 %v457
    %v2446 = vunpack.c.l.b16 %v458
    %v2447 = vunpack.c.h.b16 %v458
    %v2448 = vunpack.c.l.b16 %v459
    %v2449 = vunpack.c.h.b16 %v459
    %v2450 = vunpack.c.l.b16 %v460
    %v2451 = vunpack.c.h.b16 %v460
    %v2452 = vunpack.c.l.b16 %v461
    %v2453 = vunpack.c.h.b16 %v461
    %v2454 = vunpack.c.l.b16 %v462
    %v2455 = vunpack.c.h.b16 %v462
    %v2456 = vunpack.c.l.b16 %v463
    %v2457 = vunpack.c.h.b16 %v463
    %v2458 = vunpack.c.l.b16 %v464
    %v2459 = vunpack.c.h.b16 %v464
    %v2460 = vunpack.c.l.b16 %v465
    %v2461 = vunpack.c.h.b16 %v465
    %v2462 = vunpack.c.l.b16 %v466
    %v2463 = vunpack.c.h.b16 %v466
    %v2464 = vunpack.c.l.b16 %v467
    %v2465 = vunpack.c.h.b16 %v467
    %v2466 = vunpack.c.l.b16 %v468
    %v2467 = vunpack.c.h.b16 %v468
    %v2468 = vunpack.c.l.b16 %v469
    %v2469 = vunpack.c.h.b16 %v469
    %v2470 = vunpack.c.l.b16 %v470
    %v2471 = vunpack.c.h.b16 %v470
    %v2472 = vunpack.c.l.b16 %v471
    %v2473 = vunpack.c.h.b16 %v471
    %v2474 = vunpack.c.l.b16 %v472
    %v2475 = vunpack.c.h.b16 %v472
    %v2476 = vunpack.c.l.b16 %v473
    %v2477 = vunpack.c.h.b16 %v473
    %v2478 = vunpack.c.l.b16 %v474
    %v2479 = vunpack.c.h.b16 %v474
    %v2480 = vunpack.c.l.b16 %v475
    %v2481 = vunpack.c.h.b16 %v475
    %v2482 = vunpack.c.l.b16 %v476
    %v2483 = vunpack.c.h.b16 %v476
    %v2484 = vunpack.c.l.b16 %v477
    %v2485 = vunpack.c.h.b16 %v477
    %v2486 = vunpack.c.l.b16 %v478
    %v2487 = vunpack.c.h.b16 %v478
    %v2488 = vunpack.c.l.b16 %v479
    %v2489 = vunpack.c.h.b16 %v479
    %v2490 = vunpack.c.l.b16 %v480
    %v2491 = vunpack.c.h.b16 %v480
    %v2492 = vunpack.c.l.b16 %v481
    %v2493 = vunpack.c.h.b16 %v481
    %v2494 = vunpack.c.l.b16 %v482
    %v2495 = vunpack.c.h.b16 %v482
    %v2496 = vunpack.c.l.b16 %v483
    %v2497 = vunpack.c.h.b16 %v483
    %v2498 = vunpack.c.l.b16 %v484
    %v2499 = vunpack.c.h.b16 %v484
    %v2500 = vunpack.c.l.b16 %v485
    %v2501 = vunpack.c.h.b16 %v485
    %v2502 = vunpack.c.l.b16 %v486
    %v2503 = vunpack.c.h.b16 %v486
    %v2504 = vunpack.c.l.b16 %v487
    %v2505 = vunpack.c.h.b16 %v487
    %v2506 = vunpack.c.l.b16 %v488
    %v2507 = vunpack.c.h.b16 %v488
    %v2508 = vunpack.c.l.b16 %v489
    %v2509 = vunpack.c.h.b16 %v489
    %v2510 = vunpack.c.l.b16 %v490
    %v2511 = vunpack.c.h.b16 %v490
    %v2512 = vunpack.c.l.b16 %v491
    %v2513 = vunpack.c.h.b16 %v491
    %v2514 = vunpack.c.l.b16 %v492
    %v2515 = vunpack.c.h.b16 %v492
    %v2516 = vunpack.c.l.b16 %v493
    %v2517 = vunpack.c.h.b16 %v493
    %v2518 = vunpack.c.l.b16 %v494
    %v2519 = vunpack.c.h.b16 %v494
    %v2520 = vunpack.c.l.b16 %v495
    %v2521 = vunpack.c.h.b16 %v495
    %v2522 = vunpack.c.l.b16 %v496
    %v2523 = vunpack.c.h.b16 %v496
    %v2524 = vunpack.c.l.b16 %v497
    %v2525 = vunpack.c.h.b16 %v497
    %v2526 = vunpack.c.l.b16 %v498
    %v2527 = vunpack.c.h.b16 %v498
    %v2528 = vunpack.c.l.b16 %v499
    %v2529 = vunpack.c.h.b16 %v499
    %v2530 = vunpack.c.l.b16 %v500
    %v2531 = vunpack.c.h.b16 %v500
    %v2532 = vunpack.c.l.b16 %v501
    %v2533 = vunpack.c.h.b16 %v501
    %v2534 = vunpack.c.l.b16 %v502
    %v2535 = vunpack.c.h.b16 %v502
    %v2536 = vunpack.c.l.b16 %v503
    %v2537 = vunpack.c.h.b16 %v503
    %v2538 = vunpack.c.l.b16 %v504
    %v2539 = vunpack.c.h.b16 %v504
    %v2540 = vunpack.c.l.b16 %v505
    %v2541 = vunpack.c.h.b16 %v505
    %v2542 = vunpack.c.l.b16 %v506
    %v2543 = vunpack.c.h.b16 %v506
    %v2544 = vunpack.c.l.b16 %v507
    %v2545 = vunpack.c.h.b16 %v507
    %v2546 = vunpack.c.l.b16 %v508
    %v2547 = vunpack.c.h.b16 %v508
    %v2548 = vunpack.c.l.b16 %v509
    %v2549 = vunpack.c.h.b16 %v509
    %v2550 = vunpack.c.l.b16 %v510
    %v2551 = vunpack.c.h.b16 %v510
    %v2552 = vunpack.c.l.b16 %v511
    %v2553 = vunpack.c.h.b16 %v511
    %v2554 = vunpack.c.l.b16 %v512
    %v2555 = vunpack.c.h.b16 %v512
    %v2556 = vunpack.c.l.b16 %v513
    %v2557 = vunpack.c.h.b16 %v513
    %v2558 = vunpack.c.l.b16 %v514
    %v2559 = vunpack.c.h.b16 %v514
    %v2560 = vunpack.c.l.b16 %v515
    %v2561 = vunpack.c.h.b16 %v515
    %v2562 = vunpack.c.l.b16 %v516
    %v2563 = vunpack.c.h.b16 %v516
    %v2564 = vunpack.c.l.b16 %v517
    %v2565 = vunpack.c.h.b16 %v517
    %v2566 = vunpack.c.l.b16 %v518
    %v2567 = vunpack.c.h.b16 %v518
    %v2568 = vunpack.c.l.b16 %v519
    %v2569 = vunpack.c.h.b16 %v519
    %v2570 = vunpack.c.l.b16 %v520
    %v2571 = vunpack.c.h.b16 %v520
    %v2572 = vunpack.c.l.b16 %v521
    %v2573 = vunpack.c.h.b16 %v521
    %v2574 = vunpack.c.l.b16 %v522
    %v2575 = vunpack.c.h.b16 %v522
    %v2576 = vunpack.c.l.b16 %v523
    %v2577 = vunpack.c.h.b16 %v523
    %v2578 = vunpack.c.l.b16 %v524
    %v2579 = vunpack.c.h.b16 %v524
    %v2580 = vunpack.c.l.b16 %v525
    %v2581 = vunpack.c.h.b16 %v525
    %v2582 = vunpack.c.l.b16 %v526
    %v2583 = vunpack.c.h.b16 %v526
    %v2584 = vunpack.c.l.b16 %v527
    %v2585 = vunpack.c.h.b16 %v527
    %v2586 = vunpack.c.l.b16 %v528
    %v2587 = vunpack.c.h.b16 %v528
    %v2588 = vunpack.c.l.b16 %v529
    %v2589 = vunpack.c.h.b16 %v529
    %v2590 = vunpack.c.l.b16 %v530
    %v2591 = vunpack.c.h.b16 %v530
    %v2592 = vunpack.c.l.b16 %v531
    %v2593 = vunpack.c.h.b16 %v531
    %v2594 = vunpack.c.l.b16 %v532
    %v2595 = vunpack.c.h.b16 %v532
    %v2596 = vunpack.c.l.b16 %v533
    %v2597 = vunpack.c.h.b16 %v533
    %v2598 = vunpack.c.l.b16 %v534
    %v2599 = vunpack.c.h.b16 %v534
    %v2600 = vunpack.c.l.b16 %v535
    %v2601 = vunpack.c.h.b16 %v535
    %v2602 = vunpack.c.l.b16 %v536
    %v2603 = vunpack.c.h.b16 %v536
    %v2604 = vunpack.c.l.b16 %v537
    %v2605 = vunpack.c.h.b16 %v537
    %v2606 = vunpack.c.l.b16 %v538
    %v2607 = vunpack.c.h.b16 %v538
    %v2608 = vunpack.c.l.b16 %v539
    %v2609 = vunpack.c.h.b16 %v539
    %v2610 = vunpack.c.l.b16 %v540
    %v2611 = vunpack.c.h.b16 %v540
    %v2612 = vunpack.c.l.b16 %v541
    %v2613 = vunpack.c.h.b16 %v541
    %v2614 = vunpack.c.l.b16 %v542
    %v2615 = vunpack.c.h.b16 %v542
    %v2616 = vunpack.c.l.b16 %v543
    %v2617 = vunpack.c.h.b16 %v543
    %v2618 = vunpack.c.l.b16 %v544
    %v2619 = vunpack.c.h.b16 %v544
    %v2620 = vunpack.c.l.b16 %v545
    %v2621 = vunpack.c.h.b16 %v545
    %v2622 = vunpack.c.l.b16 %v546
    %v2623 = vunpack.c.h.b16 %v546
    %v2624 = vunpack.c.l.b16 %v547
    %v2625 = vunpack.c.h.b16 %v547
    %v2626 = vunpack.c.l.b16 %v548
    %v2627 = vunpack.c.h.b16 %v548
    %v2628 = vunpack.c.l.b16 %v549
    %v2629 = vunpack.c.h.b16 %v549
    %v2630 = vunpack.c.l.b16 %v550
    %v2631 = vunpack.c.h.b16 %v550
    %v2632 = vunpack.c.l.b16 %v551
    %v2633 = vunpack.c.h.b16 %v551
    %v2634 = vunpack.c.l.b16 %v552
    %v2635 = vunpack.c.h.b16 %v552
    %v2636 = vunpack.c.l.b16 %v553
    %v2637 = vunpack.c.h.b16 %v553
    %v2638 = vunpack.c.l.b16 %v554
    %v2639 = vunpack.c.h.b16 %v554
    %v2640 = vunpack.c.l.b16 %v555
    %v2641 = vunpack.c.h.b16 %v555
    %v2642 = vunpack.c.l.b16 %v556
    %v2643 = vunpack.c.h.b16 %v556
    %v2644 = vunpack.c.l.b16 %v557
    %v2645 = vunpack.c.h.b16 %v557
    %v2646 = vunpack.c.l.b16 %v558
    %v2647 = vunpack.c.h.b16 %v558
    %v2648 = vunpack.c.l.b16 %v559
    %v2649 = vunpack.c.h.b16 %v559
    %v2650 = vunpack.c.l.b16 %v560
    %v2651 = vunpack.c.h.b16 %v560
    %v2652 = vunpack.c.l.b16 %v561
    %v2653 = vunpack.c.h.b16 %v561
    %v2654 = vunpack.c.l.b16 %v562
    %v2655 = vunpack.c.h.b16 %v562
    %v2656 = vunpack.c.l.b16 %v563
    %v2657 = vunpack.c.h.b16 %v563
    %v2658 = vunpack.c.l.b16 %v564
    %v2659 = vunpack.c.h.b16 %v564
    %v2660 = vunpack.c.l.b16 %v565
    %v2661 = vunpack.c.h.b16 %v565
    %v2662 = vunpack.c.l.b16 %v566
    %v2663 = vunpack.c.h.b16 %v566
    %v2664 = vunpack.c.l.b16 %v567
    %v2665 = vunpack.c.h.b16 %v567
    %v2666 = vunpack.c.l.b16 %v568
    %v2667 = vunpack.c.h.b16 %v568
    %v2668 = vunpack.c.l.b16 %v569
    %v2669 = vunpack.c.h.b16 %v569
    %v2670 = vunpack.c.l.b16 %v570
    %v2671 = vunpack.c.h.b16 %v570
    %v2672 = vunpack.c.l.b16 %v571
    %v2673 = vunpack.c.h.b16 %v571
    %v2674 = vunpack.c.l.b16 %v572
    %v2675 = vunpack.c.h.b16 %v572
    %v2676 = vunpack.c.l.b16 %v573
    %v2677 = vunpack.c.h.b16 %v573
    %v2678 = vunpack.c.l.b16 %v574
    %v2679 = vunpack.c.h.b16 %v574
    %v2680 = vunpack.c.l.b16 %v575
    %v2681 = vunpack.c.h.b16 %v575
    %v2682 = vunpack.c.l.b16 %v576
    %v2683 = vunpack.c.h.b16 %v576
    %v2684 = vunpack.c.l.b16 %v577
    %v2685 = vunpack.c.h.b16 %v577
    %v2686 = vunpack.c.l.b16 %v578
    %v2687 = vunpack.c.h.b16 %v578
    %v2688 = vunpack.c.l.b16 %v579
    %v2689 = vunpack.c.h.b16 %v579
    %v2690 = vunpack.c.l.b16 %v580
    %v2691 = vunpack.c.h.b16 %v580
    %v2692 = vunpack.c.l.b16 %v581
    %v2693 = vunpack.c.h.b16 %v581
    %v2694 = vunpack.c.l.b16 %v582
    %v2695 = vunpack.c.h.b16 %v582
    %v2696 = vunpack.c.l.b16 %v583
    %v2697 = vunpack.c.h.b16 %v583
    %v2698 = vunpack.c.l.b16 %v584
    %v2699 = vunpack.c.h.b16 %v584
    %v2700 = vunpack.c.l.b16 %v585
    %v2701 = vunpack.c.h.b16 %v585
    %v2702 = vunpack.c.l.b16 %v586
    %v2703 = vunpack.c.h.b16 %v586
    %v2704 = vunpack.c.l.b16 %v587
    %v2705 = vunpack.c.h.b16 %v587
    %v2706 = vunpack.c.l.b16 %v588
    %v2707 = vunpack.c.h.b16 %v588
    %v2708 = vunpack.c.l.b16 %v589
    %v2709 = vunpack.c.h.b16 %v589
    %v2710 = vunpack.c.l.b16 %v590
    %v2711 = vunpack.c.h.b16 %v590
    %v2712 = vunpack.c.l.b16 %v591
    %v2713 = vunpack.c.h.b16 %v591
    %v2714 = vunpack.c.l.b16 %v592
    %v2715 = vunpack.c.h.b16 %v592
    %v2716 = vunpack.c.l.b16 %v593
    %v2717 = vunpack.c.h.b16 %v593
    %v2718 = vunpack.c.l.b16 %v594
    %v2719 = vunpack.c.h.b16 %v594
    %v2720 = vunpack.c.l.b16 %v595
    %v2721 = vunpack.c.h.b16 %v595
    %v2722 = vunpack.c.l.b16 %v596
    %v2723 = vunpack.c.h.b16 %v596
    %v2724 = vunpack.c.l.b16 %v597
    %v2725 = vunpack.c.h.b16 %v597
    %v2726 = vunpack.c.l.b16 %v598
    %v2727 = vunpack.c.h.b16 %v598
    %v2728 = vunpack.c.l.b16 %v599
    %v2729 = vunpack.c.h.b16 %v599
    %v2730 = vunpack.c.l.b16 %v600
    %v2731 = vunpack.c.h.b16 %v600
    %v2732 = vunpack.c.l.b16 %v601
    %v2733 = vunpack.c.h.b16 %v601
    %v2734 = vunpack.c.l.b16 %v602
    %v2735 = vunpack.c.h.b16 %v602
    %v2736 = vunpack.c.l.b16 %v603
    %v2737 = vunpack.c.h.b16 %v603
    %v2738 = vunpack.c.l.b16 %v604
    %v2739 = vunpack.c.h.b16 %v604
    %v2740 = vunpack.c.l.b16 %v605
    %v2741 = vunpack.c.h.b16 %v605
    %v2742 = vunpack.c.l.b16 %v606
    %v2743 = vunpack.c.h.b16 %v606
    %v2744 = vunpack.c.l.b16 %v607
    %v2745 = vunpack.c.h.b16 %v607
    %v2746 = vunpack.c.l.b16 %v608
    %v2747 = vunpack.c.h.b16 %v608
    %v2748 = vunpack.c.l.b16 %v609
    %v2749 = vunpack.c.h.b16 %v609
    %v2750 = vunpack.c.l.b16 %v610
    %v2751 = vunpack.c.h.b16 %v610
    %v2752 = vunpack.c.l.b16 %v611
    %v2753 = vunpack.c.h.b16 %v611
    %v2754 = vunpack.c.l.b16 %v612
    %v2755 = vunpack.c.h.b16 %v612
    %v2756 = vunpack.c.l.b16 %v613
    %v2757 = vunpack.c.h.b16 %v613
    %v2758 = vunpack.c.l.b16 %v614
    %v2759 = vunpack.c.h.b16 %v614
    %v2760 = vunpack.c.l.b16 %v615
    %v2761 = vunpack.c.h.b16 %v615
    %v2762 = vunpack.c.l.b16 %v616
    %v2763 = vunpack.c.h.b16 %v616
    %v2764 = vunpack.c.l.b16 %v617
    %v2765 = vunpack.c.h.b16 %v617
    %v2766 = vunpack.c.l.b16 %v618
    %v2767 = vunpack.c.h.b16 %v618
    %v2768 = vunpack.c.l.b16 %v619
    %v2769 = vunpack.c.h.b16 %v619
    %v2770 = vunpack.c.l.b16 %v620
    %v2771 = vunpack.c.h.b16 %v620
    %v2772 = vunpack.c.l.b16 %v621
    %v2773 = vunpack.c.h.b16 %v621
    %v2774 = vunpack.c.l.b16 %v622
    %v2775 = vunpack.c.h.b16 %v622
    %v2776 = vunpack.c.l.b16 %v623
    %v2777 = vunpack.c.h.b16 %v623
    %v2778 = vunpack.c.l.b16 %v624
    %v2779 = vunpack.c.h.b16 %v624
    %v2780 = vunpack.c.l.b16 %v625
    %v2781 = vunpack.c.h.b16 %v625
    %v2782 = vunpack.c.l.b16 %v626
    %v2783 = vunpack.c.h.b16 %v626
    %v2784 = vunpack.c.l.b16 %v627
    %v2785 = vunpack.c.h.b16 %v627
    %v2786 = vunpack.c.l.b16 %v628
    %v2787 = vunpack.c.h.b16 %v628
    %v2788 = vunpack.c.l.b16 %v629
    %v2789 = vunpack.c.h.b16 %v629
    %v2790 = vunpack.c.l.b16 %v630
    %v2791 = vunpack.c.h.b16 %v630
    %v2792 = vunpack.c.l.b16 %v631
    %v2793 = vunpack.c.h.b16 %v631
    %v2794 = vunpack.c.l.b16 %v632
    %v2795 = vunpack.c.h.b16 %v632
    %v2796 = vunpack.c.l.b16 %v633
    %v2797 = vunpack.c.h.b16 %v633
    %v2798 = vunpack.c.l.b16 %v634
    %v2799 = vunpack.c.h.b16 %v634
    %v2800 = vunpack.c.l.b16 %v635
    %v2801 = vunpack.c.h.b16 %v635
    %v2802 = vunpack.c.l.b16 %v636
    %v2803 = vunpack.c.h.b16 %v636
    %v2804 = vunpack.c.l.b16 %v637
    %v2805 = vunpack.c.h.b16 %v637
    %v2806 = vunpack.c.l.b16 %v638
    %v2807 = vunpack.c.h.b16 %v638
    %v2808 = vunpack.c.l.b16 %v639
    %v2809 = vunpack.c.h.b16 %v639
    %v2810 = vunpack.c.l.b16 %v640
    %v2811 = vunpack.c.h.b16 %v640
    %v2812 = vunpack.c.l.b16 %v641
    %v2813 = vunpack.c.h.b16 %v641
    %v2814 = vunpack.c.l.b16 %v642
    %v2815 = vunpack.c.h.b16 %v642
    %v2816 = vunpack.c.l.b16 %v643
    %v2817 = vunpack.c.h.b16 %v643
    %v2818 = vunpack.c.l.b16 %v644
    %v2819 = vunpack.c.h.b16 %v644
    %v2820 = vunpack.c.l.b16 %v645
    %v2821 = vunpack.c.h.b16 %v645
    %v2822 = vunpack.c.l.b16 %v646
    %v2823 = vunpack.c.h.b16 %v646
    %v2824 = vunpack.c.l.b16 %v647
    %v2825 = vunpack.c.h.b16 %v647
    %v2826 = vunpack.c.l.b16 %v648
    %v2827 = vunpack.c.h.b16 %v648
    %v2828 = vunpack.c.l.b16 %v649
    %v2829 = vunpack.c.h.b16 %v649
    %v2830 = vunpack.c.l.b16 %v650
    %v2831 = vunpack.c.h.b16 %v650
    %v2832 = vunpack.c.l.b16 %v651
    %v2833 = vunpack.c.h.b16 %v651
    %v2834 = vunpack.c.l.b16 %v652
    %v2835 = vunpack.c.h.b16 %v652
    %v2836 = vunpack.c.l.b16 %v653
    %v2837 = vunpack.c.h.b16 %v653
    %v2838 = vunpack.c.l.b16 %v654
    %v2839 = vunpack.c.h.b16 %v654
    %v2840 = vunpack.c.l.b16 %v655
    %v2841 = vunpack.c.h.b16 %v655
    %v2842 = vunpack.c.l.b16 %v656
    %v2843 = vunpack.c.h.b16 %v656
    %v2844 = vunpack.c.l.b16 %v657
    %v2845 = vunpack.c.h.b16 %v657
    %v2846 = vunpack.c.l.b16 %v658
    %v2847 = vunpack.c.h.b16 %v658
    %v2848 = vunpack.c.l.b16 %v659
    %v2849 = vunpack.c.h.b16 %v659
    %v2850 = vunpack.c.l.b16 %v660
    %v2851 = vunpack.c.h.b16 %v660
    %v2852 = vunpack.c.l.b16 %v661
    %v2853 = vunpack.c.h.b16 %v661
    %v2854 = vunpack.c.l.b16 %v662
    %v2855 = vunpack.c.h.b16 %v662
    %v2856 = vunpack.c.l.b16 %v663
    %v2857 = vunpack.c.h.b16 %v663
    %v2858 = vunpack.c.l.b16 %v664
    %v2859 = vunpack.c.h.b16 %v664
    %v2860 = vunpack.c.l.b16 %v665
    %v2861 = vunpack.c.h.b16 %v665
    %v2862 = vunpack.c.l.b16 %v666
    %v2863 = vunpack.c.h.b16 %v666
    %v2864 = vunpack.c.l.b16 %v667
    %v2865 = vunpack.c.h.b16 %v667
    %v2866 = vunpack.c.l.b16 %v668
    %v2867 = vunpack.c.h.b16 %v668
    %v2868 = vunpack.c.l.b16 %v669
    %v2869 = vunpack.c.h.b16 %v669
    %v2870 = vunpack.c.l.b16 %v670
    %v2871 = vunpack.c.h.b16 %v670
    %v2872 = vunpack.c.l.b16 %v671
    %v2873 = vunpack.c.h.b16 %v671
    %v2874 = vunpack.c.l.b16 %v672
    %v2875 = vunpack.c.h.b16 %v672
    %v2876 = vunpack.c.l.b16 %v673
    %v2877 = vunpack.c.h.b16 %v673
    %v2878 = vunpack.c.l.b16 %v674
    %v2879 = vunpack.c.h.b16 %v674
    %v2880 = vunpack.c.l.b16 %v675
    %v2881 = vunpack.c.h.b16 %v675
    %v2882 = vunpack.c.l.b16 %v676
    %v2883 = vunpack.c.h.b16 %v676
    %v2884 = vunpack.c.l.b16 %v677
    %v2885 = vunpack.c.h.b16 %v677
    %v2886 = vunpack.c.l.b16 %v678
    %v2887 = vunpack.c.h.b16 %v678
    %v2888 = vunpack.c.l.b16 %v679
    %v2889 = vunpack.c.h.b16 %v679
    %v2890 = vunpack.c.l.b16 %v680
    %v2891 = vunpack.c.h.b16 %v680
    %v2892 = vunpack.c.l.b16 %v681
    %v2893 = vunpack.c.h.b16 %v681
    %v2894 = vunpack.c.l.b16 %v682
    %v2895 = vunpack.c.h.b16 %v682
    %v2896 = vunpack.c.l.b16 %v683
    %v2897 = vunpack.c.h.b16 %v683
    %v2898 = vunpack.c.l.b16 %v684
    %v2899 = vunpack.c.h.b16 %v684
    %v2900 = vunpack.c.l.b16 %v685
    %v2901 = vunpack.c.h.b16 %v685
    %v2902 = vunpack.c.l.b16 %v686
    %v2903 = vunpack.c.h.b16 %v686
    %v2904 = vunpack.c.l.b16 %v687
    %v2905 = vunpack.c.h.b16 %v687
    %v2906 = vunpack.c.l.b16 %v688
    %v2907 = vunpack.c.h.b16 %v688
    %v2908 = vunpack.c.l.b16 %v689
    %v2909 = vunpack.c.h.b16 %v689
    %v2910 = vunpack.c.l.b16 %v690
    %v2911 = vunpack.c.h.b16 %v690
    %v2912 = vunpack.c.l.b16 %v691
    %v2913 = vunpack.c.h.b16 %v691
    %v2914 = vunpack.c.l.b16 %v692
    %v2915 = vunpack.c.h.b16 %v692
    %v2916 = vunpack.c.l.b16 %v693
    %v2917 = vunpack.c.h.b16 %v693
    %v2918 = vunpack.c.l.b16 %v694
    %v2919 = vunpack.c.h.b16 %v694
    %v2920 = vunpack.c.l.b16 %v695
    %v2921 = vunpack.c.h.b16 %v695
    %v2922 = vunpack.c.l.b16 %v696
    %v2923 = vunpack.c.h.b16 %v696
    %v2924 = vunpack.c.l.b16 %v697
    %v2925 = vunpack.c.h.b16 %v697
    %v2926 = vunpack.c.l.b16 %v698
    %v2927 = vunpack.c.h.b16 %v698
    %v2928 = vunpack.c.l.b16 %v699
    %v2929 = vunpack.c.h.b16 %v699
    %v2930 = vunpack.c.l.b16 %v700
    %v2931 = vunpack.c.h.b16 %v700
    %v2932 = vunpack.c.l.b16 %v701
    %v2933 = vunpack.c.h.b16 %v701
    %v2934 = vunpack.c.l.b16 %v702
    %v2935 = vunpack.c.h.b16 %v702
    %v2936 = vunpack.c.l.b16 %v703
    %v2937 = vunpack.c.h.b16 %v703
    %v2938 = vunpack.c.l.b16 %v704
    %v2939 = vunpack.c.h.b16 %v704
    %v2940 = vunpack.c.l.b16 %v705
    %v2941 = vunpack.c.h.b16 %v705
    %v2942 = vunpack.c.l.b16 %v706
    %v2943 = vunpack.c.h.b16 %v706
    %v2944 = vunpack.c.l.b16 %v707
    %v2945 = vunpack.c.h.b16 %v707
    %v2946 = vunpack.c.l.b16 %v708
    %v2947 = vunpack.c.h.b16 %v708
    %v2948 = vunpack.c.l.b16 %v709
    %v2949 = vunpack.c.h.b16 %v709
    %v2950 = vunpack.c.l.b16 %v710
    %v2951 = vunpack.c.h.b16 %v710
    %v2952 = vunpack.c.l.b16 %v711
    %v2953 = vunpack.c.h.b16 %v711
    %v2954 = vunpack.c.l.b16 %v712
    %v2955 = vunpack.c.h.b16 %v712
    %v2956 = vunpack.c.l.b16 %v713
    %v2957 = vunpack.c.h.b16 %v713
    %v2958 = vunpack.c.l.b16 %v714
    %v2959 = vunpack.c.h.b16 %v714
    %v2960 = vunpack.c.l.b16 %v715
    %v2961 = vunpack.c.h.b16 %v715
    %v2962 = vunpack.c.l.b16 %v716
    %v2963 = vunpack.c.h.b16 %v716
    %v2964 = vunpack.c.l.b16 %v717
    %v2965 = vunpack.c.h.b16 %v717
    %v2966 = vunpack.c.l.b16 %v718
    %v2967 = vunpack.c.h.b16 %v718
    %v2968 = vunpack.c.l.b16 %v719
    %v2969 = vunpack.c.h.b16 %v719
    %v2970 = vunpack.c.l.b16 %v720
    %v2971 = vunpack.c.h.b16 %v720
    %v2972 = vunpack.c.l.b16 %v721
    %v2973 = vunpack.c.h.b16 %v721
    %v2974 = vunpack.c.l.b16 %v722
    %v2975 = vunpack.c.h.b16 %v722
    %v2976 = vunpack.c.l.b16 %v723
    %v2977 = vunpack.c.h.b16 %v723
    %v2978 = vunpack.c.l.b16 %v724
    %v2979 = vunpack.c.h.b16 %v724
    %v2980 = vunpack.c.l.b16 %v725
    %v2981 = vunpack.c.h.b16 %v725
    %v2982 = vunpack.c.l.b16 %v726
    %v2983 = vunpack.c.h.b16 %v726
    %v2984 = vunpack.c.l.b16 %v727
    %v2985 = vunpack.c.h.b16 %v727
    %v2986 = vunpack.c.l.b16 %v728
    %v2987 = vunpack.c.h.b16 %v728
    %v2988 = vunpack.c.l.b16 %v729
    %v2989 = vunpack.c.h.b16 %v729
    %v2990 = vunpack.c.l.b16 %v730
    %v2991 = vunpack.c.h.b16 %v730
    %v2992 = vunpack.c.l.b16 %v731
    %v2993 = vunpack.c.h.b16 %v731
    %v2994 = vunpack.c.l.b16 %v732
    %v2995 = vunpack.c.h.b16 %v732
    %v2996 = vunpack.c.l.b16 %v733
    %v2997 = vunpack.c.h.b16 %v733
    %v2998 = vunpack.c.l.b16 %v734
    %v2999 = vunpack.c.h.b16 %v734
    %v3000 = vunpack.c.l.b16 %v735
    %v3001 = vunpack.c.h.b16 %v735
    %v3002 = vunpack.c.l.b16 %v736
    %v3003 = vunpack.c.h.b16 %v736
    %v3004 = vunpack.c.l.b16 %v737
    %v3005 = vunpack.c.h.b16 %v737
    %v3006 = vunpack.c.l.b16 %v738
    %v3007 = vunpack.c.h.b16 %v738
    %v3008 = vunpack.c.l.b16 %v739
    %v3009 = vunpack.c.h.b16 %v739
    %v3010 = vunpack.c.l.b16 %v740
    %v3011 = vunpack.c.h.b16 %v740
    %v3012 = vunpack.c.l.b16 %v741
    %v3013 = vunpack.c.h.b16 %v741
    %v3014 = vunpack.c.l.b16 %v742
    %v3015 = vunpack.c.h.b16 %v742
    %v3016 = vunpack.c.l.b16 %v743
    %v3017 = vunpack.c.h.b16 %v743
    %v3018 = vunpack.c.l.b16 %v744
    %v3019 = vunpack.c.h.b16 %v744
    %v3020 = vunpack.c.l.b16 %v745
    %v3021 = vunpack.c.h.b16 %v745
    %v3022 = vunpack.c.l.b16 %v746
    %v3023 = vunpack.c.h.b16 %v746
    %v3024 = vunpack.c.l.b16 %v747
    %v3025 = vunpack.c.h.b16 %v747
    %v3026 = vunpack.c.l.b16 %v748
    %v3027 = vunpack.c.h.b16 %v748
    %v3028 = vunpack.c.l.b16 %v749
    %v3029 = vunpack.c.h.b16 %v749
    %v3030 = vunpack.c.l.b16 %v750
    %v3031 = vunpack.c.h.b16 %v750
    %v3032 = vunpack.c.l.b16 %v751
    %v3033 = vunpack.c.h.b16 %v751
    %v3034 = vunpack.c.l.b16 %v752
    %v3035 = vunpack.c.h.b16 %v752
    %v3036 = vunpack.c.l.b16 %v753
    %v3037 = vunpack.c.h.b16 %v753
    %v3038 = vunpack.c.l.b16 %v754
    %v3039 = vunpack.c.h.b16 %v754
    %v3040 = vunpack.c.l.b16 %v755
    %v3041 = vunpack.c.h.b16 %v755
    %v3042 = vunpack.c.l.b16 %v756
    %v3043 = vunpack.c.h.b16 %v756
    %v3044 = vunpack.c.l.b16 %v757
    %v3045 = vunpack.c.h.b16 %v757
    %v3046 = vunpack.c.l.b16 %v758
    %v3047 = vunpack.c.h.b16 %v758
    %v3048 = vunpack.c.l.b16 %v759
    %v3049 = vunpack.c.h.b16 %v759
    %v3050 = vunpack.c.l.b16 %v760
    %v3051 = vunpack.c.h.b16 %v760
    %v3052 = vunpack.c.l.b16 %v761
    %v3053 = vunpack.c.h.b16 %v761
    %v3054 = vunpack.c.l.b16 %v762
    %v3055 = vunpack.c.h.b16 %v762
    %v3056 = vunpack.c.l.b16 %v763
    %v3057 = vunpack.c.h.b16 %v763
    %v3058 = vunpack.c.l.b16 %v764
    %v3059 = vunpack.c.h.b16 %v764
    %v3060 = vunpack.c.l.b16 %v765
    %v3061 = vunpack.c.h.b16 %v765
    %v3062 = vunpack.c.l.b16 %v766
    %v3063 = vunpack.c.h.b16 %v766
    %v3064 = vunpack.c.l.b16 %v767
    %v3065 = vunpack.c.h.b16 %v767
    %v3066 = vunpack.c.l.b16 %v768
    %v3067 = vunpack.c.h.b16 %v768
    %v3068 = vunpack.c.l.b16 %v769
    %v3069 = vunpack.c.h.b16 %v769
    %v3070 = vunpack.c.l.b16 %v770
    %v3071 = vunpack.c.h.b16 %v770
    %v3072 = vunpack.c.l.b16 %v771
    %v3073 = vunpack.c.h.b16 %v771
    %v3074 = vunpack.c.l.b16 %v772
    %v3075 = vunpack.c.h.b16 %v772
    %v3076 = vunpack.c.l.b16 %v773
    %v3077 = vunpack.c.h.b16 %v773
    %v3078 = vunpack.c.l.b16 %v774
    %v3079 = vunpack.c.h.b16 %v774
    %v3080 = vunpack.c.l.b16 %v775
    %v3081 = vunpack.c.h.b16 %v775
    %v3082 = vunpack.c.l.b16 %v776
    %v3083 = vunpack.c.h.b16 %v776
    %v3084 = vunpack.c.l.b16 %v777
    %v3085 = vunpack.c.h.b16 %v777
    %v3086 = vunpack.c.l.b16 %v778
    %v3087 = vunpack.c.h.b16 %v778
    %v3088 = vunpack.c.l.b16 %v779
    %v3089 = vunpack.c.h.b16 %v779
    %v3090 = vunpack.c.l.b16 %v780
    %v3091 = vunpack.c.h.b16 %v780
    %v3092 = vunpack.c.l.b16 %v781
    %v3093 = vunpack.c.h.b16 %v781
    %v3094 = vunpack.c.l.b16 %v782
    %v3095 = vunpack.c.h.b16 %v782
    %v3096 = vunpack.c.l.b16 %v783
    %v3097 = vunpack.c.h.b16 %v783
    %v3098 = vunpack.c.l.b16 %v784
    %v3099 = vunpack.c.h.b16 %v784
    %v3100 = vunpack.c.l.b16 %v785
    %v3101 = vunpack.c.h.b16 %v785
    %v3102 = vunpack.c.l.b16 %v786
    %v3103 = vunpack.c.h.b16 %v786
    %v3104 = vunpack.c.l.b16 %v787
    %v3105 = vunpack.c.h.b16 %v787
    %v3106 = vunpack.c.l.b16 %v788
    %v3107 = vunpack.c.h.b16 %v788
    %v3108 = vunpack.c.l.b16 %v789
    %v3109 = vunpack.c.h.b16 %v789
    %v3110 = vunpack.c.l.b16 %v790
    %v3111 = vunpack.c.h.b16 %v790
    %v3112 = vunpack.c.l.b16 %v791
    %v3113 = vunpack.c.h.b16 %v791
    %v3114 = vunpack.c.l.b16 %v792
    %v3115 = vunpack.c.h.b16 %v792
    %v3116 = vunpack.c.l.b16 %v793
    %v3117 = vunpack.c.h.b16 %v793
    %v3118 = vunpack.c.l.b16 %v794
    %v3119 = vunpack.c.h.b16 %v794
    %v3120 = vunpack.c.l.b16 %v795
    %v3121 = vunpack.c.h.b16 %v795
    %v3122 = vunpack.c.l.b16 %v796
    %v3123 = vunpack.c.h.b16 %v796
    %v3124 = vunpack.c.l.b16 %v797
    %v3125 = vunpack.c.h.b16 %v797
    %v3126 = vunpack.c.l.b16 %v798
    %v3127 = vunpack.c.h.b16 %v798
    %v3128 = vunpack.c.l.b16 %v799
    %v3129 = vunpack.c.h.b16 %v799
    %v3130 = vunpack.c.l.b16 %v800
    %v3131 = vunpack.c.h.b16 %v800
    %v3132 = vunpack.c.l.b16 %v801
    %v3133 = vunpack.c.h.b16 %v801
    %v3134 = vunpack.c.l.b16 %v802
    %v3135 = vunpack.c.h.b16 %v802
    %v3136 = vunpack.c.l.b16 %v803
    %v3137 = vunpack.c.h.b16 %v803
    %v3138 = vunpack.c.l.b16 %v804
    %v3139 = vunpack.c.h.b16 %v804
    %v3140 = vunpack.c.l.b16 %v805
    %v3141 = vunpack.c.h.b16 %v805
    %v3142 = vunpack.c.l.b16 %v806
    %v3143 = vunpack.c.h.b16 %v806
    %v3144 = vunpack.c.l.b16 %v807
    %v3145 = vunpack.c.h.b16 %v807
    %v3146 = vunpack.c.l.b16 %v808
    %v3147 = vunpack.c.h.b16 %v808
    %v3148 = vunpack.c.l.b16 %v809
    %v3149 = vunpack.c.h.b16 %v809
    %v3150 = vunpack.c.l.b16 %v810
    %v3151 = vunpack.c.h.b16 %v810
    %v3152 = vunpack.c.l.b16 %v811
    %v3153 = vunpack.c.h.b16 %v811
    %v3154 = vunpack.c.l.b16 %v812
    %v3155 = vunpack.c.h.b16 %v812
    %v3156 = vunpack.c.l.b16 %v813
    %v3157 = vunpack.c.h.b16 %v813
    %v3158 = vunpack.c.l.b16 %v814
    %v3159 = vunpack.c.h.b16 %v814
    %v3160 = vunpack.c.l.b16 %v815
    %v3161 = vunpack.c.h.b16 %v815
    %v3162 = vunpack.c.l.b16 %v816
    %v3163 = vunpack.c.h.b16 %v816
    %v3164 = vunpack.c.l.b16 %v817
    %v3165 = vunpack.c.h.b16 %v817
    %v3166 = vunpack.c.l.b16 %v818
    %v3167 = vunpack.c.h.b16 %v818
    %v3168 = vunpack.c.l.b16 %v819
    %v3169 = vunpack.c.h.b16 %v819
    %v3170 = vunpack.c.l.b16 %v820
    %v3171 = vunpack.c.h.b16 %v820
    %v3172 = vunpack.c.l.b16 %v821
    %v3173 = vunpack.c.h.b16 %v821
    %v3174 = vunpack.c.l.b16 %v822
    %v3175 = vunpack.c.h.b16 %v822
    %v3176 = vunpack.c.l.b16 %v823
    %v3177 = vunpack.c.h.b16 %v823
    %v3178 = vunpack.c.l.b16 %v824
    %v3179 = vunpack.c.h.b16 %v824
    %v3180 = vunpack.c.l.b16 %v825
    %v3181 = vunpack.c.h.b16 %v825
    %v3182 = vunpack.c.l.b16 %v826
    %v3183 = vunpack.c.h.b16 %v826
    %v3184 = vunpack.c.l.b16 %v827
    %v3185 = vunpack.c.h.b16 %v827
    %v3186 = vunpack.c.l.b16 %v828
    %v3187 = vunpack.c.h.b16 %v828
    %v3188 = vunpack.c.l.b16 %v829
    %v3189 = vunpack.c.h.b16 %v829
    %v3190 = vunpack.c.l.b16 %v830
    %v3191 = vunpack.c.h.b16 %v830
    %v3192 = vunpack.c.l.b16 %v831
    %v3193 = vunpack.c.h.b16 %v831
    %v3194 = vunpack.c.l.b16 %v832
    %v3195 = vunpack.c.h.b16 %v832
    %v3196 = vunpack.c.l.b16 %v833
    %v3197 = vunpack.c.h.b16 %v833
    %v3198 = vunpack.c.l.b16 %v834
    %v3199 = vunpack.c.h.b16 %v834
    %v3200 = vunpack.c.l.b16 %v835
    %v3201 = vunpack.c.h.b16 %v835
    %v3202 = vunpack.c.l.b16 %v836
    %v3203 = vunpack.c.h.b16 %v836
    %v3204 = vunpack.c.l.b16 %v837
    %v3205 = vunpack.c.h.b16 %v837
    %v3206 = vunpack.c.l.b16 %v838
    %v3207 = vunpack.c.h.b16 %v838
    %v3208 = vunpack.c.l.b16 %v839
    %v3209 = vunpack.c.h.b16 %v839
    %v3210 = vunpack.c.l.b16 %v840
    %v3211 = vunpack.c.h.b16 %v840
    %v3212 = vunpack.c.l.b16 %v841
    %v3213 = vunpack.c.h.b16 %v841
    %v3214 = vunpack.c.l.b16 %v842
    %v3215 = vunpack.c.h.b16 %v842
    %v3216 = vunpack.c.l.b16 %v843
    %v3217 = vunpack.c.h.b16 %v843
    %v3218 = vunpack.c.l.b16 %v844
    %v3219 = vunpack.c.h.b16 %v844
    %v3220 = vunpack.c.l.b16 %v845
    %v3221 = vunpack.c.h.b16 %v845
    %v3222 = vunpack.c.l.b16 %v846
    %v3223 = vunpack.c.h.b16 %v846
    %v3224 = vunpack.c.l.b16 %v847
    %v3225 = vunpack.c.h.b16 %v847
    %v3226 = vunpack.c.l.b16 %v848
    %v3227 = vunpack.c.h.b16 %v848
    %v3228 = vunpack.c.l.b16 %v849
    %v3229 = vunpack.c.h.b16 %v849
    %v3230 = vunpack.c.l.b16 %v850
    %v3231 = vunpack.c.h.b16 %v850
    %v3232 = vunpack.c.l.b16 %v851
    %v3233 = vunpack.c.h.b16 %v851
    %v3234 = vunpack.c.l.b16 %v852
    %v3235 = vunpack.c.h.b16 %v852
    %v3236 = vunpack.c.l.b16 %v853
    %v3237 = vunpack.c.h.b16 %v853
    %v3238 = vunpack.c.l.b16 %v854
    %v3239 = vunpack.c.h.b16 %v854
    %v3240 = vunpack.c.l.b16 %v855
    %v3241 = vunpack.c.h.b16 %v855
    %v3242 = vunpack.c.l.b16 %v856
    %v3243 = vunpack.c.h.b16 %v856
    %v3244 = vunpack.c.l.b16 %v857
    %v3245 = vunpack.c.h.b16 %v857
    %v3246 = vunpack.c.l.b16 %v858
    %v3247 = vunpack.c.h.b16 %v858
    %v3248 = vunpack.c.l.b16 %v859
    %v3249 = vunpack.c.h.b16 %v859
    %v3250 = vunpack.c.l.b16 %v860
    %v3251 = vunpack.c.h.b16 %v860
    %v3252 = vunpack.c.l.b16 %v861
    %v3253 = vunpack.c.h.b16 %v861
    %v3254 = vunpack.c.l.b16 %v862
    %v3255 = vunpack.c.h.b16 %v862
    %v3256 = vunpack.c.l.b16 %v863
    %v3257 = vunpack.c.h.b16 %v863
    %v3258 = vunpack.c.l.b16 %v864
    %v3259 = vunpack.c.h.b16 %v864
    %v3260 = vunpack.c.l.b16 %v865
    %v3261 = vunpack.c.h.b16 %v865
    %v3262 = vunpack.c.l.b16 %v866
    %v3263 = vunpack.c.h.b16 %v866
    %v3264 = vunpack.c.l.b16 %v867
    %v3265 = vunpack.c.h.b16 %v867
    %v3266 = vunpack.c.l.b16 %v868
    %v3267 = vunpack.c.h.b16 %v868
    %v3268 = vunpack.c.l.b16 %v869
    %v3269 = vunpack.c.h.b16 %v869
    %v3270 = vpack.c.b16 %v1750, %v1734
    %v3271 = vpack.c.b16 %v1751, %v1735
    %v3272 = vpack.c.b16 %v1752, %v1736
    %v3273 = vpack.c.b16 %v1753, %v1737
    %v3274 = vpack.c.b16 %v1754, %v1738
    %v3275 = vpack.c.b16 %v1755, %v1739
    %v3276 = vpack.c.b16 %v1756, %v1740
    %v3277 = vpack.c.b16 %v1757, %v1741
    %v3278 = vpack.c.b16 %v1758, %v1742
    %v3279 = vpack.c.b16 %v1759, %v1743
    %v3280 = vpack.c.b16 %v1760, %v1744
    %v3281 = vpack.c.b16 %v1761, %v1745
    %v3282 = vpack.c.b16 %v1762, %v1746
    %v3283 = vpack.c.b16 %v1763, %v1747
    %v3284 = vpack.c.b16 %v1764, %v1748
    %v3285 = vpack.c.b16 %v1765, %v1749
    %v3286 = vpack.c.b16 %v1782, %v1766
    %v3287 = vpack.c.b16 %v1783, %v1767
    %v3288 = vpack.c.b16 %v1784, %v1768
    %v3289 = vpack.c.b16 %v1785, %v1769
    %v3290 = vpack.c.b16 %v1786, %v1770
    %v3291 = vpack.c.b16 %v1787, %v1771
    %v3292 = vpack.c.b16 %v1788, %v1772
    %v3293 = vpack.c.b16 %v1789, %v1773
    %v3294 = vpack.c.b16 %v1790, %v1774
    %v3295 = vpack.c.b16 %v1791, %v1775
    %v3296 = vpack.c.b16 %v1792, %v1776
    %v3297 = vpack.c.b16 %v1793, %v1777
    %v3298 = vpack.c.b16 %v1794, %v1778
    %v3299 = vpack.c.b16 %v1795, %v1779
    %v3300 = vpack.c.b16 %v1796, %v1780
    %v3301 = vpack.c.b16 %v1797, %v1781
    %v3302 = vpack.c.b16 %v1814, %v1798
    %v3303 = vpack.c.b16 %v1815, %v1799
    %v3304 = vpack.c.b16 %v1816, %v1800
    %v3305 = vpack.c.b16 %v1817, %v1801
    %v3306 = vpack.c.b16 %v1818, %v1802
    %v3307 = vpack.c.b16 %v1819, %v1803
    %v3308 = vpack.c.b16 %v1820, %v1804
    %v3309 = vpack.c.b16 %v1821, %v1805
    %v3310 = vpack.c.b16 %v1822, %v1806
    %v3311 = vpack.c.b16 %v1823, %v1807
    %v3312 = vpack.c.b16 %v1824, %v1808
    %v3313 = vpack.c.b16 %v1825, %v1809
    %v3314 = vpack.c.b16 %v1826, %v1810
    %v3315 = vpack.c.b16 %v1827, %v1811
    %v3316 = vpack.c.b16 %v1828, %v1812
    %v3317 = vpack.c.b16 %v1829, %v1813
    %v3318 = vpack.c.b16 %v1846, %v1830
    %v3319 = vpack.c.b16 %v1847, %v1831
    %v3320 = vpack.c.b16 %v1848, %v1832
    %v3321 = vpack.c.b16 %v1849, %v1833
    %v3322 = vpack.c.b16 %v1850, %v1834
    %v3323 = vpack.c.b16 %v1851, %v1835
    %v3324 = vpack.c.b16 %v1852, %v1836
    %v3325 = vpack.c.b16 %v1853, %v1837
    %v3326 = vpack.c.b16 %v1854, %v1838
    %v3327 = vpack.c.b16 %v1855, %v1839
    %v3328 = vpack.c.b16 %v1856, %v1840
    %v3329 = vpack.c.b16 %v1857, %v1841
    %v3330 = vpack.c.b16 %v1858, %v1842
    %v3331 = vpack.c.b16 %v1859, %v1843
    %v3332 = vpack.c.b16 %v1860, %v1844
    %v3333 = vpack.c.b16 %v1861, %v1845
    %v3334 = vpack.c.b16 %v1878, %v1862
    %v3335 = vpack.c.b16 %v1879, %v1863
    %v3336 = vpack.c.b16 %v1880, %v1864
    %v3337 = vpack.c.b16 %v1881, %v1865
    %v3338 = vpack.c.b16 %v1882, %v1866
    %v3339 = vpack.c.b16 %v1883, %v1867
    %v3340 = vpack.c.b16 %v1884, %v1868
    %v3341 = vpack.c.b16 %v1885, %v1869
    %v3342 = vpack.c.b16 %v1886, %v1870
    %v3343 = vpack.c.b16 %v1887, %v1871
    %v3344 = vpack.c.b16 %v1888, %v1872
    %v3345 = vpack.c.b16 %v1889, %v1873
    %v3346 = vpack.c.b16 %v1890, %v1874
    %v3347 = vpack.c.b16 %v1891, %v1875
    %v3348 = vpack.c.b16 %v1892, %v1876
    %v3349 = vpack.c.b16 %v1893, %v1877
    %v3350 = vpack.c.b16 %v1910, %v1894
    %v3351 = vpack.c.b16 %v1911, %v1895
    %v3352 = vpack.c.b16 %v1912, %v1896
    %v3353 = vpack.c.b16 %v1913, %v1897
    %v3354 = vpack.c.b16 %v1914, %v1898
    %v3355 = vpack.c.b16 %v1915, %v1899
    %v3356 = vpack.c.b16 %v1916, %v1900
    %v3357 = vpack.c.b16 %v1917, %v1901
    %v3358 = vpack.c.b16 %v1918, %v1902
    %v3359 = vpack.c.b16 %v1919, %v1903
    %v3360 = vpack.c.b16 %v1920, %v1904
    %v3361 = vpack.c.b16 %v1921, %v1905
    %v3362 = vpack.c.b16 %v1922, %v1906
    %v3363 = vpack.c.b16 %v1923, %v1907
    %v3364 = vpack.c.b16 %v1924, %v1908
    %v3365 = vpack.c.b16 %v1925, %v1909
    %v3366 = vpack.c.b16 %v1942, %v1926
    %v3367 = vpack.c.b16 %v1943, %v1927
    %v3368 = vpack.c.b16 %v1944, %v1928
    %v3369 = vpack.c.b16 %v1945, %v1929
    %v3370 = vpack.c.b16 %v1946, %v1930
    %v3371 = vpack.c.b16 %v1947, %v1931
    %v3372 = vpack.c.b16 %v1948, %v1932
    %v3373 = vpack.c.b16 %v1949, %v1933
    %v3374 = vpack.c.b16 %v1950, %v1934
    %v3375 = vpack.c.b16 %v1951, %v1935
    %v3376 = vpack.c.b16 %v1952, %v1936
    %v3377 = vpack.c.b16 %v1953, %v1937
    %v3378 = vpack.c.b16 %v1954, %v1938
    %v3379 = vpack.c.b16 %v1955, %v1939
    %v3380 = vpack.c.b16 %v1956, %v1940
    %v3381 = vpack.c.b16 %v1957, %v1941
    %v3382 = vpack.c.b16 %v1974, %v1958
    %v3383 = vpack.c.b16 %v1975, %v1959
    %v3384 = vpack.c.b16 %v1976, %v1960
    %v3385 = vpack.c.b16 %v1977, %v1961
    %v3386 = vpack.c.b16 %v1978, %v1962
    %v3387 = vpack.c.b16 %v1979, %v1963
    %v3388 = vpack.c.b16 %v1980, %v1964
    %v3389 = vpack.c.b16 %v1981, %v1965
    %v3390 = vpack.c.b16 %v1982, %v1966
    %v3391 = vpack.c.b16 %v1983, %v1967
    %v3392 = vpack.c.b16 %v1984, %v1968
    %v3393 = vpack.c.b16 %v1985, %v1969
    %v3394 = vpack.c.b16 %v1986, %v1970
    %v3395 = vpack.c.b16 %v1987, %v1971
    %v3396 = vpack.c.b16 %v1988, %v1972
    %v3397 = vpack.c.b16 %v1989, %v1973
    %v3398 = vpack.c.b16 %v2006, %v1990
    %v3399 = vpack.c.b16 %v2007, %v1991
    %v3400 = vpack.c.b16 %v2008, %v1992
    %v3401 = vpack.c.b16 %v2009, %v1993
    %v3402 = vpack.c.b16 %v2010, %v1994
    %v3403 = vpack.c.b16 %v2011, %v1995
    %v3404 = vpack.c.b16 %v2012, %v1996
    %v3405 = vpack.c.b16 %v2013, %v1997
    %v3406 = vpack.c.b16 %v2014, %v1998
    %v3407 = vpack.c.b16 %v2015, %v1999
    %v3408 = vpack.c.b16 %v2016, %v2000
    %v3409 = vpack.c.b16 %v2017, %v2001
    %v3410 = vpack.c.b16 %v2018, %v2002
    %v3411 = vpack.c.b16 %v2019, %v2003
    %v3412 = vpack.c.b16 %v2020, %v2004
    %v3413 = vpack.c.b16 %v2021, %v2005
    %v3414 = vpack.c.b16 %v2038, %v2022
    %v3415 = vpack.c.b16 %v2039, %v2023
    %v3416 = vpack.c.b16 %v2040, %v2024
    %v3417 = vpack.c.b16 %v2041, %v2025
    %v3418 = vpack.c.b16 %v2042, %v2026
    %v3419 = vpack.c.b16 %v2043, %v2027
    %v3420 = vpack.c.b16 %v2044, %v2028
    %v3421 = vpack.c.b16 %v2045, %v2029
    %v3422 = vpack.c.b16 %v2046, %v2030
    %v3423 = vpack.c.b16 %v2047, %v2031
    %v3424 = vpack.c.b16 %v2048, %v2032
    %v3425 = vpack.c.b16 %v2049, %v2033
    %v3426 = vpack.c.b16 %v2050, %v2034
    %v3427 = vpack.c.b16 %v2051, %v2035
    %v3428 = vpack.c.b16 %v2052, %v2036
    %v3429 = vpack.c.b16 %v2053, %v2037
    %v3430 = vpack.c.b16 %v2070, %v2054
    %v3431 = vpack.c.b16 %v2071, %v2055
    %v3432 = vpack.c.b16 %v2072, %v2056
    %v3433 = vpack.c.b16 %v2073, %v2057
    %v3434 = vpack.c.b16 %v2074, %v2058
    %v3435 = vpack.c.b16 %v2075, %v2059
    %v3436 = vpack.c.b16 %v2076, %v2060
    %v3437 = vpack.c.b16 %v2077, %v2061
    %v3438 = vpack.c.b16 %v2078, %v2062
    %v3439 = vpack.c.b16 %v2079, %v2063
    %v3440 = vpack.c.b16 %v2080, %v2064
    %v3441 = vpack.c.b16 %v2081, %v2065
    %v3442 = vpack.c.b16 %v2082, %v2066
    %v3443 = vpack.c.b16 %v2083, %v2067
    %v3444 = vpack.c.b16 %v2084, %v2068
    %v3445 = vpack.c.b16 %v2085, %v2069
    %v3446 = vpack.c.b16 %v2102, %v2086
    %v3447 = vpack.c.b16 %v2103, %v2087
    %v3448 = vpack.c.b16 %v2104, %v2088
    %v3449 = vpack.c.b16 %v2105, %v2089
    %v3450 = vpack.c.b16 %v2106, %v2090
    %v3451 = vpack.c.b16 %v2107, %v2091
    %v3452 = vpack.c.b16 %v2108, %v2092
    %v3453 = vpack.c.b16 %v2109, %v2093
    %v3454 = vpack.c.b16 %v2110, %v2094
    %v3455 = vpack.c.b16 %v2111, %v2095
    %v3456 = vpack.c.b16 %v2112, %v2096
    %v3457 = vpack.c.b16 %v2113, %v2097
    %v3458 = vpack.c.b16 %v2114, %v2098
    %v3459 = vpack.c.b16 %v2115, %v2099
    %v3460 = vpack.c.b16 %v2116, %v2100
    %v3461 = vpack.c.b16 %v2117, %v2101
    %v3462 = vpack.c.b16 %v2134, %v2118
    %v3463 = vpack.c.b16 %v2135, %v2119
    %v3464 = vpack.c.b16 %v2136, %v2120
    %v3465 = vpack.c.b16 %v2137, %v2121
    %v3466 = vpack.c.b16 %v2138, %v2122
    %v3467 = vpack.c.b16 %v2139, %v2123
    %v3468 = vpack.c.b16 %v2140, %v2124
    %v3469 = vpack.c.b16 %v2141, %v2125
    %v3470 = vpack.c.b16 %v2142, %v2126
    %v3471 = vpack.c.b16 %v2143, %v2127
    %v3472 = vpack.c.b16 %v2144, %v2128
    %v3473 = vpack.c.b16 %v2145, %v2129
    %v3474 = vpack.c.b16 %v2146, %v2130
    %v3475 = vpack.c.b16 %v2147, %v2131
    %v3476 = vpack.c.b16 %v2148, %v2132
    %v3477 = vpack.c.b16 %v2149, %v2133
    %v3478 = vpack.c.b16 %v2166, %v2150
    %v3479 = vpack.c.b16 %v2167, %v2151
    %v3480 = vpack.c.b16 %v2168, %v2152
    %v3481 = vpack.c.b16 %v2169, %v2153
    %v3482 = vpack.c.b16 %v2170, %v2154
    %v3483 = vpack.c.b16 %v2171, %v2155
    %v3484 = vpack.c.b16 %v2172, %v2156
    %v3485 = vpack.c.b16 %v2173, %v2157
    %v3486 = vpack.c.b16 %v2174, %v2158
    %v3487 = vpack.c.b16 %v2175, %v2159
    %v3488 = vpack.c.b16 %v2176, %v2160
    %v3489 = vpack.c.b16 %v2177, %v2161
    %v3490 = vpack.c.b16 %v2178, %v2162
    %v3491 = vpack.c.b16 %v2179, %v2163
    %v3492 = vpack.c.b16 %v2180, %v2164
    %v3493 = vpack.c.b16 %v2181, %v2165
    %v3494 = vpack.c.b16 %v2198, %v2182
    %v3495 = vpack.c.b16 %v2199, %v2183
    %v3496 = vpack.c.b16 %v2200, %v2184
    %v3497 = vpack.c.b16 %v2201, %v2185
    %v3498 = vpack.c.b16 %v2202, %v2186
    %v3499 = vpack.c.b16 %v2203, %v2187
    %v3500 = vpack.c.b16 %v2204, %v2188
    %v3501 = vpack.c.b16 %v2205, %v2189
    %v3502 = vpack.c.b16 %v2206, %v2190
    %v3503 = vpack.c.b16 %v2207, %v2191
    %v3504 = vpack.c.b16 %v2208, %v2192
    %v3505 = vpack.c.b16 %v2209, %v2193
    %v3506 = vpack.c.b16 %v2210, %v2194
    %v3507 = vpack.c.b16 %v2211, %v2195
    %v3508 = vpack.c.b16 %v2212, %v2196
    %v3509 = vpack.c.b16 %v2213, %v2197
    %v3510 = vpack.c.b16 %v2230, %v2214
    %v3511 = vpack.c.b16 %v2231, %v2215
    %v3512 = vpack.c.b16 %v2232, %v2216
    %v3513 = vpack.c.b16 %v2233, %v2217
    %v3514 = vpack.c.b16 %v2234, %v2218
    %v3515 = vpack.c.b16 %v2235, %v2219
    %v3516 = vpack.c.b16 %v2236, %v2220
    %v3517 = vpack.c.b16 %v2237, %v2221
    %v3518 = vpack.c.b16 %v2238, %v2222
    %v3519 = vpack.c.b16 %v2239, %v2223
    %v3520 = vpack.c.b16 %v2240, %v2224
    %v3521 = vpack.c.b16 %v2241, %v2225
    %v3522 = vpack.c.b16 %v2242, %v2226
    %v3523 = vpack.c.b16 %v2243, %v2227
    %v3524 = vpack.c.b16 %v2244, %v2228
    %v3525 = vpack.c.b16 %v2245, %v2229
    %v3526 = vpack.c.b16 %v2262, %v2246
    %v3527 = vpack.c.b16 %v2263, %v2247
    %v3528 = vpack.c.b16 %v2264, %v2248
    %v3529 = vpack.c.b16 %v2265, %v2249
    %v3530 = vpack.c.b16 %v2266, %v2250
    %v3531 = vpack.c.b16 %v2267, %v2251
    %v3532 = vpack.c.b16 %v2268, %v2252
    %v3533 = vpack.c.b16 %v2269, %v2253
    %v3534 = vpack.c.b16 %v2270, %v2254
    %v3535 = vpack.c.b16 %v2271, %v2255
    %v3536 = vpack.c.b16 %v2272, %v2256
    %v3537 = vpack.c.b16 %v2273, %v2257
    %v3538 = vpack.c.b16 %v2274, %v2258
    %v3539 = vpack.c.b16 %v2275, %v2259
    %v3540 = vpack.c.b16 %v2276, %v2260
    %v3541 = vpack.c.b16 %v2277, %v2261
    %v3542 = vpack.c.b16 %v2294, %v2278
    %v3543 = vpack.c.b16 %v2295, %v2279
    %v3544 = vpack.c.b16 %v2296, %v2280
    %v3545 = vpack.c.b16 %v2297, %v2281
    %v3546 = vpack.c.b16 %v2298, %v2282
    %v3547 = vpack.c.b16 %v2299, %v2283
    %v3548 = vpack.c.b16 %v2300, %v2284
    %v3549 = vpack.c.b16 %v2301, %v2285
    %v3550 = vpack.c.b16 %v2302, %v2286
    %v3551 = vpack.c.b16 %v2303, %v2287
    %v3552 = vpack.c.b16 %v2304, %v2288
    %v3553 = vpack.c.b16 %v2305, %v2289
    %v3554 = vpack.c.b16 %v2306, %v2290
    %v3555 = vpack.c.b16 %v2307, %v2291
    %v3556 = vpack.c.b16 %v2308, %v2292
    %v3557 = vpack.c.b16 %v2309, %v2293
    %v3558 = vpack.c.b16 %v2326, %v2310
    %v3559 = vpack.c.b16 %v2327, %v2311
    %v3560 = vpack.c.b16 %v2328, %v2312
    %v3561 = vpack.c.b16 %v2329, %v2313
    %v3562 = vpack.c.b16 %v2330, %v2314
    %v3563 = vpack.c.b16 %v2331, %v2315
    %v3564 = vpack.c.b16 %v2332, %v2316
    %v3565 = vpack.c.b16 %v2333, %v2317
    %v3566 = vpack.c.b16 %v2334, %v2318
    %v3567 = vpack.c.b16 %v2335, %v2319
    %v3568 = vpack.c.b16 %v2336, %v2320
    %v3569 = vpack.c.b16 %v2337, %v2321
    %v3570 = vpack.c.b16 %v2338, %v2322
    %v3571 = vpack.c.b16 %v2339, %v2323
    %v3572 = vpack.c.b16 %v2340, %v2324
    %v3573 = vpack.c.b16 %v2341, %v2325
    %v3574 = vpack.c.b16 %v2358, %v2342
    %v3575 = vpack.c.b16 %v2359, %v2343
    %v3576 = vpack.c.b16 %v2360, %v2344
    %v3577 = vpack.c.b16 %v2361, %v2345
    %v3578 = vpack.c.b16 %v2362, %v2346
    %v3579 = vpack.c.b16 %v2363, %v2347
    %v3580 = vpack.c.b16 %v2364, %v2348
    %v3581 = vpack.c.b16 %v2365, %v2349
    %v3582 = vpack.c.b16 %v2366, %v2350
    %v3583 = vpack.c.b16 %v2367, %v2351
    %v3584 = vpack.c.b16 %v2368, %v2352
    %v3585 = vpack.c.b16 %v2369, %v2353
    %v3586 = vpack.c.b16 %v2370, %v2354
    %v3587 = vpack.c.b16 %v2371, %v2355
    %v3588 = vpack.c.b16 %v2372, %v2356
    %v3589 = vpack.c.b16 %v2373, %v2357
    %v3590 = vpack.c.b16 %v2390, %v2374
    %v3591 = vpack.c.b16 %v2391, %v2375
    %v3592 = vpack.c.b16 %v2392, %v2376
    %v3593 = vpack.c.b16 %v2393, %v2377
    %v3594 = vpack.c.b16 %v2394, %v2378
    %v3595 = vpack.c.b16 %v2395, %v2379
    %v3596 = vpack.c.b16 %v2396, %v2380
    %v3597 = vpack.c.b16 %v2397, %v2381
    %v3598 = vpack.c.b16 %v2398, %v2382
    %v3599 = vpack.c.b16 %v2399, %v2383
    %v3600 = vpack.c.b16 %v2400, %v2384
    %v3601 = vpack.c.b16 %v2401, %v2385
    %v3602 = vpack.c.b16 %v2402, %v2386
    %v3603 = vpack.c.b16 %v2403, %v2387
    %v3604 = vpack.c.b16 %v2404, %v2388
    %v3605 = vpack.c.b16 %v2405, %v2389
    %v3606 = vpack.c.b16 %v2422, %v2406
    %v3607 = vpack.c.b16 %v2423, %v2407
    %v3608 = vpack.c.b16 %v2424, %v2408
    %v3609 = vpack.c.b16 %v2425, %v2409
    %v3610 = vpack.c.b16 %v2426, %v2410
    %v3611 = vpack.c.b16 %v2427, %v2411
    %v3612 = vpack.c.b16 %v2428, %v2412
    %v3613 = vpack.c.b16 %v2429, %v2413
    %v3614 = vpack.c.b16 %v2430, %v2414
    %v3615 = vpack.c.b16 %v2431, %v2415
    %v3616 = vpack.c.b16 %v2432, %v2416
    %v3617 = vpack.c.b16 %v2433, %v2417
    %v3618 = vpack.c.b16 %v2434, %v2418
    %v3619 = vpack.c.b16 %v2435, %v2419
    %v3620 = vpack.c.b16 %v2436, %v2420
    %v3621 = vpack.c.b16 %v2437, %v2421
    %v3622 = vpack.c.b16 %v2454, %v2438
    %v3623 = vpack.c.b16 %v2455, %v2439
    %v3624 = vpack.c.b16 %v2456, %v2440
    %v3625 = vpack.c.b16 %v2457, %v2441
    %v3626 = vpack.c.b16 %v2458, %v2442
    %v3627 = vpack.c.b16 %v2459, %v2443
    %v3628 = vpack.c.b16 %v2460, %v2444
    %v3629 = vpack.c.b16 %v2461, %v2445
    %v3630 = vpack.c.b16 %v2462, %v2446
    %v3631 = vpack.c.b16 %v2463, %v2447
    %v3632 = vpack.c.b16 %v2464, %v2448
    %v3633 = vpack.c.b16 %v2465, %v2449
    %v3634 = vpack.c.b16 %v2466, %v2450
    %v3635 = vpack.c.b16 %v2467, %v2451
    %v3636 = vpack.c.b16 %v2468, %v2452
    %v3637 = vpack.c.b16 %v2469, %v2453
    %v3638 = vpack.c.b16 %v2486, %v2470
    %v3639 = vpack.c.b16 %v2487, %v2471
    %v3640 = vpack.c.b16 %v2488, %v2472
    %v3641 = vpack.c.b16 %v2489, %v2473
    %v3642 = vpack.c.b16 %v2490, %v2474
    %v3643 = vpack.c.b16 %v2491, %v2475
    %v3644 = vpack.c.b16 %v2492, %v2476
    %v3645 = vpack.c.b16 %v2493, %v2477
    %v3646 = vpack.c.b16 %v2494, %v2478
    %v3647 = vpack.c.b16 %v2495, %v2479
    %v3648 = vpack.c.b16 %v2496, %v2480
    %v3649 = vpack.c.b16 %v2497, %v2481
    %v3650 = vpack.c.b16 %v2498, %v2482
    %v3651 = vpack.c.b16 %v2499, %v2483
    %v3652 = vpack.c.b16 %v2500, %v2484
    %v3653 = vpack.c.b16 %v2501, %v2485
    %v3654 = vpack.c.b16 %v2518, %v2502
    %v3655 = vpack.c.b16 %v2519, %v2503
    %v3656 = vpack.c.b16 %v2520, %v2504
    %v3657 = vpack.c.b16 %v2521, %v2505
    %v3658 = vpack.c.b16 %v2522, %v2506
    %v3659 = vpack.c.b16 %v2523, %v2507
    %v3660 = vpack.c.b16 %v2524, %v2508
    %v3661 = vpack.c.b16 %v2525, %v2509
    %v3662 = vpack.c.b16 %v2526, %v2510
    %v3663 = vpack.c.b16 %v2527, %v2511
    %v3664 = vpack.c.b16 %v2528, %v2512
    %v3665 = vpack.c.b16 %v2529, %v2513
    %v3666 = vpack.c.b16 %v2530, %v2514
    %v3667 = vpack.c.b16 %v2531, %v2515
    %v3668 = vpack.c.b16 %v2532, %v2516
    %v3669 = vpack.c.b16 %v2533, %v2517
    %v3670 = vpack.c.b16 %v2550, %v2534
    %v3671 = vpack.c.b16 %v2551, %v2535
    %v3672 = vpack.c.b16 %v2552, %v2536
    %v3673 = vpack.c.b16 %v2553, %v2537
    %v3674 = vpack.c.b16 %v2554, %v2538
    %v3675 = vpack.c.b16 %v2555, %v2539
    %v3676 = vpack.c.b16 %v2556, %v2540
    %v3677 = vpack.c.b16 %v2557, %v2541
    %v3678 = vpack.c.b16 %v2558, %v2542
    %v3679 = vpack.c.b16 %v2559, %v2543
    %v3680 = vpack.c.b16 %v2560, %v2544
    %v3681 = vpack.c.b16 %v2561, %v2545
    %v3682 = vpack.c.b16 %v2562, %v2546
    %v3683 = vpack.c.b16 %v2563, %v2547
    %v3684 = vpack.c.b16 %v2564, %v2548
    %v3685 = vpack.c.b16 %v2565, %v2549
    %v3686 = vpack.c.b16 %v2582, %v2566
    %v3687 = vpack.c.b16 %v2583, %v2567
    %v3688 = vpack.c.b16 %v2584, %v2568
    %v3689 = vpack.c.b16 %v2585, %v2569
    %v3690 = vpack.c.b16 %v2586, %v2570
    %v3691 = vpack.c.b16 %v2587, %v2571
    %v3692 = vpack.c.b16 %v2588, %v2572
    %v3693 = vpack.c.b16 %v2589, %v2573
    %v3694 = vpack.c.b16 %v2590, %v2574
    %v3695 = vpack.c.b16 %v2591, %v2575
    %v3696 = vpack.c.b16 %v2592, %v2576
    %v3697 = vpack.c.b16 %v2593, %v2577
    %v3698 = vpack.c.b16 %v2594, %v2578
    %v3699 = vpack.c.b16 %v2595, %v2579
    %v3700 = vpack.c.b16 %v2596, %v2580
    %v3701 = vpack.c.b16 %v2597, %v2581
    %v3702 = vpack.c.b16 %v2614, %v2598
    %v3703 = vpack.c.b16 %v2615, %v2599
    %v3704 = vpack.c.b16 %v2616, %v2600
    %v3705 = vpack.c.b16 %v2617, %v2601
    %v3706 = vpack.c.b16 %v2618, %v2602
    %v3707 = vpack.c.b16 %v2619, %v2603
    %v3708 = vpack.c.b16 %v2620, %v2604
    %v3709 = vpack.c.b16 %v2621, %v2605
    %v3710 = vpack.c.b16 %v2622, %v2606
    %v3711 = vpack.c.b16 %v2623, %v2607
    %v3712 = vpack.c.b16 %v2624, %v2608
    %v3713 = vpack.c.b16 %v2625, %v2609
    %v3714 = vpack.c.b16 %v2626, %v2610
    %v3715 = vpack.c.b16 %v2627, %v2611
    %v3716 = vpack.c.b16 %v2628, %v2612
    %v3717 = vpack.c.b16 %v2629, %v2613
    %v3718 = vpack.c.b16 %v2646, %v2630
    %v3719 = vpack.c.b16 %v2647, %v2631
    %v3720 = vpack.c.b16 %v2648, %v2632
    %v3721 = vpack.c.b16 %v2649, %v2633
    %v3722 = vpack.c.b16 %v2650, %v2634
    %v3723 = vpack.c.b16 %v2651, %v2635
    %v3724 = vpack.c.b16 %v2652, %v2636
    %v3725 = vpack.c.b16 %v2653, %v2637
    %v3726 = vpack.c.b16 %v2654, %v2638
    %v3727 = vpack.c.b16 %v2655, %v2639
    %v3728 = vpack.c.b16 %v2656, %v2640
    %v3729 = vpack.c.b16 %v2657, %v2641
    %v3730 = vpack.c.b16 %v2658, %v2642
    %v3731 = vpack.c.b16 %v2659, %v2643
    %v3732 = vpack.c.b16 %v2660, %v2644
    %v3733 = vpack.c.b16 %v2661, %v2645
    %v3734 = vpack.c.b16 %v2678, %v2662
    %v3735 = vpack.c.b16 %v2679, %v2663
    %v3736 = vpack.c.b16 %v2680, %v2664
    %v3737 = vpack.c.b16 %v2681, %v2665
    %v3738 = vpack.c.b16 %v2682, %v2666
    %v3739 = vpack.c.b16 %v2683, %v2667
    %v3740 = vpack.c.b16 %v2684, %v2668
    %v3741 = vpack.c.b16 %v2685, %v2669
    %v3742 = vpack.c.b16 %v2686, %v2670
    %v3743 = vpack.c.b16 %v2687, %v2671
    %v3744 = vpack.c.b16 %v2688, %v2672
    %v3745 = vpack.c.b16 %v2689, %v2673
    %v3746 = vpack.c.b16 %v2690, %v2674
    %v3747 = vpack.c.b16 %v2691, %v2675
    %v3748 = vpack.c.b16 %v2692, %v2676
    %v3749 = vpack.c.b16 %v2693, %v2677
    %v3750 = vpack.c.b16 %v2710, %v2694
    %v3751 = vpack.c.b16 %v2711, %v2695
    %v3752 = vpack.c.b16 %v2712, %v2696
    %v3753 = vpack.c.b16 %v2713, %v2697
    %v3754 = vpack.c.b16 %v2714, %v2698
    %v3755 = vpack.c.b16 %v2715, %v2699
    %v3756 = vpack.c.b16 %v2716, %v2700
    %v3757 = vpack.c.b16 %v2717, %v2701
    %v3758 = vpack.c.b16 %v2718, %v2702
    %v3759 = vpack.c.b16 %v2719, %v2703
    %v3760 = vpack.c.b16 %v2720, %v2704
    %v3761 = vpack.c.b16 %v2721, %v2705
    %v3762 = vpack.c.b16 %v2722, %v2706
    %v3763 = vpack.c.b16 %v2723, %v2707
    %v3764 = vpack.c.b16 %v2724, %v2708
    %v3765 = vpack.c.b16 %v2725, %v2709
    %v3766 = vpack.c.b16 %v2742, %v2726
    %v3767 = vpack.c.b16 %v2743, %v2727
    %v3768 = vpack.c.b16 %v2744, %v2728
    %v3769 = vpack.c.b16 %v2745, %v2729
    %v3770 = vpack.c.b16 %v2746, %v2730
    %v3771 = vpack.c.b16 %v2747, %v2731
    %v3772 = vpack.c.b16 %v2748, %v2732
    %v3773 = vpack.c.b16 %v2749, %v2733
    %v3774 = vpack.c.b16 %v2750, %v2734
    %v3775 = vpack.c.b16 %v2751, %v2735
    %v3776 = vpack.c.b16 %v2752, %v2736
    %v3777 = vpack.c.b16 %v2753, %v2737
    %v3778 = vpack.c.b16 %v2754, %v2738
    %v3779 = vpack.c.b16 %v2755, %v2739
    %v3780 = vpack.c.b16 %v2756, %v2740
    %v3781 = vpack.c.b16 %v2757, %v2741
    %v3782 = vpack.c.b16 %v2774, %v2758
    %v3783 = vpack.c.b16 %v2775, %v2759
    %v3784 = vpack.c.b16 %v2776, %v2760
    %v3785 = vpack.c.b16 %v2777, %v2761
    %v3786 = vpack.c.b16 %v2778, %v2762
    %v3787 = vpack.c.b16 %v2779, %v2763
    %v3788 = vpack.c.b16 %v2780, %v2764
    %v3789 = vpack.c.b16 %v2781, %v2765
    %v3790 = vpack.c.b16 %v2782, %v2766
    %v3791 = vpack.c.b16 %v2783, %v2767
    %v3792 = vpack.c.b16 %v2784, %v2768
    %v3793 = vpack.c.b16 %v2785, %v2769
    %v3794 = vpack.c.b16 %v2786, %v2770
    %v3795 = vpack.c.b16 %v2787, %v2771
    %v3796 = vpack.c.b16 %v2788, %v2772
    %v3797 = vpack.c.b16 %v2789, %v2773
    %v3798 = vpack.c.b16 %v2806, %v2790
    %v3799 = vpack.c.b16 %v2807, %v2791
    %v3800 = vpack.c.b16 %v2808, %v2792
    %v3801 = vpack.c.b16 %v2809, %v2793
    %v3802 = vpack.c.b16 %v2810, %v2794
    %v3803 = vpack.c.b16 %v2811, %v2795
    %v3804 = vpack.c.b16 %v2812, %v2796
    %v3805 = vpack.c.b16 %v2813, %v2797
    %v3806 = vpack.c.b16 %v2814, %v2798
    %v3807 = vpack.c.b16 %v2815, %v2799
    %v3808 = vpack.c.b16 %v2816, %v2800
    %v3809 = vpack.c.b16 %v2817, %v2801
    %v3810 = vpack.c.b16 %v2818, %v2802
    %v3811 = vpack.c.b16 %v2819, %v2803
    %v3812 = vpack.c.b16 %v2820, %v2804
    %v3813 = vpack.c.b16 %v2821, %v2805
    %v3814 = vpack.c.b16 %v2838, %v2822
    %v3815 = vpack.c.b16 %v2839, %v2823
    %v3816 = vpack.c.b16 %v2840, %v2824
    %v3817 = vpack.c.b16 %v2841, %v2825
    %v3818 = vpack.c.b16 %v2842, %v2826
    %v3819 = vpack.c.b16 %v2843, %v2827
    %v3820 = vpack.c.b16 %v2844, %v2828
    %v3821 = vpack.c.b16 %v2845, %v2829
    %v3822 = vpack.c.b16 %v2846, %v2830
    %v3823 = vpack.c.b16 %v2847, %v2831
    %v3824 = vpack.c.b16 %v2848, %v2832
    %v3825 = vpack.c.b16 %v2849, %v2833
    %v3826 = vpack.c.b16 %v2850, %v2834
    %v3827 = vpack.c.b16 %v2851, %v2835
    %v3828 = vpack.c.b16 %v2852, %v2836
    %v3829 = vpack.c.b16 %v2853, %v2837
    %v3830 = vpack.c.b16 %v2870, %v2854
    %v3831 = vpack.c.b16 %v2871, %v2855
    %v3832 = vpack.c.b16 %v2872, %v2856
    %v3833 = vpack.c.b16 %v2873, %v2857
    %v3834 = vpack.c.b16 %v2874, %v2858
    %v3835 = vpack.c.b16 %v2875, %v2859
    %v3836 = vpack.c.b16 %v2876, %v2860
    %v3837 = vpack.c.b16 %v2877, %v2861
    %v3838 = vpack.c.b16 %v2878, %v2862
    %v3839 = vpack.c.b16 %v2879, %v2863
    %v3840 = vpack.c.b16 %v2880, %v2864
    %v3841 = vpack.c.b16 %v2881, %v2865
    %v3842 = vpack.c.b16 %v2882, %v2866
    %v3843 = vpack.c.b16 %v2883, %v2867
    %v3844 = vpack.c.b16 %v2884, %v2868
    %v3845 = vpack.c.b16 %v2885, %v2869
    %v3846 = vpack.c.b16 %v2902, %v2886
    %v3847 = vpack.c.b16 %v2903, %v2887
    %v3848 = vpack.c.b16 %v2904, %v2888
    %v3849 = vpack.c.b16 %v2905, %v2889
    %v3850 = vpack.c.b16 %v2906, %v2890
    %v3851 = vpack.c.b16 %v2907, %v2891
    %v3852 = vpack.c.b16 %v2908, %v2892
    %v3853 = vpack.c.b16 %v2909, %v2893
    %v3854 = vpack.c.b16 %v2910, %v2894
    %v3855 = vpack.c.b16 %v2911, %v2895
    %v3856 = vpack.c.b16 %v2912, %v2896
    %v3857 = vpack.c.b16 %v2913, %v2897
    %v3858 = vpack.c.b16 %v2914, %v2898
    %v3859 = vpack.c.b16 %v2915, %v2899
    %v3860 = vpack.c.b16 %v2916, %v2900
    %v3861 = vpack.c.b16 %v2917, %v2901
    %v3862 = vpack.c.b16 %v2934, %v2918
    %v3863 = vpack.c.b16 %v2935, %v2919
    %v3864 = vpack.c.b16 %v2936, %v2920
    %v3865 = vpack.c.b16 %v2937, %v2921
    %v3866 = vpack.c.b16 %v2938, %v2922
    %v3867 = vpack.c.b16 %v2939, %v2923
    %v3868 = vpack.c.b16 %v2940, %v2924
    %v3869 = vpack.c.b16 %v2941, %v2925
    %v3870 = vpack.c.b16 %v2942, %v2926
    %v3871 = vpack.c.b16 %v2943, %v2927
    %v3872 = vpack.c.b16 %v2944, %v2928
    %v3873 = vpack.c.b16 %v2945, %v2929
    %v3874 = vpack.c.b16 %v2946, %v2930
    %v3875 = vpack.c.b16 %v2947, %v2931
    %v3876 = vpack.c.b16 %v2948, %v2932
    %v3877 = vpack.c.b16 %v2949, %v2933
    %v3878 = vpack.c.b16 %v2966, %v2950
    %v3879 = vpack.c.b16 %v2967, %v2951
    %v3880 = vpack.c.b16 %v2968, %v2952
    %v3881 = vpack.c.b16 %v2969, %v2953
    %v3882 = vpack.c.b16 %v2970, %v2954
    %v3883 = vpack.c.b16 %v2971, %v2955
    %v3884 = vpack.c.b16 %v2972, %v2956
    %v3885 = vpack.c.b16 %v2973, %v2957
    %v3886 = vpack.c.b16 %v2974, %v2958
    %v3887 = vpack.c.b16 %v2975, %v2959
    %v3888 = vpack.c.b16 %v2976, %v2960
    %v3889 = vpack.c.b16 %v2977, %v2961
    %v3890 = vpack.c.b16 %v2978, %v2962
    %v3891 = vpack.c.b16 %v2979, %v2963
    %v3892 = vpack.c.b16 %v2980, %v2964
    %v3893 = vpack.c.b16 %v2981, %v2965
    %v3894 = vpack.c.b16 %v2998, %v2982
    %v3895 = vpack.c.b16 %v2999, %v2983
    %v3896 = vpack.c.b16 %v3000, %v2984
    %v3897 = vpack.c.b16 %v3001, %v2985
    %v3898 = vpack.c.b16 %v3002, %v2986
    %v3899 = vpack.c.b16 %v3003, %v2987
    %v3900 = vpack.c.b16 %v3004, %v2988
    %v3901 = vpack.c.b16 %v3005, %v2989
    %v3902 = vpack.c.b16 %v3006, %v2990
    %v3903 = vpack.c.b16 %v3007, %v2991
    %v3904 = vpack.c.b16 %v3008, %v2992
    %v3905 = vpack.c.b16 %v3009, %v2993
    %v3906 = vpack.c.b16 %v3010, %v2994
    %v3907 = vpack.c.b16 %v3011, %v2995
    %v3908 = vpack.c.b16 %v3012, %v2996
    %v3909 = vpack.c.b16 %v3013, %v2997
    %v3910 = vpack.c.b16 %v3030, %v3014
    %v3911 = vpack.c.b16 %v3031, %v3015
    %v3912 = vpack.c.b16 %v3032, %v3016
    %v3913 = vpack.c.b16 %v3033, %v3017
    %v3914 = vpack.c.b16 %v3034, %v3018
    %v3915 = vpack.c.b16 %v3035, %v3019
    %v3916 = vpack.c.b16 %v3036, %v3020
    %v3917 = vpack.c.b16 %v3037, %v3021
    %v3918 = vpack.c.b16 %v3038, %v3022
    %v3919 = vpack.c.b16 %v3039, %v3023
    %v3920 = vpack.c.b16 %v3040, %v3024
    %v3921 = vpack.c.b16 %v3041, %v3025
    %v3922 = vpack.c.b16 %v3042, %v3026
    %v3923 = vpack.c.b16 %v3043, %v3027
    %v3924 = vpack.c.b16 %v3044, %v3028
    %v3925 = vpack.c.b16 %v3045, %v3029
    %v3926 = vpack.c.b16 %v3062, %v3046
    %v3927 = vpack.c.b16 %v3063, %v3047
    %v3928 = vpack.c.b16 %v3064, %v3048
    %v3929 = vpack.c.b16 %v3065, %v3049
    %v3930 = vpack.c.b16 %v3066, %v3050
    %v3931 = vpack.c.b16 %v3067, %v3051
    %v3932 = vpack.c.b16 %v3068, %v3052
    %v3933 = vpack.c.b16 %v3069, %v3053
    %v3934 = vpack.c.b16 %v3070, %v3054
    %v3935 = vpack.c.b16 %v3071, %v3055
    %v3936 = vpack.c.b16 %v3072, %v3056
    %v3937 = vpack.c.b16 %v3073, %v3057
    %v3938 = vpack.c.b16 %v3074, %v3058
    %v3939 = vpack.c.b16 %v3075, %v3059
    %v3940 = vpack.c.b16 %v3076, %v3060
    %v3941 = vpack.c.b16 %v3077, %v3061
    %v3942 = vpack.c.b16 %v3094, %v3078
    %v3943 = vpack.c.b16 %v3095, %v3079
    %v3944 = vpack.c.b16 %v3096, %v3080
    %v3945 = vpack.c.b16 %v3097, %v3081
    %v3946 = vpack.c.b16 %v3098, %v3082
    %v3947 = vpack.c.b16 %v3099, %v3083
    %v3948 = vpack.c.b16 %v3100, %v3084
    %v3949 = vpack.c.b16 %v3101, %v3085
    %v3950 = vpack.c.b16 %v3102, %v3086
    %v3951 = vpack.c.b16 %v3103, %v3087
    %v3952 = vpack.c.b16 %v3104, %v3088
    %v3953 = vpack.c.b16 %v3105, %v3089
    %v3954 = vpack.c.b16 %v3106, %v3090
    %v3955 = vpack.c.b16 %v3107, %v3091
    %v3956 = vpack.c.b16 %v3108, %v3092
    %v3957 = vpack.c.b16 %v3109, %v3093
    %v3958 = vpack.c.b16 %v3126, %v3110
    %v3959 = vpack.c.b16 %v3127, %v3111
    %v3960 = vpack.c.b16 %v3128, %v3112
    %v3961 = vpack.c.b16 %v3129, %v3113
    %v3962 = vpack.c.b16 %v3130, %v3114
    %v3963 = vpack.c.b16 %v3131, %v3115
    %v3964 = vpack.c.b16 %v3132, %v3116
    %v3965 = vpack.c.b16 %v3133, %v3117
    %v3966 = vpack.c.b16 %v3134, %v3118
    %v3967 = vpack.c.b16 %v3135, %v3119
    %v3968 = vpack.c.b16 %v3136, %v3120
    %v3969 = vpack.c.b16 %v3137, %v3121
    %v3970 = vpack.c.b16 %v3138, %v3122
    %v3971 = vpack.c.b16 %v3139, %v3123
    %v3972 = vpack.c.b16 %v3140, %v3124
    %v3973 = vpack.c.b16 %v3141, %v3125
    %v3974 = vpack.c.b16 %v3158, %v3142
    %v3975 = vpack.c.b16 %v3159, %v3143
    %v3976 = vpack.c.b16 %v3160, %v3144
    %v3977 = vpack.c.b16 %v3161, %v3145
    %v3978 = vpack.c.b16 %v3162, %v3146
    %v3979 = vpack.c.b16 %v3163, %v3147
    %v3980 = vpack.c.b16 %v3164, %v3148
    %v3981 = vpack.c.b16 %v3165, %v3149
    %v3982 = vpack.c.b16 %v3166, %v3150
    %v3983 = vpack.c.b16 %v3167, %v3151
    %v3984 = vpack.c.b16 %v3168, %v3152
    %v3985 = vpack.c.b16 %v3169, %v3153
    %v3986 = vpack.c.b16 %v3170, %v3154
    %v3987 = vpack.c.b16 %v3171, %v3155
    %v3988 = vpack.c.b16 %v3172, %v3156
    %v3989 = vpack.c.b16 %v3173, %v3157
    %v3990 = vpack.c.b16 %v3190, %v3174
    %v3991 = vpack.c.b16 %v3191, %v3175
    %v3992 = vpack.c.b16 %v3192, %v3176
    %v3993 = vpack.c.b16 %v3193, %v3177
    %v3994 = vpack.c.b16 %v3194, %v3178
    %v3995 = vpack.c.b16 %v3195, %v3179
    %v3996 = vpack.c.b16 %v3196, %v3180
    %v3997 = vpack.c.b16 %v3197, %v3181
    %v3998 = vpack.c.b16 %v3198, %v3182
    %v3999 = vpack.c.b16 %v3199, %v3183
    %v4000 = vpack.c.b16 %v3200, %v3184
    %v4001 = vpack.c.b16 %v3201, %v3185
    %v4002 = vpack.c.b16 %v3202, %v3186
    %v4003 = vpack.c.b16 %v3203, %v3187
    %v4004 = vpack.c.b16 %v3204, %v3188
    %v4005 = vpack.c.b16 %v3205, %v3189
    %v4006 = vpack.c.b16 %v3222, %v3206
    %v4007 = vpack.c.b16 %v3223, %v3207
    %v4008 = vpack.c.b16 %v3224, %v3208
    %v4009 = vpack.c.b16 %v3225, %v3209
    %v4010 = vpack.c.b16 %v3226, %v3210
    %v4011 = vpack.c.b16 %v3227, %v3211
    %v4012 = vpack.c.b16 %v3228, %v3212
    %v4013 = vpack.c.b16 %v3229, %v3213
    %v4014 = vpack.c.b16 %v3230, %v3214
    %v4015 = vpack.c.b16 %v3231, %v3215
    %v4016 = vpack.c.b16 %v3232, %v3216
    %v4017 = vpack.c.b16 %v3233, %v3217
    %v4018 = vpack.c.b16 %v3234, %v3218
    %v4019 = vpack.c.b16 %v3235, %v3219
    %v4020 = vpack.c.b16 %v3236, %v3220
    %v4021 = vpack.c.b16 %v3237, %v3221
    %v4022 = vpack.c.b16 %v3254, %v3238
    %v4023 = vpack.c.b16 %v3255, %v3239
    %v4024 = vpack.c.b16 %v3256, %v3240
    %v4025 = vpack.c.b16 %v3257, %v3241
    %v4026 = vpack.c.b16 %v3258, %v3242
    %v4027 = vpack.c.b16 %v3259, %v3243
    %v4028 = vpack.c.b16 %v3260, %v3244
    %v4029 = vpack.c.b16 %v3261, %v3245
    %v4030 = vpack.c.b16 %v3262, %v3246
    %v4031 = vpack.c.b16 %v3263, %v3247
    %v4032 = vpack.c.b16 %v3264, %v3248
    %v4033 = vpack.c.b16 %v3265, %v3249
    %v4034 = vpack.c.b16 %v3266, %v3250
    %v4035 = vpack.c.b16 %v3267, %v3251
    %v4036 = vpack.c.b16 %v3268, %v3252
    %v4037 = vpack.c.b16 %v3269, %v3253
    %4806 = vmatprep.subr.bf16.mxu0 %v3271
    %4807 = vmatpush1.bf16.msra.mxu0 %v3270
    %4808 = vmatprep.subr.bf16.mxu0 %v3287
    %4809 = vmatpush1.bf16.msra.mxu0 %v3286
    %4810 = vmatprep.subr.bf16.mxu0 %v3303
    %4811 = vmatpush1.bf16.msra.mxu0 %v3302
    %4812 = vmatprep.subr.bf16.mxu0 %v3319
    %4813 = vmatpush1.bf16.msra.mxu0 %v3318
    %4814 = vmatprep.subr.bf16.mxu0 %v3335
    %4815 = vmatpush1.bf16.msra.mxu0 %v3334
    %4816 = vmatprep.subr.bf16.mxu0 %v3351
    %4817 = vmatpush1.bf16.msra.mxu0 %v3350
    %4818 = vmatprep.subr.bf16.mxu0 %v3367
    %4819 = vmatpush1.bf16.msra.mxu0 %v3366
    %4820 = vmatprep.subr.bf16.mxu0 %v3383
    %4821 = vmatpush1.bf16.msra.mxu0 %v3382
    %4822 = vmatprep.subr.bf16.mxu0 %v3399
    %4823 = vmatpush1.bf16.msra.mxu0 %v3398
    %4824 = vmatprep.subr.bf16.mxu0 %v3415
    %4825 = vmatpush1.bf16.msra.mxu0 %v3414
    %4826 = vmatprep.subr.bf16.mxu0 %v3431
    %4827 = vmatpush1.bf16.msra.mxu0 %v3430
    %4828 = vmatprep.subr.bf16.mxu0 %v3447
    %4829 = vmatpush1.bf16.msra.mxu0 %v3446
    %4830 = vmatprep.subr.bf16.mxu0 %v3463
    %4831 = vmatpush1.bf16.msra.mxu0 %v3462
    %4832 = vmatprep.subr.bf16.mxu0 %v3479
    %4833 = vmatpush1.bf16.msra.mxu0 %v3478
    %4834 = vmatprep.subr.bf16.mxu0 %v3495
    %4835 = vmatpush1.bf16.msra.mxu0 %v3494
    %4836 = vmatprep.subr.bf16.mxu0 %v3511
    %4837 = vmatpush1.bf16.msra.mxu0 %v3510
    %4838 = vmatprep.mubr.bf16.mxu0 %v955
    %4839 = vmatmul.mubr.bf16.gmra.mrb[0].mxu0 %v954
    %v4840 = vpop.f32.mrb[0].mxu0
    %v4841 = vadd.f32 %v877, %v4840
    %v4842 = vpop.f32.mrb[0].mxu0
    %v4843 = vadd.f32 %v881, %v4842
    %v4844 = vpop.f32.mrb[0].mxu0
    %v4845 = vadd.f32 %v877, %v4844
    %v4846 = vpop.f32.mrb[0].mxu0
    %v4847 = vadd.f32 %v881, %v4846
    %4848 = vdwg.mxu0
    %4849 = vmatprep.subr.bf16.mxu0 %v3527
    %4850 = vmatpush1.bf16.msra.mxu0 %v3526
    %4851 = vmatprep.subr.bf16.mxu0 %v3543
    %4852 = vmatpush1.bf16.msra.mxu0 %v3542
    %4853 = vmatprep.subr.bf16.mxu0 %v3559
    %4854 = vmatpush1.bf16.msra.mxu0 %v3558
    %4855 = vmatprep.subr.bf16.mxu0 %v3575
    %4856 = vmatpush1.bf16.msra.mxu0 %v3574
    %4857 = vmatprep.subr.bf16.mxu0 %v3591
    %4858 = vmatpush1.bf16.msra.mxu0 %v3590
    %4859 = vmatprep.subr.bf16.mxu0 %v3607
    %4860 = vmatpush1.bf16.msra.mxu0 %v3606
    %4861 = vmatprep.subr.bf16.mxu0 %v3623
    %4862 = vmatpush1.bf16.msra.mxu0 %v3622
    %4863 = vmatprep.subr.bf16.mxu0 %v3639
    %4864 = vmatpush1.bf16.msra.mxu0 %v3638
    %4865 = vmatprep.subr.bf16.mxu0 %v3655
    %4866 = vmatpush1.bf16.msra.mxu0 %v3654
    %4867 = vmatprep.subr.bf16.mxu0 %v3671
    %4868 = vmatpush1.bf16.msra.mxu0 %v3670
    %4869 = vmatprep.subr.bf16.mxu0 %v3687
    %4870 = vmatpush1.bf16.msra.mxu0 %v3686
    %4871 = vmatprep.subr.bf16.mxu0 %v3703
    %4872 = vmatpush1.bf16.msra.mxu0 %v3702
    %4873 = vmatprep.subr.bf16.mxu0 %v3719
    %4874 = vmatpush1.bf16.msra.mxu0 %v3718
    %4875 = vmatprep.subr.bf16.mxu0 %v3735
    %4876 = vmatpush1.bf16.msra.mxu0 %v3734
    %4877 = vmatprep.subr.bf16.mxu0 %v3751
    %4878 = vmatpush1.bf16.msra.mxu0 %v3750
    %4879 = vmatprep.subr.bf16.mxu0 %v3767
    %4880 = vmatpush1.bf16.msra.mxu0 %v3766
    %4881 = vmatprep.mubr.bf16.mxu0 %v957
    %4882 = vmatmul.mubr.bf16.gmra.mrb[0].mxu0 %v956
    %v4883 = vpop.f32.mrb[0].mxu0
    %v4884 = vadd.f32 %v4841, %v4883
    %v4885 = vpop.f32.mrb[0].mxu0
    %v4886 = vadd.f32 %v4843, %v4885
    %v4887 = vpop.f32.mrb[0].mxu0
    %v4888 = vadd.f32 %v4845, %v4887
    %v4889 = vpop.f32.mrb[0].mxu0
    %v4890 = vadd.f32 %v4847, %v4889
    %4891 = vdwg.mxu0
    %4892 = vmatprep.subr.bf16.mxu0 %v3783
    %4893 = vmatpush1.bf16.msra.mxu0 %v3782
    %4894 = vmatprep.subr.bf16.mxu0 %v3799
    %4895 = vmatpush1.bf16.msra.mxu0 %v3798
    %4896 = vmatprep.subr.bf16.mxu0 %v3815
    %4897 = vmatpush1.bf16.msra.mxu0 %v3814
    %4898 = vmatprep.subr.bf16.mxu0 %v3831
    %4899 = vmatpush1.bf16.msra.mxu0 %v3830
    %4900 = vmatprep.subr.bf16.mxu0 %v3847
    %4901 = vmatpush1.bf16.msra.mxu0 %v3846
    %4902 = vmatprep.subr.bf16.mxu0 %v3863
    %4903 = vmatpush1.bf16.msra.mxu0 %v3862
    %4904 = vmatprep.subr.bf16.mxu0 %v3879
    %4905 = vmatpush1.bf16.msra.mxu0 %v3878
    %4906 = vmatprep.subr.bf16.mxu0 %v3895
    %4907 = vmatpush1.bf16.msra.mxu0 %v3894
    %4908 = vmatprep.subr.bf16.mxu0 %v3911
    %4909 = vmatpush1.bf16.msra.mxu0 %v3910
    %4910 = vmatprep.subr.bf16.mxu0 %v3927
    %4911 = vmatpush1.bf16.msra.mxu0 %v3926
    %4912 = vmatprep.subr.bf16.mxu0 %v3943
    %4913 = vmatpush1.bf16.msra.mxu0 %v3942
    %4914 = vmatprep.subr.bf16.mxu0 %v3959
    %4915 = vmatpush1.bf16.msra.mxu0 %v3958
    %4916 = vmatprep.subr.bf16.mxu0 %v3975
    %4917 = vmatpush1.bf16.msra.mxu0 %v3974
    %4918 = vmatprep.subr.bf16.mxu0 %v3991
    %4919 = vmatpush1.bf16.msra.mxu0 %v3990
    %4920 = vmatprep.subr.bf16.mxu0 %v4007
    %4921 = vmatpush1.bf16.msra.mxu0 %v4006
    %4922 = vmatprep.subr.bf16.mxu0 %v4023
    %4923 = vmatpush1.bf16.msra.mxu0 %v4022
    %4924 = vmatprep.mubr.bf16.mxu0 %v959
    %4925 = vmatmul.mubr.bf16.gmra.mrb[0].mxu0 %v958
    %v4926 = vpop.f32.mrb[0].mxu0
    %v4927 = vadd.f32 %v4884, %v4926
    %v4928 = vpop.f32.mrb[0].mxu0
    %v4929 = vadd.f32 %v4886, %v4928
    %v4930 = vpop.f32.mrb[0].mxu0
    %v4931 = vadd.f32 %v4888, %v4930
    %v4932 = vpop.f32.mrb[0].mxu0
    %v4933 = vadd.f32 %v4890, %v4932
    %4934 = vdwg.mxu0
    %4935 = vmatprep.subr.bf16.mxu0 %v3273
    %4936 = vmatpush1.bf16.msra.mxu0 %v3272
    %4937 = vmatprep.subr.bf16.mxu0 %v3289
    %4938 = vmatpush1.bf16.msra.mxu0 %v3288
    %4939 = vmatprep.subr.bf16.mxu0 %v3305
    %4940 = vmatpush1.bf16.msra.mxu0 %v3304
    %4941 = vmatprep.subr.bf16.mxu0 %v3321
    %4942 = vmatpush1.bf16.msra.mxu0 %v3320
    %4943 = vmatprep.subr.bf16.mxu0 %v3337
    %4944 = vmatpush1.bf16.msra.mxu0 %v3336
    %4945 = vmatprep.subr.bf16.mxu0 %v3353
    %4946 = vmatpush1.bf16.msra.mxu0 %v3352
    %4947 = vmatprep.subr.bf16.mxu0 %v3369
    %4948 = vmatpush1.bf16.msra.mxu0 %v3368
    %4949 = vmatprep.subr.bf16.mxu0 %v3385
    %4950 = vmatpush1.bf16.msra.mxu0 %v3384
    %4951 = vmatprep.subr.bf16.mxu0 %v3401
    %4952 = vmatpush1.bf16.msra.mxu0 %v3400
    %4953 = vmatprep.subr.bf16.mxu0 %v3417
    %4954 = vmatpush1.bf16.msra.mxu0 %v3416
    %4955 = vmatprep.subr.bf16.mxu0 %v3433
    %4956 = vmatpush1.bf16.msra.mxu0 %v3432
    %4957 = vmatprep.subr.bf16.mxu0 %v3449
    %4958 = vmatpush1.bf16.msra.mxu0 %v3448
    %4959 = vmatprep.subr.bf16.mxu0 %v3465
    %4960 = vmatpush1.bf16.msra.mxu0 %v3464
    %4961 = vmatprep.subr.bf16.mxu0 %v3481
    %4962 = vmatpush1.bf16.msra.mxu0 %v3480
    %4963 = vmatprep.subr.bf16.mxu0 %v3497
    %4964 = vmatpush1.bf16.msra.mxu0 %v3496
    %4965 = vmatprep.subr.bf16.mxu0 %v3513
    %4966 = vmatpush1.bf16.msra.mxu0 %v3512
    %4967 = vmatprep.mubr.bf16.mxu0 %v955
    %4968 = vmatmul.mubr.bf16.gmra.mrb[0].mxu0 %v954
    %v4969 = vpop.f32.mrb[0].mxu0
    %v4970 = vadd.f32 %v885, %v4969
    %v4971 = vpop.f32.mrb[0].mxu0
    %v4972 = vadd.f32 %v889, %v4971
    %v4973 = vpop.f32.mrb[0].mxu0
    %v4974 = vadd.f32 %v885, %v4973
    %v4975 = vpop.f32.mrb[0].mxu0
    %v4976 = vadd.f32 %v889, %v4975
    %4977 = vdwg.mxu0
    %4978 = vmatprep.subr.bf16.mxu0 %v3529
    %4979 = vmatpush1.bf16.msra.mxu0 %v3528
    %4980 = vmatprep.subr.bf16.mxu0 %v3545
    %4981 = vmatpush1.bf16.msra.mxu0 %v3544
    %4982 = vmatprep.subr.bf16.mxu0 %v3561
    %4983 = vmatpush1.bf16.msra.mxu0 %v3560
    %4984 = vmatprep.subr.bf16.mxu0 %v3577
    %4985 = vmatpush1.bf16.msra.mxu0 %v3576
    %4986 = vmatprep.subr.bf16.mxu0 %v3593
    %4987 = vmatpush1.bf16.msra.mxu0 %v3592
    %4988 = vmatprep.subr.bf16.mxu0 %v3609
    %4989 = vmatpush1.bf16.msra.mxu0 %v3608
    %4990 = vmatprep.subr.bf16.mxu0 %v3625
    %4991 = vmatpush1.bf16.msra.mxu0 %v3624
    %4992 = vmatprep.subr.bf16.mxu0 %v3641
    %4993 = vmatpush1.bf16.msra.mxu0 %v3640
    %4994 = vmatprep.subr.bf16.mxu0 %v3657
    %4995 = vmatpush1.bf16.msra.mxu0 %v3656
    %4996 = vmatprep.subr.bf16.mxu0 %v3673
    %4997 = vmatpush1.bf16.msra.mxu0 %v3672
    %4998 = vmatprep.subr.bf16.mxu0 %v3689
    %4999 = vmatpush1.bf16.msra.mxu0 %v3688
    %5000 = vmatprep.subr.bf16.mxu0 %v3705
    %5001 = vmatpush1.bf16.msra.mxu0 %v3704
    %5002 = vmatprep.subr.bf16.mxu0 %v3721
    %5003 = vmatpush1.bf16.msra.mxu0 %v3720
    %5004 = vmatprep.subr.bf16.mxu0 %v3737
    %5005 = vmatpush1.bf16.msra.mxu0 %v3736
    %5006 = vmatprep.subr.bf16.mxu0 %v3753
    %5007 = vmatpush1.bf16.msra.mxu0 %v3752
    %5008 = vmatprep.subr.bf16.mxu0 %v3769
    %5009 = vmatpush1.bf16.msra.mxu0 %v3768
    %5010 = vmatprep.mubr.bf16.mxu0 %v957
    %5011 = vmatmul.mubr.bf16.gmra.mrb[0].mxu0 %v956
    %v5012 = vpop.f32.mrb[0].mxu0
    %v5013 = vadd.f32 %v4970, %v5012
    %v5014 = vpop.f32.mrb[0].mxu0
    %v5015 = vadd.f32 %v4972, %v5014
    %v5016 = vpop.f32.mrb[0].mxu0
    %v5017 = vadd.f32 %v4974, %v5016
    %v5018 = vpop.f32.mrb[0].mxu0
    %v5019 = vadd.f32 %v4976, %v5018
    %5020 = vdwg.mxu0
    %5021 = vmatprep.subr.bf16.mxu0 %v3785
    %5022 = vmatpush1.bf16.msra.mxu0 %v3784
    %5023 = vmatprep.subr.bf16.mxu0 %v3801
    %5024 = vmatpush1.bf16.msra.mxu0 %v3800
    %5025 = vmatprep.subr.bf16.mxu0 %v3817
    %5026 = vmatpush1.bf16.msra.mxu0 %v3816
    %5027 = vmatprep.subr.bf16.mxu0 %v3833
    %5028 = vmatpush1.bf16.msra.mxu0 %v3832
    %5029 = vmatprep.subr.bf16.mxu0 %v3849
    %5030 = vmatpush1.bf16.msra.mxu0 %v3848
    %5031 = vmatprep.subr.bf16.mxu0 %v3865
    %5032 = vmatpush1.bf16.msra.mxu0 %v3864
    %5033 = vmatprep.subr.bf16.mxu0 %v3881
    %5034 = vmatpush1.bf16.msra.mxu0 %v3880
    %5035 = vmatprep.subr.bf16.mxu0 %v3897
    %5036 = vmatpush1.bf16.msra.mxu0 %v3896
    %5037 = vmatprep.subr.bf16.mxu0 %v3913
    %5038 = vmatpush1.bf16.msra.mxu0 %v3912
    %5039 = vmatprep.subr.bf16.mxu0 %v3929
    %5040 = vmatpush1.bf16.msra.mxu0 %v3928
    %5041 = vmatprep.subr.bf16.mxu0 %v3945
    %5042 = vmatpush1.bf16.msra.mxu0 %v3944
    %5043 = vmatprep.subr.bf16.mxu0 %v3961
    %5044 = vmatpush1.bf16.msra.mxu0 %v3960
    %5045 = vmatprep.subr.bf16.mxu0 %v3977
    %5046 = vmatpush1.bf16.msra.mxu0 %v3976
    %5047 = vmatprep.subr.bf16.mxu0 %v3993
    %5048 = vmatpush1.bf16.msra.mxu0 %v3992
    %5049 = vmatprep.subr.bf16.mxu0 %v4009
    %5050 = vmatpush1.bf16.msra.mxu0 %v4008
    %5051 = vmatprep.subr.bf16.mxu0 %v4025
    %5052 = vmatpush1.bf16.msra.mxu0 %v4024
    %5053 = vmatprep.mubr.bf16.mxu0 %v959
    %5054 = vmatmul.mubr.bf16.gmra.mrb[0].mxu0 %v958
    %v5055 = vpop.f32.mrb[0].mxu0
    %v5056 = vadd.f32 %v5013, %v5055
    %v5057 = vpop.f32.mrb[0].mxu0
    %v5058 = vadd.f32 %v5015, %v5057
    %v5059 = vpop.f32.mrb[0].mxu0
    %v5060 = vadd.f32 %v5017, %v5059
    %v5061 = vpop.f32.mrb[0].mxu0
    %v5062 = vadd.f32 %v5019, %v5061
    %5063 = vdwg.mxu0
    %5064 = vmatprep.subr.bf16.mxu0 %v3275
    %5065 = vmatpush1.bf16.msra.mxu0 %v3274
    %5066 = vmatprep.subr.bf16.mxu0 %v3291
    %5067 = vmatpush1.bf16.msra.mxu0 %v3290
    %5068 = vmatprep.subr.bf16.mxu0 %v3307
    %5069 = vmatpush1.bf16.msra.mxu0 %v3306
    %5070 = vmatprep.subr.bf16.mxu0 %v3323
    %5071 = vmatpush1.bf16.msra.mxu0 %v3322
    %5072 = vmatprep.subr.bf16.mxu0 %v3339
    %5073 = vmatpush1.bf16.msra.mxu0 %v3338
    %5074 = vmatprep.subr.bf16.mxu0 %v3355
    %5075 = vmatpush1.bf16.msra.mxu0 %v3354
    %5076 = vmatprep.subr.bf16.mxu0 %v3371
    %5077 = vmatpush1.bf16.msra.mxu0 %v3370
    %5078 = vmatprep.subr.bf16.mxu0 %v3387
    %5079 = vmatpush1.bf16.msra.mxu0 %v3386
    %5080 = vmatprep.subr.bf16.mxu0 %v3403
    %5081 = vmatpush1.bf16.msra.mxu0 %v3402
    %5082 = vmatprep.subr.bf16.mxu0 %v3419
    %5083 = vmatpush1.bf16.msra.mxu0 %v3418
    %5084 = vmatprep.subr.bf16.mxu0 %v3435
    %5085 = vmatpush1.bf16.msra.mxu0 %v3434
    %5086 = vmatprep.subr.bf16.mxu0 %v3451
    %5087 = vmatpush1.bf16.msra.mxu0 %v3450
    %5088 = vmatprep.subr.bf16.mxu0 %v3467
    %5089 = vmatpush1.bf16.msra.mxu0 %v3466
    %5090 = vmatprep.subr.bf16.mxu0 %v3483
    %5091 = vmatpush1.bf16.msra.mxu0 %v3482
    %5092 = vmatprep.subr.bf16.mxu0 %v3499
    %5093 = vmatpush1.bf16.msra.mxu0 %v3498
    %5094 = vmatprep.subr.bf16.mxu0 %v3515
    %5095 = vmatpush1.bf16.msra.mxu0 %v3514
    %5096 = vmatprep.mubr.bf16.mxu0 %v955
    %5097 = vmatmul.mubr.bf16.gmra.mrb[0].mxu0 %v954
    %v5098 = vpop.f32.mrb[0].mxu0
    %v5099 = vadd.f32 %v893, %v5098
    %v5100 = vpop.f32.mrb[0].mxu0
    %v5101 = vadd.f32 %v897, %v5100
    %v5102 = vpop.f32.mrb[0].mxu0
    %v5103 = vadd.f32 %v893, %v5102
    %v5104 = vpop.f32.mrb[0].mxu0
    %v5105 = vadd.f32 %v897, %v5104
    %5106 = vdwg.mxu0
    %5107 = vmatprep.subr.bf16.mxu0 %v3531
    %5108 = vmatpush1.bf16.msra.mxu0 %v3530
    %5109 = vmatprep.subr.bf16.mxu0 %v3547
    %5110 = vmatpush1.bf16.msra.mxu0 %v3546
    %5111 = vmatprep.subr.bf16.mxu0 %v3563
    %5112 = vmatpush1.bf16.msra.mxu0 %v3562
    %5113 = vmatprep.subr.bf16.mxu0 %v3579
    %5114 = vmatpush1.bf16.msra.mxu0 %v3578
    %5115 = vmatprep.subr.bf16.mxu0 %v3595
    %5116 = vmatpush1.bf16.msra.mxu0 %v3594
    %5117 = vmatprep.subr.bf16.mxu0 %v3611
    %5118 = vmatpush1.bf16.msra.mxu0 %v3610
    %5119 = vmatprep.subr.bf16.mxu0 %v3627
    %5120 = vmatpush1.bf16.msra.mxu0 %v3626
    %5121 = vmatprep.subr.bf16.mxu0 %v3643
    %5122 = vmatpush1.bf16.msra.mxu0 %v3642
    %5123 = vmatprep.subr.bf16.mxu0 %v3659
    %5124 = vmatpush1.bf16.msra.mxu0 %v3658
    %5125 = vmatprep.subr.bf16.mxu0 %v3675
    %5126 = vmatpush1.bf16.msra.mxu0 %v3674
    %5127 = vmatprep.subr.bf16.mxu0 %v3691
    %5128 = vmatpush1.bf16.msra.mxu0 %v3690
    %5129 = vmatprep.subr.bf16.mxu0 %v3707
    %5130 = vmatpush1.bf16.msra.mxu0 %v3706
    %5131 = vmatprep.subr.bf16.mxu0 %v3723
    %5132 = vmatpush1.bf16.msra.mxu0 %v3722
    %5133 = vmatprep.subr.bf16.mxu0 %v3739
    %5134 = vmatpush1.bf16.msra.mxu0 %v3738
    %5135 = vmatprep.subr.bf16.mxu0 %v3755
    %5136 = vmatpush1.bf16.msra.mxu0 %v3754
    %5137 = vmatprep.subr.bf16.mxu0 %v3771
    %5138 = vmatpush1.bf16.msra.mxu0 %v3770
    %5139 = vmatprep.mubr.bf16.mxu0 %v957
    %5140 = vmatmul.mubr.bf16.gmra.mrb[0].mxu0 %v956
    %v5141 = vpop.f32.mrb[0].mxu0
    %v5142 = vadd.f32 %v5099, %v5141
    %v5143 = vpop.f32.mrb[0].mxu0
    %v5144 = vadd.f32 %v5101, %v5143
    %v5145 = vpop.f32.mrb[0].mxu0
    %v5146 = vadd.f32 %v5103, %v5145
    %v5147 = vpop.f32.mrb[0].mxu0
    %v5148 = vadd.f32 %v5105, %v5147
    %5149 = vdwg.mxu0
    %5150 = vmatprep.subr.bf16.mxu0 %v3787
    %5151 = vmatpush1.bf16.msra.mxu0 %v3786
    %5152 = vmatprep.subr.bf16.mxu0 %v3803
    %5153 = vmatpush1.bf16.msra.mxu0 %v3802
    %5154 = vmatprep.subr.bf16.mxu0 %v3819
    %5155 = vmatpush1.bf16.msra.mxu0 %v3818
    %5156 = vmatprep.subr.bf16.mxu0 %v3835
    %5157 = vmatpush1.bf16.msra.mxu0 %v3834
    %5158 = vmatprep.subr.bf16.mxu0 %v3851
    %5159 = vmatpush1.bf16.msra.mxu0 %v3850
    %5160 = vmatprep.subr.bf16.mxu0 %v3867
    %5161 = vmatpush1.bf16.msra.mxu0 %v3866
    %5162 = vmatprep.subr.bf16.mxu0 %v3883
    %5163 = vmatpush1.bf16.msra.mxu0 %v3882
    %5164 = vmatprep.subr.bf16.mxu0 %v3899
    %5165 = vmatpush1.bf16.msra.mxu0 %v3898
    %5166 = vmatprep.subr.bf16.mxu0 %v3915
    %5167 = vmatpush1.bf16.msra.mxu0 %v3914
    %5168 = vmatprep.subr.bf16.mxu0 %v3931
    %5169 = vmatpush1.bf16.msra.mxu0 %v3930
    %5170 = vmatprep.subr.bf16.mxu0 %v3947
    %5171 = vmatpush1.bf16.msra.mxu0 %v3946
    %5172 = vmatprep.subr.bf16.mxu0 %v3963
    %5173 = vmatpush1.bf16.msra.mxu0 %v3962
    %5174 = vmatprep.subr.bf16.mxu0 %v3979
    %5175 = vmatpush1.bf16.msra.mxu0 %v3978
    %5176 = vmatprep.subr.bf16.mxu0 %v3995
    %5177 = vmatpush1.bf16.msra.mxu0 %v3994
    %5178 = vmatprep.subr.bf16.mxu0 %v4011
    %5179 = vmatpush1.bf16.msra.mxu0 %v4010
    %5180 = vmatprep.subr.bf16.mxu0 %v4027
    %5181 = vmatpush1.bf16.msra.mxu0 %v4026
    %5182 = vmatprep.mubr.bf16.mxu0 %v959
    %5183 = vmatmul.mubr.bf16.gmra.mrb[0].mxu0 %v958
    %v5184 = vpop.f32.mrb[0].mxu0
    %v5185 = vadd.f32 %v5142, %v5184
    %v5186 = vpop.f32.mrb[0].mxu0
    %v5187 = vadd.f32 %v5144, %v5186
    %v5188 = vpop.f32.mrb[0].mxu0
    %v5189 = vadd.f32 %v5146, %v5188
    %v5190 = vpop.f32.mrb[0].mxu0
    %v5191 = vadd.f32 %v5148, %v5190
    %5192 = vdwg.mxu0
    %5193 = vmatprep.subr.bf16.mxu0 %v3277
    %5194 = vmatpush1.bf16.msra.mxu0 %v3276
    %5195 = vmatprep.subr.bf16.mxu0 %v3293
    %5196 = vmatpush1.bf16.msra.mxu0 %v3292
    %5197 = vmatprep.subr.bf16.mxu0 %v3309
    %5198 = vmatpush1.bf16.msra.mxu0 %v3308
    %5199 = vmatprep.subr.bf16.mxu0 %v3325
    %5200 = vmatpush1.bf16.msra.mxu0 %v3324
    %5201 = vmatprep.subr.bf16.mxu0 %v3341
    %5202 = vmatpush1.bf16.msra.mxu0 %v3340
    %5203 = vmatprep.subr.bf16.mxu0 %v3357
    %5204 = vmatpush1.bf16.msra.mxu0 %v3356
    %5205 = vmatprep.subr.bf16.mxu0 %v3373
    %5206 = vmatpush1.bf16.msra.mxu0 %v3372
    %5207 = vmatprep.subr.bf16.mxu0 %v3389
    %5208 = vmatpush1.bf16.msra.mxu0 %v3388
    %5209 = vmatprep.subr.bf16.mxu0 %v3405
    %5210 = vmatpush1.bf16.msra.mxu0 %v3404
    %5211 = vmatprep.subr.bf16.mxu0 %v3421
    %5212 = vmatpush1.bf16.msra.mxu0 %v3420
    %5213 = vmatprep.subr.bf16.mxu0 %v3437
    %5214 = vmatpush1.bf16.msra.mxu0 %v3436
    %5215 = vmatprep.subr.bf16.mxu0 %v3453
    %5216 = vmatpush1.bf16.msra.mxu0 %v3452
    %5217 = vmatprep.subr.bf16.mxu0 %v3469
    %5218 = vmatpush1.bf16.msra.mxu0 %v3468
    %5219 = vmatprep.subr.bf16.mxu0 %v3485
    %5220 = vmatpush1.bf16.msra.mxu0 %v3484
    %5221 = vmatprep.subr.bf16.mxu0 %v3501
    %5222 = vmatpush1.bf16.msra.mxu0 %v3500
    %5223 = vmatprep.subr.bf16.mxu0 %v3517
    %5224 = vmatpush1.bf16.msra.mxu0 %v3516
    %5225 = vmatprep.mubr.bf16.mxu0 %v955
    %5226 = vmatmul.mubr.bf16.gmra.mrb[0].mxu0 %v954
    %v5227 = vpop.f32.mrb[0].mxu0
    %v5228 = vadd.f32 %v901, %v5227
    %v5229 = vpop.f32.mrb[0].mxu0
    %v5230 = vadd.f32 %v905, %v5229
    %v5231 = vpop.f32.mrb[0].mxu0
    %v5232 = vadd.f32 %v901, %v5231
    %v5233 = vpop.f32.mrb[0].mxu0
    %v5234 = vadd.f32 %v905, %v5233
    %5235 = vdwg.mxu0
    %5236 = vmatprep.subr.bf16.mxu0 %v3533
    %5237 = vmatpush1.bf16.msra.mxu0 %v3532
    %5238 = vmatprep.subr.bf16.mxu0 %v3549
    %5239 = vmatpush1.bf16.msra.mxu0 %v3548
    %5240 = vmatprep.subr.bf16.mxu0 %v3565
    %5241 = vmatpush1.bf16.msra.mxu0 %v3564
    %5242 = vmatprep.subr.bf16.mxu0 %v3581
    %5243 = vmatpush1.bf16.msra.mxu0 %v3580
    %5244 = vmatprep.subr.bf16.mxu0 %v3597
    %5245 = vmatpush1.bf16.msra.mxu0 %v3596
    %5246 = vmatprep.subr.bf16.mxu0 %v3613
    %5247 = vmatpush1.bf16.msra.mxu0 %v3612
    %5248 = vmatprep.subr.bf16.mxu0 %v3629
    %5249 = vmatpush1.bf16.msra.mxu0 %v3628
    %5250 = vmatprep.subr.bf16.mxu0 %v3645
    %5251 = vmatpush1.bf16.msra.mxu0 %v3644
    %5252 = vmatprep.subr.bf16.mxu0 %v3661
    %5253 = vmatpush1.bf16.msra.mxu0 %v3660
    %5254 = vmatprep.subr.bf16.mxu0 %v3677
    %5255 = vmatpush1.bf16.msra.mxu0 %v3676
    %5256 = vmatprep.subr.bf16.mxu0 %v3693
    %5257 = vmatpush1.bf16.msra.mxu0 %v3692
    %5258 = vmatprep.subr.bf16.mxu0 %v3709
    %5259 = vmatpush1.bf16.msra.mxu0 %v3708
    %5260 = vmatprep.subr.bf16.mxu0 %v3725
    %5261 = vmatpush1.bf16.msra.mxu0 %v3724
    %5262 = vmatprep.subr.bf16.mxu0 %v3741
    %5263 = vmatpush1.bf16.msra.mxu0 %v3740
    %5264 = vmatprep.subr.bf16.mxu0 %v3757
    %5265 = vmatpush1.bf16.msra.mxu0 %v3756
    %5266 = vmatprep.subr.bf16.mxu0 %v3773
    %5267 = vmatpush1.bf16.msra.mxu0 %v3772
    %5268 = vmatprep.mubr.bf16.mxu0 %v957
    %5269 = vmatmul.mubr.bf16.gmra.mrb[0].mxu0 %v956
    %v5270 = vpop.f32.mrb[0].mxu0
    %v5271 = vadd.f32 %v5228, %v5270
    %v5272 = vpop.f32.mrb[0].mxu0
    %v5273 = vadd.f32 %v5230, %v5272
    %v5274 = vpop.f32.mrb[0].mxu0
    %v5275 = vadd.f32 %v5232, %v5274
    %v5276 = vpop.f32.mrb[0].mxu0
    %v5277 = vadd.f32 %v5234, %v5276
    %5278 = vdwg.mxu0
    %5279 = vmatprep.subr.bf16.mxu0 %v3789
    %5280 = vmatpush1.bf16.msra.mxu0 %v3788
    %5281 = vmatprep.subr.bf16.mxu0 %v3805
    %5282 = vmatpush1.bf16.msra.mxu0 %v3804
    %5283 = vmatprep.subr.bf16.mxu0 %v3821
    %5284 = vmatpush1.bf16.msra.mxu0 %v3820
    %5285 = vmatprep.subr.bf16.mxu0 %v3837
    %5286 = vmatpush1.bf16.msra.mxu0 %v3836
    %5287 = vmatprep.subr.bf16.mxu0 %v3853
    %5288 = vmatpush1.bf16.msra.mxu0 %v3852
    %5289 = vmatprep.subr.bf16.mxu0 %v3869
    %5290 = vmatpush1.bf16.msra.mxu0 %v3868
    %5291 = vmatprep.subr.bf16.mxu0 %v3885
    %5292 = vmatpush1.bf16.msra.mxu0 %v3884
    %5293 = vmatprep.subr.bf16.mxu0 %v3901
    %5294 = vmatpush1.bf16.msra.mxu0 %v3900
    %5295 = vmatprep.subr.bf16.mxu0 %v3917
    %5296 = vmatpush1.bf16.msra.mxu0 %v3916
    %5297 = vmatprep.subr.bf16.mxu0 %v3933
    %5298 = vmatpush1.bf16.msra.mxu0 %v3932
    %5299 = vmatprep.subr.bf16.mxu0 %v3949
    %5300 = vmatpush1.bf16.msra.mxu0 %v3948
    %5301 = vmatprep.subr.bf16.mxu0 %v3965
    %5302 = vmatpush1.bf16.msra.mxu0 %v3964
    %5303 = vmatprep.subr.bf16.mxu0 %v3981
    %5304 = vmatpush1.bf16.msra.mxu0 %v3980
    %5305 = vmatprep.subr.bf16.mxu0 %v3997
    %5306 = vmatpush1.bf16.msra.mxu0 %v3996
    %5307 = vmatprep.subr.bf16.mxu0 %v4013
    %5308 = vmatpush1.bf16.msra.mxu0 %v4012
    %5309 = vmatprep.subr.bf16.mxu0 %v4029
    %5310 = vmatpush1.bf16.msra.mxu0 %v4028
    %5311 = vmatprep.mubr.bf16.mxu0 %v959
    %5312 = vmatmul.mubr.bf16.gmra.mrb[0].mxu0 %v958
    %v5313 = vpop.f32.mrb[0].mxu0
    %v5314 = vadd.f32 %v5271, %v5313
    %v5315 = vpop.f32.mrb[0].mxu0
    %v5316 = vadd.f32 %v5273, %v5315
    %v5317 = vpop.f32.mrb[0].mxu0
    %v5318 = vadd.f32 %v5275, %v5317
    %v5319 = vpop.f32.mrb[0].mxu0
    %v5320 = vadd.f32 %v5277, %v5319
    %5321 = vdwg.mxu0
    %5322 = vmatprep.subr.bf16.mxu0 %v3279
    %5323 = vmatpush1.bf16.msra.mxu0 %v3278
    %5324 = vmatprep.subr.bf16.mxu0 %v3295
    %5325 = vmatpush1.bf16.msra.mxu0 %v3294
    %5326 = vmatprep.subr.bf16.mxu0 %v3311
    %5327 = vmatpush1.bf16.msra.mxu0 %v3310
    %5328 = vmatprep.subr.bf16.mxu0 %v3327
    %5329 = vmatpush1.bf16.msra.mxu0 %v3326
    %5330 = vmatprep.subr.bf16.mxu0 %v3343
    %5331 = vmatpush1.bf16.msra.mxu0 %v3342
    %5332 = vmatprep.subr.bf16.mxu0 %v3359
    %5333 = vmatpush1.bf16.msra.mxu0 %v3358
    %5334 = vmatprep.subr.bf16.mxu0 %v3375
    %5335 = vmatpush1.bf16.msra.mxu0 %v3374
    %5336 = vmatprep.subr.bf16.mxu0 %v3391
    %5337 = vmatpush1.bf16.msra.mxu0 %v3390
    %5338 = vmatprep.subr.bf16.mxu0 %v3407
    %5339 = vmatpush1.bf16.msra.mxu0 %v3406
    %5340 = vmatprep.subr.bf16.mxu0 %v3423
    %5341 = vmatpush1.bf16.msra.mxu0 %v3422
    %5342 = vmatprep.subr.bf16.mxu0 %v3439
    %5343 = vmatpush1.bf16.msra.mxu0 %v3438
    %5344 = vmatprep.subr.bf16.mxu0 %v3455
    %5345 = vmatpush1.bf16.msra.mxu0 %v3454
    %5346 = vmatprep.subr.bf16.mxu0 %v3471
    %5347 = vmatpush1.bf16.msra.mxu0 %v3470
    %5348 = vmatprep.subr.bf16.mxu0 %v3487
    %5349 = vmatpush1.bf16.msra.mxu0 %v3486
    %5350 = vmatprep.subr.bf16.mxu0 %v3503
    %5351 = vmatpush1.bf16.msra.mxu0 %v3502
    %5352 = vmatprep.subr.bf16.mxu0 %v3519
    %5353 = vmatpush1.bf16.msra.mxu0 %v3518
    %5354 = vmatprep.mubr.bf16.mxu0 %v955
    %5355 = vmatmul.mubr.bf16.gmra.mrb[0].mxu0 %v954
    %v5356 = vpop.f32.mrb[0].mxu0
    %v5357 = vadd.f32 %v909, %v5356
    %v5358 = vpop.f32.mrb[0].mxu0
    %v5359 = vadd.f32 %v913, %v5358
    %v5360 = vpop.f32.mrb[0].mxu0
    %v5361 = vadd.f32 %v909, %v5360
    %v5362 = vpop.f32.mrb[0].mxu0
    %v5363 = vadd.f32 %v913, %v5362
    %5364 = vdwg.mxu0
    %5365 = vmatprep.subr.bf16.mxu0 %v3535
    %5366 = vmatpush1.bf16.msra.mxu0 %v3534
    %5367 = vmatprep.subr.bf16.mxu0 %v3551
    %5368 = vmatpush1.bf16.msra.mxu0 %v3550
    %5369 = vmatprep.subr.bf16.mxu0 %v3567
    %5370 = vmatpush1.bf16.msra.mxu0 %v3566
    %5371 = vmatprep.subr.bf16.mxu0 %v3583
    %5372 = vmatpush1.bf16.msra.mxu0 %v3582
    %5373 = vmatprep.subr.bf16.mxu0 %v3599
    %5374 = vmatpush1.bf16.msra.mxu0 %v3598
    %5375 = vmatprep.subr.bf16.mxu0 %v3615
    %5376 = vmatpush1.bf16.msra.mxu0 %v3614
    %5377 = vmatprep.subr.bf16.mxu0 %v3631
    %5378 = vmatpush1.bf16.msra.mxu0 %v3630
    %5379 = vmatprep.subr.bf16.mxu0 %v3647
    %5380 = vmatpush1.bf16.msra.mxu0 %v3646
    %5381 = vmatprep.subr.bf16.mxu0 %v3663
    %5382 = vmatpush1.bf16.msra.mxu0 %v3662
    %5383 = vmatprep.subr.bf16.mxu0 %v3679
    %5384 = vmatpush1.bf16.msra.mxu0 %v3678
    %5385 = vmatprep.subr.bf16.mxu0 %v3695
    %5386 = vmatpush1.bf16.msra.mxu0 %v3694
    %5387 = vmatprep.subr.bf16.mxu0 %v3711
    %5388 = vmatpush1.bf16.msra.mxu0 %v3710
    %5389 = vmatprep.subr.bf16.mxu0 %v3727
    %5390 = vmatpush1.bf16.msra.mxu0 %v3726
    %5391 = vmatprep.subr.bf16.mxu0 %v3743
    %5392 = vmatpush1.bf16.msra.mxu0 %v3742
    %5393 = vmatprep.subr.bf16.mxu0 %v3759
    %5394 = vmatpush1.bf16.msra.mxu0 %v3758
    %5395 = vmatprep.subr.bf16.mxu0 %v3775
    %5396 = vmatpush1.bf16.msra.mxu0 %v3774
    %5397 = vmatprep.mubr.bf16.mxu0 %v957
    %5398 = vmatmul.mubr.bf16.gmra.mrb[0].mxu0 %v956
    %v5399 = vpop.f32.mrb[0].mxu0
    %v5400 = vadd.f32 %v5357, %v5399
    %v5401 = vpop.f32.mrb[0].mxu0
    %v5402 = vadd.f32 %v5359, %v5401
    %v5403 = vpop.f32.mrb[0].mxu0
    %v5404 = vadd.f32 %v5361, %v5403
    %v5405 = vpop.f32.mrb[0].mxu0
    %v5406 = vadd.f32 %v5363, %v5405
    %5407 = vdwg.mxu0
    %5408 = vmatprep.subr.bf16.mxu0 %v3791
    %5409 = vmatpush1.bf16.msra.mxu0 %v3790
    %5410 = vmatprep.subr.bf16.mxu0 %v3807
    %5411 = vmatpush1.bf16.msra.mxu0 %v3806
    %5412 = vmatprep.subr.bf16.mxu0 %v3823
    %5413 = vmatpush1.bf16.msra.mxu0 %v3822
    %5414 = vmatprep.subr.bf16.mxu0 %v3839
    %5415 = vmatpush1.bf16.msra.mxu0 %v3838
    %5416 = vmatprep.subr.bf16.mxu0 %v3855
    %5417 = vmatpush1.bf16.msra.mxu0 %v3854
    %5418 = vmatprep.subr.bf16.mxu0 %v3871
    %5419 = vmatpush1.bf16.msra.mxu0 %v3870
    %5420 = vmatprep.subr.bf16.mxu0 %v3887
    %5421 = vmatpush1.bf16.msra.mxu0 %v3886
    %5422 = vmatprep.subr.bf16.mxu0 %v3903
    %5423 = vmatpush1.bf16.msra.mxu0 %v3902
    %5424 = vmatprep.subr.bf16.mxu0 %v3919
    %5425 = vmatpush1.bf16.msra.mxu0 %v3918
    %5426 = vmatprep.subr.bf16.mxu0 %v3935
    %5427 = vmatpush1.bf16.msra.mxu0 %v3934
    %5428 = vmatprep.subr.bf16.mxu0 %v3951
    %5429 = vmatpush1.bf16.msra.mxu0 %v3950
    %5430 = vmatprep.subr.bf16.mxu0 %v3967
    %5431 = vmatpush1.bf16.msra.mxu0 %v3966
    %5432 = vmatprep.subr.bf16.mxu0 %v3983
    %5433 = vmatpush1.bf16.msra.mxu0 %v3982
    %5434 = vmatprep.subr.bf16.mxu0 %v3999
    %5435 = vmatpush1.bf16.msra.mxu0 %v3998
    %5436 = vmatprep.subr.bf16.mxu0 %v4015
    %5437 = vmatpush1.bf16.msra.mxu0 %v4014
    %5438 = vmatprep.subr.bf16.mxu0 %v4031
    %5439 = vmatpush1.bf16.msra.mxu0 %v4030
    %5440 = vmatprep.mubr.bf16.mxu0 %v959
    %5441 = vmatmul.mubr.bf16.gmra.mrb[0].mxu0 %v958
    %v5442 = vpop.f32.mrb[0].mxu0
    %v5443 = vadd.f32 %v5400, %v5442
    %v5444 = vpop.f32.mrb[0].mxu0
    %v5445 = vadd.f32 %v5402, %v5444
    %v5446 = vpop.f32.mrb[0].mxu0
    %v5447 = vadd.f32 %v5404, %v5446
    %v5448 = vpop.f32.mrb[0].mxu0
    %v5449 = vadd.f32 %v5406, %v5448
    %5450 = vdwg.mxu0
    %5451 = vmatprep.subr.bf16.mxu0 %v3281
    %5452 = vmatpush1.bf16.msra.mxu0 %v3280
    %5453 = vmatprep.subr.bf16.mxu0 %v3297
    %5454 = vmatpush1.bf16.msra.mxu0 %v3296
    %5455 = vmatprep.subr.bf16.mxu0 %v3313
    %5456 = vmatpush1.bf16.msra.mxu0 %v3312
    %5457 = vmatprep.subr.bf16.mxu0 %v3329
    %5458 = vmatpush1.bf16.msra.mxu0 %v3328
    %5459 = vmatprep.subr.bf16.mxu0 %v3345
    %5460 = vmatpush1.bf16.msra.mxu0 %v3344
    %5461 = vmatprep.subr.bf16.mxu0 %v3361
    %5462 = vmatpush1.bf16.msra.mxu0 %v3360
    %5463 = vmatprep.subr.bf16.mxu0 %v3377
    %5464 = vmatpush1.bf16.msra.mxu0 %v3376
    %5465 = vmatprep.subr.bf16.mxu0 %v3393
    %5466 = vmatpush1.bf16.msra.mxu0 %v3392
    %5467 = vmatprep.subr.bf16.mxu0 %v3409
    %5468 = vmatpush1.bf16.msra.mxu0 %v3408
    %5469 = vmatprep.subr.bf16.mxu0 %v3425
    %5470 = vmatpush1.bf16.msra.mxu0 %v3424
    %5471 = vmatprep.subr.bf16.mxu0 %v3441
    %5472 = vmatpush1.bf16.msra.mxu0 %v3440
    %5473 = vmatprep.subr.bf16.mxu0 %v3457
    %5474 = vmatpush1.bf16.msra.mxu0 %v3456
    %5475 = vmatprep.subr.bf16.mxu0 %v3473
    %5476 = vmatpush1.bf16.msra.mxu0 %v3472
    %5477 = vmatprep.subr.bf16.mxu0 %v3489
    %5478 = vmatpush1.bf16.msra.mxu0 %v3488
    %5479 = vmatprep.subr.bf16.mxu0 %v3505
    %5480 = vmatpush1.bf16.msra.mxu0 %v3504
    %5481 = vmatprep.subr.bf16.mxu0 %v3521
    %5482 = vmatpush1.bf16.msra.mxu0 %v3520
    %5483 = vmatprep.mubr.bf16.mxu0 %v955
    %5484 = vmatmul.mubr.bf16.gmra.mrb[0].mxu0 %v954
    %v5485 = vpop.f32.mrb[0].mxu0
    %v5486 = vadd.f32 %v917, %v5485
    %v5487 = vpop.f32.mrb[0].mxu0
    %v5488 = vadd.f32 %v921, %v5487
    %v5489 = vpop.f32.mrb[0].mxu0
    %v5490 = vadd.f32 %v917, %v5489
    %v5491 = vpop.f32.mrb[0].mxu0
    %v5492 = vadd.f32 %v921, %v5491
    %5493 = vdwg.mxu0
    %5494 = vmatprep.subr.bf16.mxu0 %v3537
    %5495 = vmatpush1.bf16.msra.mxu0 %v3536
    %5496 = vmatprep.subr.bf16.mxu0 %v3553
    %5497 = vmatpush1.bf16.msra.mxu0 %v3552
    %5498 = vmatprep.subr.bf16.mxu0 %v3569
    %5499 = vmatpush1.bf16.msra.mxu0 %v3568
    %5500 = vmatprep.subr.bf16.mxu0 %v3585
    %5501 = vmatpush1.bf16.msra.mxu0 %v3584
    %5502 = vmatprep.subr.bf16.mxu0 %v3601
    %5503 = vmatpush1.bf16.msra.mxu0 %v3600
    %5504 = vmatprep.subr.bf16.mxu0 %v3617
    %5505 = vmatpush1.bf16.msra.mxu0 %v3616
    %5506 = vmatprep.subr.bf16.mxu0 %v3633
    %5507 = vmatpush1.bf16.msra.mxu0 %v3632
    %5508 = vmatprep.subr.bf16.mxu0 %v3649
    %5509 = vmatpush1.bf16.msra.mxu0 %v3648
    %5510 = vmatprep.subr.bf16.mxu0 %v3665
    %5511 = vmatpush1.bf16.msra.mxu0 %v3664
    %5512 = vmatprep.subr.bf16.mxu0 %v3681
    %5513 = vmatpush1.bf16.msra.mxu0 %v3680
    %5514 = vmatprep.subr.bf16.mxu0 %v3697
    %5515 = vmatpush1.bf16.msra.mxu0 %v3696
    %5516 = vmatprep.subr.bf16.mxu0 %v3713
    %5517 = vmatpush1.bf16.msra.mxu0 %v3712
    %5518 = vmatprep.subr.bf16.mxu0 %v3729
    %5519 = vmatpush1.bf16.msra.mxu0 %v3728
    %5520 = vmatprep.subr.bf16.mxu0 %v3745
    %5521 = vmatpush1.bf16.msra.mxu0 %v3744
    %5522 = vmatprep.subr.bf16.mxu0 %v3761
    %5523 = vmatpush1.bf16.msra.mxu0 %v3760
    %5524 = vmatprep.subr.bf16.mxu0 %v3777
    %5525 = vmatpush1.bf16.msra.mxu0 %v3776
    %5526 = vmatprep.mubr.bf16.mxu0 %v957
    %5527 = vmatmul.mubr.bf16.gmra.mrb[0].mxu0 %v956
    %v5528 = vpop.f32.mrb[0].mxu0
    %v5529 = vadd.f32 %v5486, %v5528
    %v5530 = vpop.f32.mrb[0].mxu0
    %v5531 = vadd.f32 %v5488, %v5530
    %v5532 = vpop.f32.mrb[0].mxu0
    %v5533 = vadd.f32 %v5490, %v5532
    %v5534 = vpop.f32.mrb[0].mxu0
    %v5535 = vadd.f32 %v5492, %v5534
    %5536 = vdwg.mxu0
    %5537 = vmatprep.subr.bf16.mxu0 %v3793
    %5538 = vmatpush1.bf16.msra.mxu0 %v3792
    %5539 = vmatprep.subr.bf16.mxu0 %v3809
    %5540 = vmatpush1.bf16.msra.mxu0 %v3808
    %5541 = vmatprep.subr.bf16.mxu0 %v3825
    %5542 = vmatpush1.bf16.msra.mxu0 %v3824
    %5543 = vmatprep.subr.bf16.mxu0 %v3841
    %5544 = vmatpush1.bf16.msra.mxu0 %v3840
    %5545 = vmatprep.subr.bf16.mxu0 %v3857
    %5546 = vmatpush1.bf16.msra.mxu0 %v3856
    %5547 = vmatprep.subr.bf16.mxu0 %v3873
    %5548 = vmatpush1.bf16.msra.mxu0 %v3872
    %5549 = vmatprep.subr.bf16.mxu0 %v3889
    %5550 = vmatpush1.bf16.msra.mxu0 %v3888
    %5551 = vmatprep.subr.bf16.mxu0 %v3905
    %5552 = vmatpush1.bf16.msra.mxu0 %v3904
    %5553 = vmatprep.subr.bf16.mxu0 %v3921
    %5554 = vmatpush1.bf16.msra.mxu0 %v3920
    %5555 = vmatprep.subr.bf16.mxu0 %v3937
    %5556 = vmatpush1.bf16.msra.mxu0 %v3936
    %5557 = vmatprep.subr.bf16.mxu0 %v3953
    %5558 = vmatpush1.bf16.msra.mxu0 %v3952
    %5559 = vmatprep.subr.bf16.mxu0 %v3969
    %5560 = vmatpush1.bf16.msra.mxu0 %v3968
    %5561 = vmatprep.subr.bf16.mxu0 %v3985
    %5562 = vmatpush1.bf16.msra.mxu0 %v3984
    %5563 = vmatprep.subr.bf16.mxu0 %v4001
    %5564 = vmatpush1.bf16.msra.mxu0 %v4000
    %5565 = vmatprep.subr.bf16.mxu0 %v4017
    %5566 = vmatpush1.bf16.msra.mxu0 %v4016
    %5567 = vmatprep.subr.bf16.mxu0 %v4033
    %5568 = vmatpush1.bf16.msra.mxu0 %v4032
    %5569 = vmatprep.mubr.bf16.mxu0 %v959
    %5570 = vmatmul.mubr.bf16.gmra.mrb[0].mxu0 %v958
    %v5571 = vpop.f32.mrb[0].mxu0
    %v5572 = vadd.f32 %v5529, %v5571
    %v5573 = vpop.f32.mrb[0].mxu0
    %v5574 = vadd.f32 %v5531, %v5573
    %v5575 = vpop.f32.mrb[0].mxu0
    %v5576 = vadd.f32 %v5533, %v5575
    %v5577 = vpop.f32.mrb[0].mxu0
    %v5578 = vadd.f32 %v5535, %v5577
    %5579 = vdwg.mxu0
    %5580 = vmatprep.subr.bf16.mxu0 %v3283
    %5581 = vmatpush1.bf16.msra.mxu0 %v3282
    %5582 = vmatprep.subr.bf16.mxu0 %v3299
    %5583 = vmatpush1.bf16.msra.mxu0 %v3298
    %5584 = vmatprep.subr.bf16.mxu0 %v3315
    %5585 = vmatpush1.bf16.msra.mxu0 %v3314
    %5586 = vmatprep.subr.bf16.mxu0 %v3331
    %5587 = vmatpush1.bf16.msra.mxu0 %v3330
    %5588 = vmatprep.subr.bf16.mxu0 %v3347
    %5589 = vmatpush1.bf16.msra.mxu0 %v3346
    %5590 = vmatprep.subr.bf16.mxu0 %v3363
    %5591 = vmatpush1.bf16.msra.mxu0 %v3362
    %5592 = vmatprep.subr.bf16.mxu0 %v3379
    %5593 = vmatpush1.bf16.msra.mxu0 %v3378
    %5594 = vmatprep.subr.bf16.mxu0 %v3395
    %5595 = vmatpush1.bf16.msra.mxu0 %v3394
    %5596 = vmatprep.subr.bf16.mxu0 %v3411
    %5597 = vmatpush1.bf16.msra.mxu0 %v3410
    %5598 = vmatprep.subr.bf16.mxu0 %v3427
    %5599 = vmatpush1.bf16.msra.mxu0 %v3426
    %5600 = vmatprep.subr.bf16.mxu0 %v3443
    %5601 = vmatpush1.bf16.msra.mxu0 %v3442
    %5602 = vmatprep.subr.bf16.mxu0 %v3459
    %5603 = vmatpush1.bf16.msra.mxu0 %v3458
    %5604 = vmatprep.subr.bf16.mxu0 %v3475
    %5605 = vmatpush1.bf16.msra.mxu0 %v3474
    %5606 = vmatprep.subr.bf16.mxu0 %v3491
    %5607 = vmatpush1.bf16.msra.mxu0 %v3490
    %5608 = vmatprep.subr.bf16.mxu0 %v3507
    %5609 = vmatpush1.bf16.msra.mxu0 %v3506
    %5610 = vmatprep.subr.bf16.mxu0 %v3523
    %5611 = vmatpush1.bf16.msra.mxu0 %v3522
    %5612 = vmatprep.mubr.bf16.mxu0 %v955
    %5613 = vmatmul.mubr.bf16.gmra.mrb[0].mxu0 %v954
    %v5614 = vpop.f32.mrb[0].mxu0
    %v5615 = vadd.f32 %v925, %v5614
    %v5616 = vpop.f32.mrb[0].mxu0
    %v5617 = vadd.f32 %v929, %v5616
    %v5618 = vpop.f32.mrb[0].mxu0
    %v5619 = vadd.f32 %v925, %v5618
    %v5620 = vpop.f32.mrb[0].mxu0
    %v5621 = vadd.f32 %v929, %v5620
    %5622 = vdwg.mxu0
    %5623 = vmatprep.subr.bf16.mxu0 %v3539
    %5624 = vmatpush1.bf16.msra.mxu0 %v3538
    %5625 = vmatprep.subr.bf16.mxu0 %v3555
    %5626 = vmatpush1.bf16.msra.mxu0 %v3554
    %5627 = vmatprep.subr.bf16.mxu0 %v3571
    %5628 = vmatpush1.bf16.msra.mxu0 %v3570
    %5629 = vmatprep.subr.bf16.mxu0 %v3587
    %5630 = vmatpush1.bf16.msra.mxu0 %v3586
    %5631 = vmatprep.subr.bf16.mxu0 %v3603
    %5632 = vmatpush1.bf16.msra.mxu0 %v3602
    %5633 = vmatprep.subr.bf16.mxu0 %v3619
    %5634 = vmatpush1.bf16.msra.mxu0 %v3618
    %5635 = vmatprep.subr.bf16.mxu0 %v3635
    %5636 = vmatpush1.bf16.msra.mxu0 %v3634
    %5637 = vmatprep.subr.bf16.mxu0 %v3651
    %5638 = vmatpush1.bf16.msra.mxu0 %v3650
    %5639 = vmatprep.subr.bf16.mxu0 %v3667
    %5640 = vmatpush1.bf16.msra.mxu0 %v3666
    %5641 = vmatprep.subr.bf16.mxu0 %v3683
    %5642 = vmatpush1.bf16.msra.mxu0 %v3682
    %5643 = vmatprep.subr.bf16.mxu0 %v3699
    %5644 = vmatpush1.bf16.msra.mxu0 %v3698
    %5645 = vmatprep.subr.bf16.mxu0 %v3715
    %5646 = vmatpush1.bf16.msra.mxu0 %v3714
    %5647 = vmatprep.subr.bf16.mxu0 %v3731
    %5648 = vmatpush1.bf16.msra.mxu0 %v3730
    %5649 = vmatprep.subr.bf16.mxu0 %v3747
    %5650 = vmatpush1.bf16.msra.mxu0 %v3746
    %5651 = vmatprep.subr.bf16.mxu0 %v3763
    %5652 = vmatpush1.bf16.msra.mxu0 %v3762
    %5653 = vmatprep.subr.bf16.mxu0 %v3779
    %5654 = vmatpush1.bf16.msra.mxu0 %v3778
    %5655 = vmatprep.mubr.bf16.mxu0 %v957
    %5656 = vmatmul.mubr.bf16.gmra.mrb[0].mxu0 %v956
    %v5657 = vpop.f32.mrb[0].mxu0
    %v5658 = vadd.f32 %v5615, %v5657
    %v5659 = vpop.f32.mrb[0].mxu0
    %v5660 = vadd.f32 %v5617, %v5659
    %v5661 = vpop.f32.mrb[0].mxu0
    %v5662 = vadd.f32 %v5619, %v5661
    %v5663 = vpop.f32.mrb[0].mxu0
    %v5664 = vadd.f32 %v5621, %v5663
    %5665 = vdwg.mxu0
    %5666 = vmatprep.subr.bf16.mxu0 %v3795
    %5667 = vmatpush1.bf16.msra.mxu0 %v3794
    %5668 = vmatprep.subr.bf16.mxu0 %v3811
    %5669 = vmatpush1.bf16.msra.mxu0 %v3810
    %5670 = vmatprep.subr.bf16.mxu0 %v3827
    %5671 = vmatpush1.bf16.msra.mxu0 %v3826
    %5672 = vmatprep.subr.bf16.mxu0 %v3843
    %5673 = vmatpush1.bf16.msra.mxu0 %v3842
    %5674 = vmatprep.subr.bf16.mxu0 %v3859
    %5675 = vmatpush1.bf16.msra.mxu0 %v3858
    %5676 = vmatprep.subr.bf16.mxu0 %v3875
    %5677 = vmatpush1.bf16.msra.mxu0 %v3874
    %5678 = vmatprep.subr.bf16.mxu0 %v3891
    %5679 = vmatpush1.bf16.msra.mxu0 %v3890
    %5680 = vmatprep.subr.bf16.mxu0 %v3907
    %5681 = vmatpush1.bf16.msra.mxu0 %v3906
    %5682 = vmatprep.subr.bf16.mxu0 %v3923
    %5683 = vmatpush1.bf16.msra.mxu0 %v3922
    %5684 = vmatprep.subr.bf16.mxu0 %v3939
    %5685 = vmatpush1.bf16.msra.mxu0 %v3938
    %5686 = vmatprep.subr.bf16.mxu0 %v3955
    %5687 = vmatpush1.bf16.msra.mxu0 %v3954
    %5688 = vmatprep.subr.bf16.mxu0 %v3971
    %5689 = vmatpush1.bf16.msra.mxu0 %v3970
    %5690 = vmatprep.subr.bf16.mxu0 %v3987
    %5691 = vmatpush1.bf16.msra.mxu0 %v3986
    %5692 = vmatprep.subr.bf16.mxu0 %v4003
    %5693 = vmatpush1.bf16.msra.mxu0 %v4002
    %5694 = vmatprep.subr.bf16.mxu0 %v4019
    %5695 = vmatpush1.bf16.msra.mxu0 %v4018
    %5696 = vmatprep.subr.bf16.mxu0 %v4035
    %5697 = vmatpush1.bf16.msra.mxu0 %v4034
    %5698 = vmatprep.mubr.bf16.mxu0 %v959
    %5699 = vmatmul.mubr.bf16.gmra.mrb[0].mxu0 %v958
    %v5700 = vpop.f32.mrb[0].mxu0
    %v5701 = vadd.f32 %v5658, %v5700
    %v5702 = vpop.f32.mrb[0].mxu0
    %v5703 = vadd.f32 %v5660, %v5702
    %v5704 = vpop.f32.mrb[0].mxu0
    %v5705 = vadd.f32 %v5662, %v5704
    %v5706 = vpop.f32.mrb[0].mxu0
    %v5707 = vadd.f32 %v5664, %v5706
    %5708 = vdwg.mxu0
    %5709 = vmatprep.subr.bf16.mxu0 %v3285
    %5710 = vmatpush1.bf16.msra.mxu0 %v3284
    %5711 = vmatprep.subr.bf16.mxu0 %v3301
    %5712 = vmatpush1.bf16.msra.mxu0 %v3300
    %5713 = vmatprep.subr.bf16.mxu0 %v3317
    %5714 = vmatpush1.bf16.msra.mxu0 %v3316
    %5715 = vmatprep.subr.bf16.mxu0 %v3333
    %5716 = vmatpush1.bf16.msra.mxu0 %v3332
    %5717 = vmatprep.subr.bf16.mxu0 %v3349
    %5718 = vmatpush1.bf16.msra.mxu0 %v3348
    %5719 = vmatprep.subr.bf16.mxu0 %v3365
    %5720 = vmatpush1.bf16.msra.mxu0 %v3364
    %5721 = vmatprep.subr.bf16.mxu0 %v3381
    %5722 = vmatpush1.bf16.msra.mxu0 %v3380
    %5723 = vmatprep.subr.bf16.mxu0 %v3397
    %5724 = vmatpush1.bf16.msra.mxu0 %v3396
    %5725 = vmatprep.subr.bf16.mxu0 %v3413
    %5726 = vmatpush1.bf16.msra.mxu0 %v3412
    %5727 = vmatprep.subr.bf16.mxu0 %v3429
    %5728 = vmatpush1.bf16.msra.mxu0 %v3428
    %5729 = vmatprep.subr.bf16.mxu0 %v3445
    %5730 = vmatpush1.bf16.msra.mxu0 %v3444
    %5731 = vmatprep.subr.bf16.mxu0 %v3461
    %5732 = vmatpush1.bf16.msra.mxu0 %v3460
    %5733 = vmatprep.subr.bf16.mxu0 %v3477
    %5734 = vmatpush1.bf16.msra.mxu0 %v3476
    %5735 = vmatprep.subr.bf16.mxu0 %v3493
    %5736 = vmatpush1.bf16.msra.mxu0 %v3492
    %5737 = vmatprep.subr.bf16.mxu0 %v3509
    %5738 = vmatpush1.bf16.msra.mxu0 %v3508
    %5739 = vmatprep.subr.bf16.mxu0 %v3525
    %5740 = vmatpush1.bf16.msra.mxu0 %v3524
    %5741 = vmatprep.mubr.bf16.mxu0 %v955
    %5742 = vmatmul.mubr.bf16.gmra.mrb[0].mxu0 %v954
    %v5743 = vpop.f32.mrb[0].mxu0
    %v5744 = vadd.f32 %v933, %v5743
    %v5745 = vpop.f32.mrb[0].mxu0
    %v5746 = vadd.f32 %v937, %v5745
    %v5747 = vpop.f32.mrb[0].mxu0
    %v5748 = vadd.f32 %v933, %v5747
    %v5749 = vpop.f32.mrb[0].mxu0
    %v5750 = vadd.f32 %v937, %v5749
    %5751 = vdwg.mxu0
    %5752 = vmatprep.subr.bf16.mxu0 %v3541
    %5753 = vmatpush1.bf16.msra.mxu0 %v3540
    %5754 = vmatprep.subr.bf16.mxu0 %v3557
    %5755 = vmatpush1.bf16.msra.mxu0 %v3556
    %5756 = vmatprep.subr.bf16.mxu0 %v3573
    %5757 = vmatpush1.bf16.msra.mxu0 %v3572
    %5758 = vmatprep.subr.bf16.mxu0 %v3589
    %5759 = vmatpush1.bf16.msra.mxu0 %v3588
    %5760 = vmatprep.subr.bf16.mxu0 %v3605
    %5761 = vmatpush1.bf16.msra.mxu0 %v3604
    %5762 = vmatprep.subr.bf16.mxu0 %v3621
    %5763 = vmatpush1.bf16.msra.mxu0 %v3620
    %5764 = vmatprep.subr.bf16.mxu0 %v3637
    %5765 = vmatpush1.bf16.msra.mxu0 %v3636
    %5766 = vmatprep.subr.bf16.mxu0 %v3653
    %5767 = vmatpush1.bf16.msra.mxu0 %v3652
    %5768 = vmatprep.subr.bf16.mxu0 %v3669
    %5769 = vmatpush1.bf16.msra.mxu0 %v3668
    %5770 = vmatprep.subr.bf16.mxu0 %v3685
    %5771 = vmatpush1.bf16.msra.mxu0 %v3684
    %5772 = vmatprep.subr.bf16.mxu0 %v3701
    %5773 = vmatpush1.bf16.msra.mxu0 %v3700
    %5774 = vmatprep.subr.bf16.mxu0 %v3717
    %5775 = vmatpush1.bf16.msra.mxu0 %v3716
    %5776 = vmatprep.subr.bf16.mxu0 %v3733
    %5777 = vmatpush1.bf16.msra.mxu0 %v3732
    %5778 = vmatprep.subr.bf16.mxu0 %v3749
    %5779 = vmatpush1.bf16.msra.mxu0 %v3748
    %5780 = vmatprep.subr.bf16.mxu0 %v3765
    %5781 = vmatpush1.bf16.msra.mxu0 %v3764
    %5782 = vmatprep.subr.bf16.mxu0 %v3781
    %5783 = vmatpush1.bf16.msra.mxu0 %v3780
    %5784 = vmatprep.mubr.bf16.mxu0 %v957
    %5785 = vmatmul.mubr.bf16.gmra.mrb[0].mxu0 %v956
    %v5786 = vpop.f32.mrb[0].mxu0
    %v5787 = vadd.f32 %v5744, %v5786
    %v5788 = vpop.f32.mrb[0].mxu0
    %v5789 = vadd.f32 %v5746, %v5788
    %v5790 = vpop.f32.mrb[0].mxu0
    %v5791 = vadd.f32 %v5748, %v5790
    %v5792 = vpop.f32.mrb[0].mxu0
    %v5793 = vadd.f32 %v5750, %v5792
    %5794 = vdwg.mxu0
    %5795 = vmatprep.subr.bf16.mxu0 %v3797
    %5796 = vmatpush1.bf16.msra.mxu0 %v3796
    %5797 = vmatprep.subr.bf16.mxu0 %v3813
    %5798 = vmatpush1.bf16.msra.mxu0 %v3812
    %5799 = vmatprep.subr.bf16.mxu0 %v3829
    %5800 = vmatpush1.bf16.msra.mxu0 %v3828
    %5801 = vmatprep.subr.bf16.mxu0 %v3845
    %5802 = vmatpush1.bf16.msra.mxu0 %v3844
    %5803 = vmatprep.subr.bf16.mxu0 %v3861
    %5804 = vmatpush1.bf16.msra.mxu0 %v3860
    %5805 = vmatprep.subr.bf16.mxu0 %v3877
    %5806 = vmatpush1.bf16.msra.mxu0 %v3876
    %5807 = vmatprep.subr.bf16.mxu0 %v3893
    %5808 = vmatpush1.bf16.msra.mxu0 %v3892
    %5809 = vmatprep.subr.bf16.mxu0 %v3909
    %5810 = vmatpush1.bf16.msra.mxu0 %v3908
    %5811 = vmatprep.subr.bf16.mxu0 %v3925
    %5812 = vmatpush1.bf16.msra.mxu0 %v3924
    %5813 = vmatprep.subr.bf16.mxu0 %v3941
    %5814 = vmatpush1.bf16.msra.mxu0 %v3940
    %5815 = vmatprep.subr.bf16.mxu0 %v3957
    %5816 = vmatpush1.bf16.msra.mxu0 %v3956
    %5817 = vmatprep.subr.bf16.mxu0 %v3973
    %5818 = vmatpush1.bf16.msra.mxu0 %v3972
    %5819 = vmatprep.subr.bf16.mxu0 %v3989
    %5820 = vmatpush1.bf16.msra.mxu0 %v3988
    %5821 = vmatprep.subr.bf16.mxu0 %v4005
    %5822 = vmatpush1.bf16.msra.mxu0 %v4004
    %5823 = vmatprep.subr.bf16.mxu0 %v4021
    %5824 = vmatpush1.bf16.msra.mxu0 %v4020
    %5825 = vmatprep.subr.bf16.mxu0 %v4037
    %5826 = vmatpush1.bf16.msra.mxu0 %v4036
    %5827 = vmatprep.mubr.bf16.mxu0 %v959
    %5828 = vmatmul.mubr.bf16.gmra.mrb[0].mxu0 %v958
    %v5829 = vpop.f32.mrb[0].mxu0
    %v5830 = vadd.f32 %v5787, %v5829
    %v5831 = vpop.f32.mrb[0].mxu0
    %v5832 = vadd.f32 %v5789, %v5831
    %v5833 = vpop.f32.mrb[0].mxu0
    %v5834 = vadd.f32 %v5791, %v5833
    %v5835 = vpop.f32.mrb[0].mxu0
    %v5836 = vadd.f32 %v5793, %v5835
    %5837 = vdwg.mxu0
    %5838 = vst [vmem:[#allocation8] sm:$0xff] %v4927
    %5839 = vst [vmem:[#allocation8 + $0x8] sm:$0xff] %v4929
    %5840 = vst [vmem:[#allocation8 + $0x10] sm:$0xff] %v5056
    %5841 = vst [vmem:[#allocation8 + $0x18] sm:$0xff] %v5058
    %5842 = vst [vmem:[#allocation8 + $0x20] sm:$0xff] %v5185
    %5843 = vst [vmem:[#allocation8 + $0x28] sm:$0xff] %v5187
    %5844 = vst [vmem:[#allocation8 + $0x30] sm:$0xff] %v5314
    %5845 = vst [vmem:[#allocation8 + $0x38] sm:$0xff] %v5316
    %5846 = vst [vmem:[#allocation8 + $0x40] sm:$0xff] %v5443
    %5847 = vst [vmem:[#allocation8 + $0x48] sm:$0xff] %v5445
    %5848 = vst [vmem:[#allocation8 + $0x50] sm:$0xff] %v5572
    %5849 = vst [vmem:[#allocation8 + $0x58] sm:$0xff] %v5574
    %5850 = vst [vmem:[#allocation8 + $0x60] sm:$0xff] %v5701
    %5851 = vst [vmem:[#allocation8 + $0x68] sm:$0xff] %v5703
    %5852 = vst [vmem:[#allocation8 + $0x70] sm:$0xff] %v5830
    %5853 = vst [vmem:[#allocation8 + $0x78] sm:$0xff] %v5832
    %5854 = vst [vmem:[#allocation8 + $0x80] sm:$0xff] %v4931
    %5855 = vst [vmem:[#allocation8 + $0x88] sm:$0xff] %v4933
    %5856 = vst [vmem:[#allocation8 + $0x90] sm:$0xff] %v5060
    %5857 = vst [vmem:[#allocation8 + $0x98] sm:$0xff] %v5062
    %5858 = vst [vmem:[#allocation8 + $0xa0] sm:$0xff] %v5189
    %5859 = vst [vmem:[#allocation8 + $0xa8] sm:$0xff] %v5191
    %5860 = vst [vmem:[#allocation8 + $0xb0] sm:$0xff] %v5318
    %5861 = vst [vmem:[#allocation8 + $0xb8] sm:$0xff] %v5320
    %5862 = vst [vmem:[#allocation8 + $0xc0] sm:$0xff] %v5447
    %5863 = vst [vmem:[#allocation8 + $0xc8] sm:$0xff] %v5449
    %5864 = vst [vmem:[#allocation8 + $0xd0] sm:$0xff] %v5576
    %5865 = vst [vmem:[#allocation8 + $0xd8] sm:$0xff] %v5578
    %5866 = vst [vmem:[#allocation8 + $0xe0] sm:$0xff] %v5705
    %5867 = vst [vmem:[#allocation8 + $0xe8] sm:$0xff] %v5707
    %5868 = vst [vmem:[#allocation8 + $0xf0] sm:$0xff] %v5834
    %5869 = vst [vmem:[#allocation8 + $0xf8] sm:$0xff] %v5836
    // Predicated region
    $region26: #{tpu_custom_call.1} parent=1 // pred_check
      _
    $region27: #{tpu_custom_call.1} parent=1 // pred_check_branch
      %5871 = sbr.rel (0) target = $region29
    $region28: #{tpu_custom_call.1} parent=1 // pred_region
      %s5873 = ssub.s32 4096, 4096
      %5874 = vsyncadd [#allocation4], %s5873
      %s5875 = sshll.u32 [#allocation8], 4
      %s5876 = int_to_ptr.vmem [resolvable:$true] %s5875
      %5881 = dma.vmem_to_hbm [thread:$0]  %s5876, 4096, %s3, [#allocation4], 2048, 2048, 128
    $region29: #{tpu_custom_call.1} parent=1 // pred_fallthru
      _
    // Predicated region
    $region30: #{tpu_custom_call.1} parent=1 // pred_check
      _
    $region31: #{tpu_custom_call.1} parent=1 // pred_check_branch
      %5883 = sbr.rel (0) target = $region33
    $region32: #{tpu_custom_call.1} parent=1 // pred_region
      %5884 = dma.done [#allocation4], 4096
    $region33: #{tpu_custom_call.1} parent=1 // pred_fallthru
      _
    %5885 = vsyncpa [#allocation3], 1
    %5886 = vsyncpa [#allocation6], 1
    %5887 = vsyncpa [#allocation4], 1

</llo_original>
